<compile_context>
chip_gen: v5e
topology: v5e:2x2
jax: 0.10.0
libtpu: 0.0.40
codegen_flags: <defaults>
</compile_context>

<pallas_src>
import functools
import math

import jax
import jax.numpy as jnp
from jax.experimental import pallas as pl
from jax.experimental.pallas import tpu as pltpu


_PARAM_ORDER = ("wq_t", "bq", "wk_t", "bk", "wv_t", "bv", "wo_t", "bo",
                "n2_w", "n2_b", "w1_t", "b1", "w2_t", "b2", "n3_w", "n3_b")


# --------------------------- layout helpers (in-kernel) -----------------------

def _head_major(x):
    """(L, H, D) -> (H, L, D); lane (last) dim untouched."""
    if hasattr(pltpu, "einshape"):
        return pltpu.einshape("lhd->hld", x)
    return jnp.swapaxes(x, 0, 1)


def _head_minor(x):
    """(H, L, D) -> (L, H, D)."""
    if hasattr(pltpu, "einshape"):
        return pltpu.einshape("hld->lhd", x)
    return jnp.swapaxes(x, 0, 1)


# ------------------------------- Pallas kernel --------------------------------

def decoder_fusion_kernel(tgt_ref, qpos_ref, mem_ref, pos_ref, smem_ref,
                          wq_ref, bq_ref, wk_ref, bk_ref, wv_ref, bv_ref,
                          wo_ref, bo_ref, n2w_ref, n2b_ref,
                          w1_ref, b1_ref, w2_ref, b2_ref,
                          n3w_ref, n3b_ref,
                          o_ref, *, n_head: int):
    """One TransformerDecoderFusionLayer (forward_post) for Bt batch rows."""
    f32, bf16 = jnp.float32, jnp.bfloat16
    bt, lq, c = tgt_ref.shape
    lk = mem_ref.shape[1]
    dh = c // n_head

    # activations, collapsed to (Bt*L, C) so every projection is one big matmul
    tgt = tgt_ref[...].astype(f32).reshape(bt * lq, c)
    qpos = qpos_ref[...].astype(f32).reshape(bt * lq, c)
    mem = mem_ref[...].astype(f32).reshape(bt * lk, c)
    pos = pos_ref[...].astype(f32).reshape(bt * lk, c)
    smem = smem_ref[...].astype(f32).reshape(bt * lk, c)

    def mm(x, w_ref, b_ref):
        # bf16 x bf16 on the MXU, fp32 accumulation, fp32 bias.
        return jnp.dot(x.astype(bf16), w_ref[...],
                       preferred_element_type=f32) + b_ref[...]

    def layer_norm(x, w_ref, b_ref):
        mu = jnp.mean(x, axis=-1, keepdims=True)
        var = jnp.mean((x - mu) ** 2, axis=-1, keepdims=True)
        return (x - mu) * jax.lax.rsqrt(var + 1e-5) * w_ref[...] + b_ref[...]

    # ---- shared multihead_attn projections (1/sqrt(dh) pre-folded into Wq/bq) ----
    q = mm(tgt + qpos, wq_ref, bq_ref)            # (bt*lq, c)
    k1 = mm(mem + pos, wk_ref, bk_ref)            # (bt*lk, c)
    v1 = mm(mem, wv_ref, bv_ref)
    k2 = mm(smem + pos, wk_ref, bk_ref)
    v2 = mm(smem, wv_ref, bv_ref)

    def attend(kf, vf):
        """Head-batched attention; per-batch-row, all heads in one rank-3 dot."""
        rows = []
        for b in range(bt):                        # static, small Bt
            qb = q[b * lq:(b + 1) * lq].reshape(lq, n_head, dh)
            kb = kf[b * lk:(b + 1) * lk].reshape(lk, n_head, dh)
            vb = vf[b * lk:(b + 1) * lk].reshape(lk, n_head, dh)
            qh = _head_major(qb).astype(bf16)      # (H, lq, dh)
            kh = _head_major(kb).astype(bf16)      # (H, lk, dh)
            vh = _head_major(vb).astype(bf16)
            s = jnp.einsum("hqd,hkd->hqk", qh, kh,
                           preferred_element_type=f32)          # (H, lq, lk) fp32
            s = s - jnp.max(s, axis=-1, keepdims=True)
            p = jnp.exp(s)
            p = p * pl.reciprocal(jnp.sum(p, axis=-1, keepdims=True), approx=True)
            o = jnp.einsum("hqk,hkd->hqd", p.astype(bf16), vh,
                           preferred_element_type=f32)          # (H, lq, dh)
            rows.append(_head_minor(o).reshape(lq, c))
        return rows[0] if bt == 1 else jnp.concatenate(rows, axis=0)  # (bt*lq, c)

    # both cross-attentions share the same out_proj (same nn.MultiheadAttention)
    a1 = mm(attend(k1, v1), wo_ref, bo_ref)
    a2 = mm(attend(k2, v2), wo_ref, bo_ref)

    # TODO(synk): dropout / dropout2 / dropout3 are identity (eval mode).
    tgt2 = layer_norm(tgt + a1, n2w_ref, n2b_ref)
    tgt3 = layer_norm(tgt + a2, n2w_ref, n2b_ref)
    t = tgt2 + tgt3

    h = jnp.maximum(mm(t, w1_ref, b1_ref), 0.0)   # relu (module default activation)
    f = mm(h, w2_ref, b2_ref)
    out = layer_norm(t + f, n3w_ref, n3b_ref)

    o_ref[...] = out.reshape(bt, lq, c).astype(o_ref.dtype)


# ------------------------------ parameter prep --------------------------------

def init_layer_params(key, c, f):
    """fp32 'torch-like' parameters, stored pre-transposed as (in, out)."""
    ks = jax.random.split(key, 18)
    s = 0.05

    def rnd(k, shape, scl=s):
        return (jax.random.normal(k, shape) * scl).astype(jnp.float32)

    return {
        "wq_t": rnd(ks[0], (c, c)), "bq": rnd(ks[1], (1, c)),
        "wk_t": rnd(ks[2], (c, c)), "bk": rnd(ks[3], (1, c)),
        "wv_t": rnd(ks[4], (c, c)), "bv": rnd(ks[5], (1, c)),
        "wo_t": rnd(ks[6], (c, c)), "bo": rnd(ks[7], (1, c)),
        "n2_w": 1.0 + rnd(ks[8], (1, c), 0.1), "n2_b": rnd(ks[9], (1, c), 0.1),
        "w1_t": rnd(ks[10], (c, f)), "b1": rnd(ks[11], (1, f)),
        "w2_t": rnd(ks[12], (f, c)), "b2": rnd(ks[13], (1, c)),
        "n3_w": 1.0 + rnd(ks[14], (1, c), 0.1), "n3_b": rnd(ks[15], (1, c), 0.1),
    }


def prep_kernel_params(p, n_head):
    """Fold 1/sqrt(dh) into the Q projection; cast matmul weights to bf16."""
    c = p["wq_t"].shape[0]
    scale = 1.0 / math.sqrt(c // n_head)
    kp = dict(p)
    kp["wq_t"] = p["wq_t"] * scale
    kp["bq"] = p["bq"] * scale
    for name in ("wq_t", "wk_t", "wv_t", "wo_t", "w1_t", "w2_t"):
        kp[name] = kp[name].astype(jnp.bfloat16)
    return kp


# --------------------------------- wrapper -------------------------------------

def _const_spec(shape):
    rank = len(shape)
    return pl.BlockSpec(tuple(shape), lambda i: (0,) * rank)


def decoder_fusion_forward(tgt, memory, sup_memory, params, n_head,
                           pos=None, query_pos=None, block_b=None):
    """Equivalent of TransformerDecoderFusionLayer.forward (forward_post).

    tgt: (Lq, B, C); memory / sup_memory / pos: (Lk, B, C); query_pos: (Lq, B, C).
    Returns (Lq, B, C) float32.
    """
    lq, b, c = tgt.shape
    lk = memory.shape[0]
    assert c % n_head == 0
    assert sup_memory.shape == memory.shape
    if pos is None:
        pos = jnp.zeros_like(memory)
    if query_pos is None:
        query_pos = jnp.zeros_like(tgt)

    kp = prep_kernel_params(params, n_head)
    weight_args = [kp[name] for name in _PARAM_ORDER]
    weight_specs = [_const_spec(w.shape) for w in weight_args]

    to_blc = lambda a: jnp.transpose(a, (1, 0, 2))          # (L,B,C) -> (B,L,C)
    t_blc, qp_blc = to_blc(tgt), to_blc(query_pos)
    m_blc, p_blc, sm_blc = to_blc(memory), to_blc(pos), to_blc(sup_memory)

    # pack all batch rows into one grid step by default (Bt*L rows per matmul);
    # for large B pick block_b so that block_b*Lq >= 256.
    bt = b if block_b is None else block_b
    assert b % bt == 0
    nb = b // bt

    def act_spec(l):
        return pl.BlockSpec((bt, l, c), lambda i: (i, 0, 0))

    kern = functools.partial(decoder_fusion_kernel, n_head=n_head)

    out = pl.pallas_call(
        kern,
        out_shape=jax.ShapeDtypeStruct((b, lq, c), jnp.float32),
        grid=(nb,),
        in_specs=[act_spec(lq), act_spec(lq),
                  act_spec(lk), act_spec(lk), act_spec(lk)] + weight_specs,
        out_specs=act_spec(lq),
        compiler_params=pltpu.CompilerParams(
            dimension_semantics=("parallel",),
            vmem_limit_bytes=48 * 1024 * 1024),
    )(t_blc, qp_blc, m_blc, p_blc, sm_blc, *weight_args)

    return jnp.transpose(out, (1, 0, 2))                     # back to (Lq, B, C)


# ----------------------------- pure-JAX reference -------------------------------

def _ref_forward_blc(tgt, memory, sup_memory, pos, query_pos, p, n_head):
    c = tgt.shape[-1]
    dh = c // n_head

    def mha(q_in, k_in, v_in):
        bsz, lq, _ = q_in.shape
        lk = k_in.shape[1]
        q = (q_in @ p["wq_t"] + p["bq"][0]) * (1.0 / math.sqrt(dh))
        k = k_in @ p["wk_t"] + p["bk"][0]
        v = v_in @ p["wv_t"] + p["bv"][0]
        q = q.reshape(bsz, lq, n_head, dh)
        k = k.reshape(bsz, lk, n_head, dh)
        v = v.reshape(bsz, lk, n_head, dh)
        s = jnp.einsum("bqhd,bkhd->bhqk", q, k)
        a = jax.nn.softmax(s, axis=-1)
        o = jnp.einsum("bhqk,bkhd->bqhd", a, v).reshape(bsz, lq, c)
        return o @ p["wo_t"] + p["bo"][0]

    def ln(x, w, b):
        mu = x.mean(-1, keepdims=True)
        var = ((x - mu) ** 2).mean(-1, keepdims=True)
        return (x - mu) / jnp.sqrt(var + 1e-5) * w[0] + b[0]

    q_in = tgt + query_pos
    a1 = mha(q_in, memory + pos, memory)
    a2 = mha(q_in, sup_memory + pos, sup_memory)
    tgt2 = ln(tgt + a1, p["n2_w"], p["n2_b"])
    tgt3 = ln(tgt + a2, p["n2_w"], p["n2_b"])
    t = tgt2 + tgt3
    h = jnp.maximum(t @ p["w1_t"] + p["b1"][0], 0.0)
    f = h @ p["w2_t"] + p["b2"][0]
    return ln(t + f, p["n3_w"], p["n3_b"])


def ref_forward(tgt, memory, sup_memory, params, n_head, pos=None, query_pos=None):
    if pos is None:
        pos = jnp.zeros_like(memory)
    if query_pos is None:
        query_pos = jnp.zeros_like(tgt)
    to_blc = lambda a: jnp.transpose(a, (1, 0, 2))
    out = _ref_forward_blc(to_blc(tgt), to_blc(memory), to_blc(sup_memory),
                           to_blc(pos), to_blc(query_pos), params, n_head)
    return jnp.transpose(out, (1, 0, 2))


# ----------------------------------- main ---------------------------------------

if __name__ == "__main__":
    # Small shapes: d_model=32, nhead=4, dim_feedforward=64, Lq=8, Lk=16, B=2.
    Lq, Lk, B, C, F, n_head = 8, 16, 2, 32, 64, 4

    root = jax.random.PRNGKey(0)
    k_t, k_m, k_s, k_p, k_q, k_w = jax.random.split(root, 6)
    tgt = jax.random.normal(k_t, (Lq, B, C), dtype=jnp.float32)
    memory = jax.random.normal(k_m, (Lk, B, C), dtype=jnp.float32)
    sup_memory = jax.random.normal(k_s, (Lk, B, C), dtype=jnp.float32)
    pos = jax.random.normal(k_p, (Lk, B, C), dtype=jnp.float32) * 0.5
    query_pos = jax.random.normal(k_q, (Lq, B, C), dtype=jnp.float32) * 0.5

    params = init_layer_params(k_w, C, F)

    out = decoder_fusion_forward(tgt, memory, sup_memory, params, n_head,
                                 pos=pos, query_pos=query_pos)
    out = jax.block_until_ready(out)

    ref = jax.block_until_ready(
        ref_forward(tgt, memory, sup_memory, params, n_head, pos, query_pos))

    max_err = float(jnp.max(jnp.abs(out - ref)))
    finite = bool(jnp.isfinite(out).all())
    if out.shape != (Lq, B, C) or not finite or not (max_err < 2e-2):
        raise RuntimeError(f"mismatch: shape={out.shape}, finite={finite}, "
                           f"max_err={max_err}")

    print("KERNEL_OK")
</pallas_src>

<mosaic_0001>
module attributes {stable_mosaic.version = 11 : i64} {
  func.func @decoder_fusion_kernel(%arg0: i32, %arg1: memref<2x8x32xf32, #tpu.memory_space<vmem>>, %arg2: memref<2x8x32xf32, #tpu.memory_space<vmem>>, %arg3: memref<2x16x32xf32, #tpu.memory_space<vmem>>, %arg4: memref<2x16x32xf32, #tpu.memory_space<vmem>>, %arg5: memref<2x16x32xf32, #tpu.memory_space<vmem>>, %arg6: memref<32x32xbf16, #tpu.memory_space<vmem>>, %arg7: memref<1x32xf32, #tpu.memory_space<vmem>>, %arg8: memref<32x32xbf16, #tpu.memory_space<vmem>>, %arg9: memref<1x32xf32, #tpu.memory_space<vmem>>, %arg10: memref<32x32xbf16, #tpu.memory_space<vmem>>, %arg11: memref<1x32xf32, #tpu.memory_space<vmem>>, %arg12: memref<32x32xbf16, #tpu.memory_space<vmem>>, %arg13: memref<1x32xf32, #tpu.memory_space<vmem>>, %arg14: memref<1x32xf32, #tpu.memory_space<vmem>>, %arg15: memref<1x32xf32, #tpu.memory_space<vmem>>, %arg16: memref<32x64xbf16, #tpu.memory_space<vmem>>, %arg17: memref<1x64xf32, #tpu.memory_space<vmem>>, %arg18: memref<64x32xbf16, #tpu.memory_space<vmem>>, %arg19: memref<1x32xf32, #tpu.memory_space<vmem>>, %arg20: memref<1x32xf32, #tpu.memory_space<vmem>>, %arg21: memref<1x32xf32, #tpu.memory_space<vmem>>, %arg22: memref<2x8x32xf32, #tpu.memory_space<vmem>>) attributes {dimension_semantics = [#tpu.dimension_semantics<parallel>], iteration_bounds = array<i64: 1>, scalar_prefetch = 0 : i64, scratch_operands = 0 : i64, tpu.core_type = #tpu.core_type<tc>, window_params = [{transform_indices = @transform_0, window_bounds = array<i64: 2, 8, 32>}, {transform_indices = @transform_1, window_bounds = array<i64: 2, 8, 32>}, {transform_indices = @transform_2, window_bounds = array<i64: 2, 16, 32>}, {transform_indices = @transform_3, window_bounds = array<i64: 2, 16, 32>}, {transform_indices = @transform_4, window_bounds = array<i64: 2, 16, 32>}, {pipeline_mode = #tpu.pipeline_mode<synchronous>, transform_indices = @transform_5, window_bounds = array<i64: 32, 32>}, {pipeline_mode = #tpu.pipeline_mode<synchronous>, transform_indices = @transform_6, window_bounds = array<i64: 1, 32>}, {pipeline_mode = #tpu.pipeline_mode<synchronous>, transform_indices = @transform_7, window_bounds = array<i64: 32, 32>}, {pipeline_mode = #tpu.pipeline_mode<synchronous>, transform_indices = @transform_8, window_bounds = array<i64: 1, 32>}, {pipeline_mode = #tpu.pipeline_mode<synchronous>, transform_indices = @transform_9, window_bounds = array<i64: 32, 32>}, {pipeline_mode = #tpu.pipeline_mode<synchronous>, transform_indices = @transform_10, window_bounds = array<i64: 1, 32>}, {pipeline_mode = #tpu.pipeline_mode<synchronous>, transform_indices = @transform_11, window_bounds = array<i64: 32, 32>}, {pipeline_mode = #tpu.pipeline_mode<synchronous>, transform_indices = @transform_12, window_bounds = array<i64: 1, 32>}, {pipeline_mode = #tpu.pipeline_mode<synchronous>, transform_indices = @transform_13, window_bounds = array<i64: 1, 32>}, {pipeline_mode = #tpu.pipeline_mode<synchronous>, transform_indices = @transform_14, window_bounds = array<i64: 1, 32>}, {pipeline_mode = #tpu.pipeline_mode<synchronous>, transform_indices = @transform_15, window_bounds = array<i64: 32, 64>}, {pipeline_mode = #tpu.pipeline_mode<synchronous>, transform_indices = @transform_16, window_bounds = array<i64: 1, 64>}, {pipeline_mode = #tpu.pipeline_mode<synchronous>, transform_indices = @transform_17, window_bounds = array<i64: 64, 32>}, {pipeline_mode = #tpu.pipeline_mode<synchronous>, transform_indices = @transform_18, window_bounds = array<i64: 1, 32>}, {pipeline_mode = #tpu.pipeline_mode<synchronous>, transform_indices = @transform_19, window_bounds = array<i64: 1, 32>}, {pipeline_mode = #tpu.pipeline_mode<synchronous>, transform_indices = @transform_20, window_bounds = array<i64: 1, 32>}, {transform_indices = @transform_21, window_bounds = array<i64: 2, 8, 32>}]} {
    %c0 = arith.constant 0 : index
    %c0_0 = arith.constant 0 : index
    %c0_1 = arith.constant 0 : index
    %0 = vector.load %arg1[%c0, %c0_0, %c0_1] : memref<2x8x32xf32, #tpu.memory_space<vmem>>, vector<2x8x32xf32>
    %1 = vector.shape_cast %0 : vector<2x8x32xf32> to vector<16x32xf32>
    %c0_2 = arith.constant 0 : index
    %c0_3 = arith.constant 0 : index
    %c0_4 = arith.constant 0 : index
    %2 = vector.load %arg2[%c0_2, %c0_3, %c0_4] : memref<2x8x32xf32, #tpu.memory_space<vmem>>, vector<2x8x32xf32>
    %3 = vector.shape_cast %2 : vector<2x8x32xf32> to vector<16x32xf32>
    %c0_5 = arith.constant 0 : index
    %c0_6 = arith.constant 0 : index
    %c0_7 = arith.constant 0 : index
    %4 = vector.load %arg3[%c0_5, %c0_6, %c0_7] : memref<2x16x32xf32, #tpu.memory_space<vmem>>, vector<2x16x32xf32>
    %5 = vector.shape_cast %4 : vector<2x16x32xf32> to vector<32x32xf32>
    %c0_8 = arith.constant 0 : index
    %c0_9 = arith.constant 0 : index
    %c0_10 = arith.constant 0 : index
    %6 = vector.load %arg4[%c0_8, %c0_9, %c0_10] : memref<2x16x32xf32, #tpu.memory_space<vmem>>, vector<2x16x32xf32>
    %7 = vector.shape_cast %6 : vector<2x16x32xf32> to vector<32x32xf32>
    %c0_11 = arith.constant 0 : index
    %c0_12 = arith.constant 0 : index
    %c0_13 = arith.constant 0 : index
    %8 = vector.load %arg5[%c0_11, %c0_12, %c0_13] : memref<2x16x32xf32, #tpu.memory_space<vmem>>, vector<2x16x32xf32>
    %9 = vector.shape_cast %8 : vector<2x16x32xf32> to vector<32x32xf32>
    %10 = arith.addf %1, %3 : vector<16x32xf32>
    %11 = arith.truncf %10 : vector<16x32xf32> to vector<16x32xbf16>
    %c0_14 = arith.constant 0 : index
    %c0_15 = arith.constant 0 : index
    %12 = vector.load %arg6[%c0_14, %c0_15] : memref<32x32xbf16, #tpu.memory_space<vmem>>, vector<32x32xbf16>
    %cst = arith.constant dense<0.000000e+00> : vector<16x32xf32>
    %13 = tpu.matmul %11, %12, %cst {dimension_numbers = #tpu.dot_dimension_numbers<[1], [0], [0], [1], [0, 0, 1, 1], [], []>} : vector<16x32xbf16>, vector<32x32xbf16>, vector<16x32xf32> -> vector<16x32xf32>
    %c0_16 = arith.constant 0 : index
    %c0_17 = arith.constant 0 : index
    %14 = vector.load %arg7[%c0_16, %c0_17] : memref<1x32xf32, #tpu.memory_space<vmem>>, vector<1x32xf32>
    %15 = vector.broadcast %14 : vector<1x32xf32> to vector<16x32xf32>
    %16 = arith.addf %13, %15 : vector<16x32xf32>
    %17 = arith.addf %5, %7 : vector<32x32xf32>
    %18 = arith.truncf %17 : vector<32x32xf32> to vector<32x32xbf16>
    %c0_18 = arith.constant 0 : index
    %c0_19 = arith.constant 0 : index
    %19 = vector.load %arg8[%c0_18, %c0_19] : memref<32x32xbf16, #tpu.memory_space<vmem>>, vector<32x32xbf16>
    %cst_20 = arith.constant dense<0.000000e+00> : vector<32x32xf32>
    %20 = tpu.matmul %18, %19, %cst_20 {dimension_numbers = #tpu.dot_dimension_numbers<[1], [0], [0], [1], [0, 0, 1, 1], [], []>} : vector<32x32xbf16>, vector<32x32xbf16>, vector<32x32xf32> -> vector<32x32xf32>
    %c0_21 = arith.constant 0 : index
    %c0_22 = arith.constant 0 : index
    %21 = vector.load %arg9[%c0_21, %c0_22] : memref<1x32xf32, #tpu.memory_space<vmem>>, vector<1x32xf32>
    %22 = vector.broadcast %21 : vector<1x32xf32> to vector<32x32xf32>
    %23 = arith.addf %20, %22 : vector<32x32xf32>
    %24 = arith.truncf %5 : vector<32x32xf32> to vector<32x32xbf16>
    %c0_23 = arith.constant 0 : index
    %c0_24 = arith.constant 0 : index
    %25 = vector.load %arg10[%c0_23, %c0_24] : memref<32x32xbf16, #tpu.memory_space<vmem>>, vector<32x32xbf16>
    %cst_25 = arith.constant dense<0.000000e+00> : vector<32x32xf32>
    %26 = tpu.matmul %24, %25, %cst_25 {dimension_numbers = #tpu.dot_dimension_numbers<[1], [0], [0], [1], [0, 0, 1, 1], [], []>} : vector<32x32xbf16>, vector<32x32xbf16>, vector<32x32xf32> -> vector<32x32xf32>
    %c0_26 = arith.constant 0 : index
    %c0_27 = arith.constant 0 : index
    %27 = vector.load %arg11[%c0_26, %c0_27] : memref<1x32xf32, #tpu.memory_space<vmem>>, vector<1x32xf32>
    %28 = vector.broadcast %27 : vector<1x32xf32> to vector<32x32xf32>
    %29 = arith.addf %26, %28 : vector<32x32xf32>
    %30 = arith.addf %9, %7 : vector<32x32xf32>
    %31 = arith.truncf %30 : vector<32x32xf32> to vector<32x32xbf16>
    %c0_28 = arith.constant 0 : index
    %c0_29 = arith.constant 0 : index
    %32 = vector.load %arg8[%c0_28, %c0_29] : memref<32x32xbf16, #tpu.memory_space<vmem>>, vector<32x32xbf16>
    %cst_30 = arith.constant dense<0.000000e+00> : vector<32x32xf32>
    %33 = tpu.matmul %31, %32, %cst_30 {dimension_numbers = #tpu.dot_dimension_numbers<[1], [0], [0], [1], [0, 0, 1, 1], [], []>} : vector<32x32xbf16>, vector<32x32xbf16>, vector<32x32xf32> -> vector<32x32xf32>
    %c0_31 = arith.constant 0 : index
    %c0_32 = arith.constant 0 : index
    %34 = vector.load %arg9[%c0_31, %c0_32] : memref<1x32xf32, #tpu.memory_space<vmem>>, vector<1x32xf32>
    %35 = vector.broadcast %34 : vector<1x32xf32> to vector<32x32xf32>
    %36 = arith.addf %33, %35 : vector<32x32xf32>
    %37 = arith.truncf %9 : vector<32x32xf32> to vector<32x32xbf16>
    %c0_33 = arith.constant 0 : index
    %c0_34 = arith.constant 0 : index
    %38 = vector.load %arg10[%c0_33, %c0_34] : memref<32x32xbf16, #tpu.memory_space<vmem>>, vector<32x32xbf16>
    %cst_35 = arith.constant dense<0.000000e+00> : vector<32x32xf32>
    %39 = tpu.matmul %37, %38, %cst_35 {dimension_numbers = #tpu.dot_dimension_numbers<[1], [0], [0], [1], [0, 0, 1, 1], [], []>} : vector<32x32xbf16>, vector<32x32xbf16>, vector<32x32xf32> -> vector<32x32xf32>
    %c0_36 = arith.constant 0 : index
    %c0_37 = arith.constant 0 : index
    %40 = vector.load %arg11[%c0_36, %c0_37] : memref<1x32xf32, #tpu.memory_space<vmem>>, vector<1x32xf32>
    %41 = vector.broadcast %40 : vector<1x32xf32> to vector<32x32xf32>
    %42 = arith.addf %39, %41 : vector<32x32xf32>
    %43 = vector.extract_strided_slice %16 {offsets = [0, 0], sizes = [8, 32], strides = [1, 1]} : vector<16x32xf32> to vector<8x32xf32>
    %44 = vector.shape_cast %43 : vector<8x32xf32> to vector<8x4x8xf32>
    %45 = vector.extract_strided_slice %23 {offsets = [0, 0], sizes = [16, 32], strides = [1, 1]} : vector<32x32xf32> to vector<16x32xf32>
    %46 = vector.shape_cast %45 : vector<16x32xf32> to vector<16x4x8xf32>
    %47 = vector.extract_strided_slice %29 {offsets = [0, 0], sizes = [16, 32], strides = [1, 1]} : vector<32x32xf32> to vector<16x32xf32>
    %48 = vector.shape_cast %47 : vector<16x32xf32> to vector<16x4x8xf32>
    %49 = tpu.transpose %44, [1, 0, 2] : vector<8x4x8xf32> -> vector<4x8x8xf32>
    %50 = arith.truncf %49 : vector<4x8x8xf32> to vector<4x8x8xbf16>
    %51 = tpu.transpose %46, [1, 0, 2] : vector<16x4x8xf32> -> vector<4x16x8xf32>
    %52 = arith.truncf %51 : vector<4x16x8xf32> to vector<4x16x8xbf16>
    %53 = tpu.transpose %48, [1, 0, 2] : vector<16x4x8xf32> -> vector<4x16x8xf32>
    %54 = arith.truncf %53 : vector<4x16x8xf32> to vector<4x16x8xbf16>
    "tpu.trace_start"() <{level = 10 : i32, message = "hqd,hkd->hqk"}> : () -> ()
    %cst_38 = arith.constant dense<0.000000e+00> : vector<4x8x16xf32>
    %55 = tpu.matmul %50, %52, %cst_38 {dimension_numbers = #tpu.dot_dimension_numbers<[2], [2], [1], [1], [0, 0, 0, 1, 1, 1], [0], [0]>} : vector<4x8x8xbf16>, vector<4x16x8xbf16>, vector<4x8x16xf32> -> vector<4x8x16xf32>
    "tpu.trace_stop"() : () -> ()
    %cst_39 = arith.constant dense<0xFF800000> : vector<4x8xf32>
    %56 = vector.multi_reduction <maximumf>, %55, %cst_39 [2] : vector<4x8x16xf32> to vector<4x8xf32>
    %57 = vector.shape_cast %56 : vector<4x8xf32> to vector<4x8x1xf32>
    %58 = vector.broadcast %57 : vector<4x8x1xf32> to vector<4x8x16xf32>
    %59 = arith.subf %55, %58 : vector<4x8x16xf32>
    %60 = math.exp %59 : vector<4x8x16xf32>
    %cst_40 = arith.constant dense<0.000000e+00> : vector<4x8xf32>
    %61 = vector.multi_reduction <add>, %60, %cst_40 [2] : vector<4x8x16xf32> to vector<4x8xf32>
    %62 = vector.shape_cast %61 : vector<4x8xf32> to vector<4x8x1xf32>
    %63 = tpu.reciprocal %62 {approx = true} : vector<4x8x1xf32> -> vector<4x8x1xf32>
    %64 = vector.broadcast %63 : vector<4x8x1xf32> to vector<4x8x16xf32>
    %65 = arith.mulf %60, %64 : vector<4x8x16xf32>
    %66 = arith.truncf %65 : vector<4x8x16xf32> to vector<4x8x16xbf16>
    "tpu.trace_start"() <{level = 10 : i32, message = "hqk,hkd->hqd"}> : () -> ()
    %cst_41 = arith.constant dense<0.000000e+00> : vector<4x8x8xf32>
    %67 = tpu.matmul %66, %54, %cst_41 {dimension_numbers = #tpu.dot_dimension_numbers<[2], [1], [1], [2], [0, 0, 0, 1, 1, 2], [0], [0]>} : vector<4x8x16xbf16>, vector<4x16x8xbf16>, vector<4x8x8xf32> -> vector<4x8x8xf32>
    "tpu.trace_stop"() : () -> ()
    %68 = tpu.transpose %67, [1, 0, 2] : vector<4x8x8xf32> -> vector<8x4x8xf32>
    %69 = vector.shape_cast %68 : vector<8x4x8xf32> to vector<8x32xf32>
    %70 = vector.extract_strided_slice %16 {offsets = [8, 0], sizes = [8, 32], strides = [1, 1]} : vector<16x32xf32> to vector<8x32xf32>
    %71 = vector.shape_cast %70 : vector<8x32xf32> to vector<8x4x8xf32>
    %72 = vector.extract_strided_slice %23 {offsets = [16, 0], sizes = [16, 32], strides = [1, 1]} : vector<32x32xf32> to vector<16x32xf32>
    %73 = vector.shape_cast %72 : vector<16x32xf32> to vector<16x4x8xf32>
    %74 = vector.extract_strided_slice %29 {offsets = [16, 0], sizes = [16, 32], strides = [1, 1]} : vector<32x32xf32> to vector<16x32xf32>
    %75 = vector.shape_cast %74 : vector<16x32xf32> to vector<16x4x8xf32>
    %76 = tpu.transpose %71, [1, 0, 2] : vector<8x4x8xf32> -> vector<4x8x8xf32>
    %77 = arith.truncf %76 : vector<4x8x8xf32> to vector<4x8x8xbf16>
    %78 = tpu.transpose %73, [1, 0, 2] : vector<16x4x8xf32> -> vector<4x16x8xf32>
    %79 = arith.truncf %78 : vector<4x16x8xf32> to vector<4x16x8xbf16>
    %80 = tpu.transpose %75, [1, 0, 2] : vector<16x4x8xf32> -> vector<4x16x8xf32>
    %81 = arith.truncf %80 : vector<4x16x8xf32> to vector<4x16x8xbf16>
    "tpu.trace_start"() <{level = 10 : i32, message = "hqd,hkd->hqk"}> : () -> ()
    %cst_42 = arith.constant dense<0.000000e+00> : vector<4x8x16xf32>
    %82 = tpu.matmul %77, %79, %cst_42 {dimension_numbers = #tpu.dot_dimension_numbers<[2], [2], [1], [1], [0, 0, 0, 1, 1, 1], [0], [0]>} : vector<4x8x8xbf16>, vector<4x16x8xbf16>, vector<4x8x16xf32> -> vector<4x8x16xf32>
    "tpu.trace_stop"() : () -> ()
    %cst_43 = arith.constant dense<0xFF800000> : vector<4x8xf32>
    %83 = vector.multi_reduction <maximumf>, %82, %cst_43 [2] : vector<4x8x16xf32> to vector<4x8xf32>
    %84 = vector.shape_cast %83 : vector<4x8xf32> to vector<4x8x1xf32>
    %85 = vector.broadcast %84 : vector<4x8x1xf32> to vector<4x8x16xf32>
    %86 = arith.subf %82, %85 : vector<4x8x16xf32>
    %87 = math.exp %86 : vector<4x8x16xf32>
    %cst_44 = arith.constant dense<0.000000e+00> : vector<4x8xf32>
    %88 = vector.multi_reduction <add>, %87, %cst_44 [2] : vector<4x8x16xf32> to vector<4x8xf32>
    %89 = vector.shape_cast %88 : vector<4x8xf32> to vector<4x8x1xf32>
    %90 = tpu.reciprocal %89 {approx = true} : vector<4x8x1xf32> -> vector<4x8x1xf32>
    %91 = vector.broadcast %90 : vector<4x8x1xf32> to vector<4x8x16xf32>
    %92 = arith.mulf %87, %91 : vector<4x8x16xf32>
    %93 = arith.truncf %92 : vector<4x8x16xf32> to vector<4x8x16xbf16>
    "tpu.trace_start"() <{level = 10 : i32, message = "hqk,hkd->hqd"}> : () -> ()
    %cst_45 = arith.constant dense<0.000000e+00> : vector<4x8x8xf32>
    %94 = tpu.matmul %93, %81, %cst_45 {dimension_numbers = #tpu.dot_dimension_numbers<[2], [1], [1], [2], [0, 0, 0, 1, 1, 2], [0], [0]>} : vector<4x8x16xbf16>, vector<4x16x8xbf16>, vector<4x8x8xf32> -> vector<4x8x8xf32>
    "tpu.trace_stop"() : () -> ()
    %95 = tpu.transpose %94, [1, 0, 2] : vector<4x8x8xf32> -> vector<8x4x8xf32>
    %96 = vector.shape_cast %95 : vector<8x4x8xf32> to vector<8x32xf32>
    %97 = tpu.concatenate %69, %96 in 0 : vector<8x32xf32>, vector<8x32xf32> -> vector<16x32xf32>
    %98 = arith.truncf %97 : vector<16x32xf32> to vector<16x32xbf16>
    %c0_46 = arith.constant 0 : index
    %c0_47 = arith.constant 0 : index
    %99 = vector.load %arg12[%c0_46, %c0_47] : memref<32x32xbf16, #tpu.memory_space<vmem>>, vector<32x32xbf16>
    %cst_48 = arith.constant dense<0.000000e+00> : vector<16x32xf32>
    %100 = tpu.matmul %98, %99, %cst_48 {dimension_numbers = #tpu.dot_dimension_numbers<[1], [0], [0], [1], [0, 0, 1, 1], [], []>} : vector<16x32xbf16>, vector<32x32xbf16>, vector<16x32xf32> -> vector<16x32xf32>
    %c0_49 = arith.constant 0 : index
    %c0_50 = arith.constant 0 : index
    %101 = vector.load %arg13[%c0_49, %c0_50] : memref<1x32xf32, #tpu.memory_space<vmem>>, vector<1x32xf32>
    %102 = vector.broadcast %101 : vector<1x32xf32> to vector<16x32xf32>
    %103 = arith.addf %100, %102 : vector<16x32xf32>
    %104 = vector.extract_strided_slice %16 {offsets = [0, 0], sizes = [8, 32], strides = [1, 1]} : vector<16x32xf32> to vector<8x32xf32>
    %105 = vector.shape_cast %104 : vector<8x32xf32> to vector<8x4x8xf32>
    %106 = vector.extract_strided_slice %36 {offsets = [0, 0], sizes = [16, 32], strides = [1, 1]} : vector<32x32xf32> to vector<16x32xf32>
    %107 = vector.shape_cast %106 : vector<16x32xf32> to vector<16x4x8xf32>
    %108 = vector.extract_strided_slice %42 {offsets = [0, 0], sizes = [16, 32], strides = [1, 1]} : vector<32x32xf32> to vector<16x32xf32>
    %109 = vector.shape_cast %108 : vector<16x32xf32> to vector<16x4x8xf32>
    %110 = tpu.transpose %105, [1, 0, 2] : vector<8x4x8xf32> -> vector<4x8x8xf32>
    %111 = arith.truncf %110 : vector<4x8x8xf32> to vector<4x8x8xbf16>
    %112 = tpu.transpose %107, [1, 0, 2] : vector<16x4x8xf32> -> vector<4x16x8xf32>
    %113 = arith.truncf %112 : vector<4x16x8xf32> to vector<4x16x8xbf16>
    %114 = tpu.transpose %109, [1, 0, 2] : vector<16x4x8xf32> -> vector<4x16x8xf32>
    %115 = arith.truncf %114 : vector<4x16x8xf32> to vector<4x16x8xbf16>
    "tpu.trace_start"() <{level = 10 : i32, message = "hqd,hkd->hqk"}> : () -> ()
    %cst_51 = arith.constant dense<0.000000e+00> : vector<4x8x16xf32>
    %116 = tpu.matmul %111, %113, %cst_51 {dimension_numbers = #tpu.dot_dimension_numbers<[2], [2], [1], [1], [0, 0, 0, 1, 1, 1], [0], [0]>} : vector<4x8x8xbf16>, vector<4x16x8xbf16>, vector<4x8x16xf32> -> vector<4x8x16xf32>
    "tpu.trace_stop"() : () -> ()
    %cst_52 = arith.constant dense<0xFF800000> : vector<4x8xf32>
    %117 = vector.multi_reduction <maximumf>, %116, %cst_52 [2] : vector<4x8x16xf32> to vector<4x8xf32>
    %118 = vector.shape_cast %117 : vector<4x8xf32> to vector<4x8x1xf32>
    %119 = vector.broadcast %118 : vector<4x8x1xf32> to vector<4x8x16xf32>
    %120 = arith.subf %116, %119 : vector<4x8x16xf32>
    %121 = math.exp %120 : vector<4x8x16xf32>
    %cst_53 = arith.constant dense<0.000000e+00> : vector<4x8xf32>
    %122 = vector.multi_reduction <add>, %121, %cst_53 [2] : vector<4x8x16xf32> to vector<4x8xf32>
    %123 = vector.shape_cast %122 : vector<4x8xf32> to vector<4x8x1xf32>
    %124 = tpu.reciprocal %123 {approx = true} : vector<4x8x1xf32> -> vector<4x8x1xf32>
    %125 = vector.broadcast %124 : vector<4x8x1xf32> to vector<4x8x16xf32>
    %126 = arith.mulf %121, %125 : vector<4x8x16xf32>
    %127 = arith.truncf %126 : vector<4x8x16xf32> to vector<4x8x16xbf16>
    "tpu.trace_start"() <{level = 10 : i32, message = "hqk,hkd->hqd"}> : () -> ()
    %cst_54 = arith.constant dense<0.000000e+00> : vector<4x8x8xf32>
    %128 = tpu.matmul %127, %115, %cst_54 {dimension_numbers = #tpu.dot_dimension_numbers<[2], [1], [1], [2], [0, 0, 0, 1, 1, 2], [0], [0]>} : vector<4x8x16xbf16>, vector<4x16x8xbf16>, vector<4x8x8xf32> -> vector<4x8x8xf32>
    "tpu.trace_stop"() : () -> ()
    %129 = tpu.transpose %128, [1, 0, 2] : vector<4x8x8xf32> -> vector<8x4x8xf32>
    %130 = vector.shape_cast %129 : vector<8x4x8xf32> to vector<8x32xf32>
    %131 = vector.extract_strided_slice %16 {offsets = [8, 0], sizes = [8, 32], strides = [1, 1]} : vector<16x32xf32> to vector<8x32xf32>
    %132 = vector.shape_cast %131 : vector<8x32xf32> to vector<8x4x8xf32>
    %133 = vector.extract_strided_slice %36 {offsets = [16, 0], sizes = [16, 32], strides = [1, 1]} : vector<32x32xf32> to vector<16x32xf32>
    %134 = vector.shape_cast %133 : vector<16x32xf32> to vector<16x4x8xf32>
    %135 = vector.extract_strided_slice %42 {offsets = [16, 0], sizes = [16, 32], strides = [1, 1]} : vector<32x32xf32> to vector<16x32xf32>
    %136 = vector.shape_cast %135 : vector<16x32xf32> to vector<16x4x8xf32>
    %137 = tpu.transpose %132, [1, 0, 2] : vector<8x4x8xf32> -> vector<4x8x8xf32>
    %138 = arith.truncf %137 : vector<4x8x8xf32> to vector<4x8x8xbf16>
    %139 = tpu.transpose %134, [1, 0, 2] : vector<16x4x8xf32> -> vector<4x16x8xf32>
    %140 = arith.truncf %139 : vector<4x16x8xf32> to vector<4x16x8xbf16>
    %141 = tpu.transpose %136, [1, 0, 2] : vector<16x4x8xf32> -> vector<4x16x8xf32>
    %142 = arith.truncf %141 : vector<4x16x8xf32> to vector<4x16x8xbf16>
    "tpu.trace_start"() <{level = 10 : i32, message = "hqd,hkd->hqk"}> : () -> ()
    %cst_55 = arith.constant dense<0.000000e+00> : vector<4x8x16xf32>
    %143 = tpu.matmul %138, %140, %cst_55 {dimension_numbers = #tpu.dot_dimension_numbers<[2], [2], [1], [1], [0, 0, 0, 1, 1, 1], [0], [0]>} : vector<4x8x8xbf16>, vector<4x16x8xbf16>, vector<4x8x16xf32> -> vector<4x8x16xf32>
    "tpu.trace_stop"() : () -> ()
    %cst_56 = arith.constant dense<0xFF800000> : vector<4x8xf32>
    %144 = vector.multi_reduction <maximumf>, %143, %cst_56 [2] : vector<4x8x16xf32> to vector<4x8xf32>
    %145 = vector.shape_cast %144 : vector<4x8xf32> to vector<4x8x1xf32>
    %146 = vector.broadcast %145 : vector<4x8x1xf32> to vector<4x8x16xf32>
    %147 = arith.subf %143, %146 : vector<4x8x16xf32>
    %148 = math.exp %147 : vector<4x8x16xf32>
    %cst_57 = arith.constant dense<0.000000e+00> : vector<4x8xf32>
    %149 = vector.multi_reduction <add>, %148, %cst_57 [2] : vector<4x8x16xf32> to vector<4x8xf32>
    %150 = vector.shape_cast %149 : vector<4x8xf32> to vector<4x8x1xf32>
    %151 = tpu.reciprocal %150 {approx = true} : vector<4x8x1xf32> -> vector<4x8x1xf32>
    %152 = vector.broadcast %151 : vector<4x8x1xf32> to vector<4x8x16xf32>
    %153 = arith.mulf %148, %152 : vector<4x8x16xf32>
    %154 = arith.truncf %153 : vector<4x8x16xf32> to vector<4x8x16xbf16>
    "tpu.trace_start"() <{level = 10 : i32, message = "hqk,hkd->hqd"}> : () -> ()
    %cst_58 = arith.constant dense<0.000000e+00> : vector<4x8x8xf32>
    %155 = tpu.matmul %154, %142, %cst_58 {dimension_numbers = #tpu.dot_dimension_numbers<[2], [1], [1], [2], [0, 0, 0, 1, 1, 2], [0], [0]>} : vector<4x8x16xbf16>, vector<4x16x8xbf16>, vector<4x8x8xf32> -> vector<4x8x8xf32>
    "tpu.trace_stop"() : () -> ()
    %156 = tpu.transpose %155, [1, 0, 2] : vector<4x8x8xf32> -> vector<8x4x8xf32>
    %157 = vector.shape_cast %156 : vector<8x4x8xf32> to vector<8x32xf32>
    %158 = tpu.concatenate %130, %157 in 0 : vector<8x32xf32>, vector<8x32xf32> -> vector<16x32xf32>
    %159 = arith.truncf %158 : vector<16x32xf32> to vector<16x32xbf16>
    %c0_59 = arith.constant 0 : index
    %c0_60 = arith.constant 0 : index
    %160 = vector.load %arg12[%c0_59, %c0_60] : memref<32x32xbf16, #tpu.memory_space<vmem>>, vector<32x32xbf16>
    %cst_61 = arith.constant dense<0.000000e+00> : vector<16x32xf32>
    %161 = tpu.matmul %159, %160, %cst_61 {dimension_numbers = #tpu.dot_dimension_numbers<[1], [0], [0], [1], [0, 0, 1, 1], [], []>} : vector<16x32xbf16>, vector<32x32xbf16>, vector<16x32xf32> -> vector<16x32xf32>
    %c0_62 = arith.constant 0 : index
    %c0_63 = arith.constant 0 : index
    %162 = vector.load %arg13[%c0_62, %c0_63] : memref<1x32xf32, #tpu.memory_space<vmem>>, vector<1x32xf32>
    %163 = vector.broadcast %162 : vector<1x32xf32> to vector<16x32xf32>
    %164 = arith.addf %161, %163 : vector<16x32xf32>
    %165 = arith.addf %1, %103 : vector<16x32xf32>
    %cst_64 = arith.constant dense<0.000000e+00> : vector<16xf32>
    %166 = vector.multi_reduction <add>, %165, %cst_64 [1] : vector<16x32xf32> to vector<16xf32>
    %167 = vector.shape_cast %166 : vector<16xf32> to vector<16x1xf32>
    %cst_65 = arith.constant 3.200000e+01 : f32
    %168 = vector.broadcast %cst_65 : f32 to vector<16x1xf32>
    %169 = arith.divf %167, %168 : vector<16x1xf32>
    %170 = vector.broadcast %169 : vector<16x1xf32> to vector<16x32xf32>
    %171 = arith.subf %165, %170 : vector<16x32xf32>
    %172 = arith.mulf %171, %171 : vector<16x32xf32>
    %cst_66 = arith.constant dense<0.000000e+00> : vector<16xf32>
    %173 = vector.multi_reduction <add>, %172, %cst_66 [1] : vector<16x32xf32> to vector<16xf32>
    %174 = vector.shape_cast %173 : vector<16xf32> to vector<16x1xf32>
    %cst_67 = arith.constant 3.200000e+01 : f32
    %175 = vector.broadcast %cst_67 : f32 to vector<16x1xf32>
    %176 = arith.divf %174, %175 : vector<16x1xf32>
    %177 = vector.broadcast %169 : vector<16x1xf32> to vector<16x32xf32>
    %178 = arith.subf %165, %177 : vector<16x32xf32>
    %cst_68 = arith.constant 9.99999974E-6 : f32
    %179 = vector.broadcast %cst_68 : f32 to vector<16x1xf32>
    %180 = arith.addf %176, %179 : vector<16x1xf32>
    %181 = math.rsqrt %180 : vector<16x1xf32>
    %182 = vector.broadcast %181 : vector<16x1xf32> to vector<16x32xf32>
    %183 = arith.mulf %178, %182 : vector<16x32xf32>
    %c0_69 = arith.constant 0 : index
    %c0_70 = arith.constant 0 : index
    %184 = vector.load %arg14[%c0_69, %c0_70] : memref<1x32xf32, #tpu.memory_space<vmem>>, vector<1x32xf32>
    %185 = vector.broadcast %184 : vector<1x32xf32> to vector<16x32xf32>
    %186 = arith.mulf %183, %185 : vector<16x32xf32>
    %c0_71 = arith.constant 0 : index
    %c0_72 = arith.constant 0 : index
    %187 = vector.load %arg15[%c0_71, %c0_72] : memref<1x32xf32, #tpu.memory_space<vmem>>, vector<1x32xf32>
    %188 = vector.broadcast %187 : vector<1x32xf32> to vector<16x32xf32>
    %189 = arith.addf %186, %188 : vector<16x32xf32>
    %190 = arith.addf %1, %164 : vector<16x32xf32>
    %cst_73 = arith.constant dense<0.000000e+00> : vector<16xf32>
    %191 = vector.multi_reduction <add>, %190, %cst_73 [1] : vector<16x32xf32> to vector<16xf32>
    %192 = vector.shape_cast %191 : vector<16xf32> to vector<16x1xf32>
    %cst_74 = arith.constant 3.200000e+01 : f32
    %193 = vector.broadcast %cst_74 : f32 to vector<16x1xf32>
    %194 = arith.divf %192, %193 : vector<16x1xf32>
    %195 = vector.broadcast %194 : vector<16x1xf32> to vector<16x32xf32>
    %196 = arith.subf %190, %195 : vector<16x32xf32>
    %197 = arith.mulf %196, %196 : vector<16x32xf32>
    %cst_75 = arith.constant dense<0.000000e+00> : vector<16xf32>
    %198 = vector.multi_reduction <add>, %197, %cst_75 [1] : vector<16x32xf32> to vector<16xf32>
    %199 = vector.shape_cast %198 : vector<16xf32> to vector<16x1xf32>
    %cst_76 = arith.constant 3.200000e+01 : f32
    %200 = vector.broadcast %cst_76 : f32 to vector<16x1xf32>
    %201 = arith.divf %199, %200 : vector<16x1xf32>
    %202 = vector.broadcast %194 : vector<16x1xf32> to vector<16x32xf32>
    %203 = arith.subf %190, %202 : vector<16x32xf32>
    %cst_77 = arith.constant 9.99999974E-6 : f32
    %204 = vector.broadcast %cst_77 : f32 to vector<16x1xf32>
    %205 = arith.addf %201, %204 : vector<16x1xf32>
    %206 = math.rsqrt %205 : vector<16x1xf32>
    %207 = vector.broadcast %206 : vector<16x1xf32> to vector<16x32xf32>
    %208 = arith.mulf %203, %207 : vector<16x32xf32>
    %c0_78 = arith.constant 0 : index
    %c0_79 = arith.constant 0 : index
    %209 = vector.load %arg14[%c0_78, %c0_79] : memref<1x32xf32, #tpu.memory_space<vmem>>, vector<1x32xf32>
    %210 = vector.broadcast %209 : vector<1x32xf32> to vector<16x32xf32>
    %211 = arith.mulf %208, %210 : vector<16x32xf32>
    %c0_80 = arith.constant 0 : index
    %c0_81 = arith.constant 0 : index
    %212 = vector.load %arg15[%c0_80, %c0_81] : memref<1x32xf32, #tpu.memory_space<vmem>>, vector<1x32xf32>
    %213 = vector.broadcast %212 : vector<1x32xf32> to vector<16x32xf32>
    %214 = arith.addf %211, %213 : vector<16x32xf32>
    %215 = arith.addf %189, %214 : vector<16x32xf32>
    %216 = arith.truncf %215 : vector<16x32xf32> to vector<16x32xbf16>
    %c0_82 = arith.constant 0 : index
    %c0_83 = arith.constant 0 : index
    %217 = vector.load %arg16[%c0_82, %c0_83] : memref<32x64xbf16, #tpu.memory_space<vmem>>, vector<32x64xbf16>
    %cst_84 = arith.constant dense<0.000000e+00> : vector<16x64xf32>
    %218 = tpu.matmul %216, %217, %cst_84 {dimension_numbers = #tpu.dot_dimension_numbers<[1], [0], [0], [1], [0, 0, 1, 1], [], []>} : vector<16x32xbf16>, vector<32x64xbf16>, vector<16x64xf32> -> vector<16x64xf32>
    %c0_85 = arith.constant 0 : index
    %c0_86 = arith.constant 0 : index
    %219 = vector.load %arg17[%c0_85, %c0_86] : memref<1x64xf32, #tpu.memory_space<vmem>>, vector<1x64xf32>
    %220 = vector.broadcast %219 : vector<1x64xf32> to vector<16x64xf32>
    %221 = arith.addf %218, %220 : vector<16x64xf32>
    %cst_87 = arith.constant 0.000000e+00 : f32
    %222 = vector.broadcast %cst_87 : f32 to vector<16x64xf32>
    %223 = arith.maximumf %221, %222 : vector<16x64xf32>
    %224 = arith.truncf %223 : vector<16x64xf32> to vector<16x64xbf16>
    %c0_88 = arith.constant 0 : index
    %c0_89 = arith.constant 0 : index
    %225 = vector.load %arg18[%c0_88, %c0_89] : memref<64x32xbf16, #tpu.memory_space<vmem>>, vector<64x32xbf16>
    %cst_90 = arith.constant dense<0.000000e+00> : vector<16x32xf32>
    %226 = tpu.matmul %224, %225, %cst_90 {dimension_numbers = #tpu.dot_dimension_numbers<[1], [0], [0], [1], [0, 0, 1, 1], [], []>} : vector<16x64xbf16>, vector<64x32xbf16>, vector<16x32xf32> -> vector<16x32xf32>
    %c0_91 = arith.constant 0 : index
    %c0_92 = arith.constant 0 : index
    %227 = vector.load %arg19[%c0_91, %c0_92] : memref<1x32xf32, #tpu.memory_space<vmem>>, vector<1x32xf32>
    %228 = vector.broadcast %227 : vector<1x32xf32> to vector<16x32xf32>
    %229 = arith.addf %226, %228 : vector<16x32xf32>
    %230 = arith.addf %215, %229 : vector<16x32xf32>
    %cst_93 = arith.constant dense<0.000000e+00> : vector<16xf32>
    %231 = vector.multi_reduction <add>, %230, %cst_93 [1] : vector<16x32xf32> to vector<16xf32>
    %232 = vector.shape_cast %231 : vector<16xf32> to vector<16x1xf32>
    %cst_94 = arith.constant 3.200000e+01 : f32
    %233 = vector.broadcast %cst_94 : f32 to vector<16x1xf32>
    %234 = arith.divf %232, %233 : vector<16x1xf32>
    %235 = vector.broadcast %234 : vector<16x1xf32> to vector<16x32xf32>
    %236 = arith.subf %230, %235 : vector<16x32xf32>
    %237 = arith.mulf %236, %236 : vector<16x32xf32>
    %cst_95 = arith.constant dense<0.000000e+00> : vector<16xf32>
    %238 = vector.multi_reduction <add>, %237, %cst_95 [1] : vector<16x32xf32> to vector<16xf32>
    %239 = vector.shape_cast %238 : vector<16xf32> to vector<16x1xf32>
    %cst_96 = arith.constant 3.200000e+01 : f32
    %240 = vector.broadcast %cst_96 : f32 to vector<16x1xf32>
    %241 = arith.divf %239, %240 : vector<16x1xf32>
    %242 = vector.broadcast %234 : vector<16x1xf32> to vector<16x32xf32>
    %243 = arith.subf %230, %242 : vector<16x32xf32>
    %cst_97 = arith.constant 9.99999974E-6 : f32
    %244 = vector.broadcast %cst_97 : f32 to vector<16x1xf32>
    %245 = arith.addf %241, %244 : vector<16x1xf32>
    %246 = math.rsqrt %245 : vector<16x1xf32>
    %247 = vector.broadcast %246 : vector<16x1xf32> to vector<16x32xf32>
    %248 = arith.mulf %243, %247 : vector<16x32xf32>
    %c0_98 = arith.constant 0 : index
    %c0_99 = arith.constant 0 : index
    %249 = vector.load %arg20[%c0_98, %c0_99] : memref<1x32xf32, #tpu.memory_space<vmem>>, vector<1x32xf32>
    %250 = vector.broadcast %249 : vector<1x32xf32> to vector<16x32xf32>
    %251 = arith.mulf %248, %250 : vector<16x32xf32>
    %c0_100 = arith.constant 0 : index
    %c0_101 = arith.constant 0 : index
    %252 = vector.load %arg21[%c0_100, %c0_101] : memref<1x32xf32, #tpu.memory_space<vmem>>, vector<1x32xf32>
    %253 = vector.broadcast %252 : vector<1x32xf32> to vector<16x32xf32>
    %254 = arith.addf %251, %253 : vector<16x32xf32>
    %255 = vector.shape_cast %254 : vector<16x32xf32> to vector<2x8x32xf32>
    %c0_102 = arith.constant 0 : index
    %c0_103 = arith.constant 0 : index
    %c0_104 = arith.constant 0 : index
    %256 = vector.load %arg22[%c0_102, %c0_103, %c0_104] : memref<2x8x32xf32, #tpu.memory_space<vmem>>, vector<2x8x32xf32>
    tpu.vector_store %arg22[%c0_102, %c0_103, %c0_104], %255 {strides = array<i32>} : memref<2x8x32xf32, #tpu.memory_space<vmem>>, vector<2x8x32xf32>,
    return
  }
  func.func @transform_0(%arg0: i32) -> (i32, i32, i32) {
    %c0_i32 = arith.constant 0 : i32
    %c0_i32_0 = arith.constant 0 : i32
    %c0_i32_1 = arith.constant 0 : i32
    return %arg0, %c0_i32, %c0_i32_0 : i32, i32, i32
  }
  func.func @transform_1(%arg0: i32) -> (i32, i32, i32) {
    %c0_i32 = arith.constant 0 : i32
    %c0_i32_0 = arith.constant 0 : i32
    %c0_i32_1 = arith.constant 0 : i32
    return %arg0, %c0_i32, %c0_i32_0 : i32, i32, i32
  }
  func.func @transform_2(%arg0: i32) -> (i32, i32, i32) {
    %c0_i32 = arith.constant 0 : i32
    %c0_i32_0 = arith.constant 0 : i32
    %c0_i32_1 = arith.constant 0 : i32
    return %arg0, %c0_i32, %c0_i32_0 : i32, i32, i32
  }
  func.func @transform_3(%arg0: i32) -> (i32, i32, i32) {
    %c0_i32 = arith.constant 0 : i32
    %c0_i32_0 = arith.constant 0 : i32
    %c0_i32_1 = arith.constant 0 : i32
    return %arg0, %c0_i32, %c0_i32_0 : i32, i32, i32
  }
  func.func @transform_4(%arg0: i32) -> (i32, i32, i32) {
    %c0_i32 = arith.constant 0 : i32
    %c0_i32_0 = arith.constant 0 : i32
    %c0_i32_1 = arith.constant 0 : i32
    return %arg0, %c0_i32, %c0_i32_0 : i32, i32, i32
  }
  func.func @transform_5(%arg0: i32) -> (i32, i32) {
    %c0_i32 = arith.constant 0 : i32
    %c0_i32_0 = arith.constant 0 : i32
    %c0_i32_1 = arith.constant 0 : i32
    return %c0_i32, %c0_i32_0 : i32, i32
  }
  func.func @transform_6(%arg0: i32) -> (i32, i32) {
    %c0_i32 = arith.constant 0 : i32
    %c0_i32_0 = arith.constant 0 : i32
    %c0_i32_1 = arith.constant 0 : i32
    return %c0_i32, %c0_i32_0 : i32, i32
  }
  func.func @transform_7(%arg0: i32) -> (i32, i32) {
    %c0_i32 = arith.constant 0 : i32
    %c0_i32_0 = arith.constant 0 : i32
    %c0_i32_1 = arith.constant 0 : i32
    return %c0_i32, %c0_i32_0 : i32, i32
  }
  func.func @transform_8(%arg0: i32) -> (i32, i32) {
    %c0_i32 = arith.constant 0 : i32
    %c0_i32_0 = arith.constant 0 : i32
    %c0_i32_1 = arith.constant 0 : i32
    return %c0_i32, %c0_i32_0 : i32, i32
  }
  func.func @transform_9(%arg0: i32) -> (i32, i32) {
    %c0_i32 = arith.constant 0 : i32
    %c0_i32_0 = arith.constant 0 : i32
    %c0_i32_1 = arith.constant 0 : i32
    return %c0_i32, %c0_i32_0 : i32, i32
  }
  func.func @transform_10(%arg0: i32) -> (i32, i32) {
    %c0_i32 = arith.constant 0 : i32
    %c0_i32_0 = arith.constant 0 : i32
    %c0_i32_1 = arith.constant 0 : i32
    return %c0_i32, %c0_i32_0 : i32, i32
  }
  func.func @transform_11(%arg0: i32) -> (i32, i32) {
    %c0_i32 = arith.constant 0 : i32
    %c0_i32_0 = arith.constant 0 : i32
    %c0_i32_1 = arith.constant 0 : i32
    return %c0_i32, %c0_i32_0 : i32, i32
  }
  func.func @transform_12(%arg0: i32) -> (i32, i32) {
    %c0_i32 = arith.constant 0 : i32
    %c0_i32_0 = arith.constant 0 : i32
    %c0_i32_1 = arith.constant 0 : i32
    return %c0_i32, %c0_i32_0 : i32, i32
  }
  func.func @transform_13(%arg0: i32) -> (i32, i32) {
    %c0_i32 = arith.constant 0 : i32
    %c0_i32_0 = arith.constant 0 : i32
    %c0_i32_1 = arith.constant 0 : i32
    return %c0_i32, %c0_i32_0 : i32, i32
  }
  func.func @transform_14(%arg0: i32) -> (i32, i32) {
    %c0_i32 = arith.constant 0 : i32
    %c0_i32_0 = arith.constant 0 : i32
    %c0_i32_1 = arith.constant 0 : i32
    return %c0_i32, %c0_i32_0 : i32, i32
  }
  func.func @transform_15(%arg0: i32) -> (i32, i32) {
    %c0_i32 = arith.constant 0 : i32
    %c0_i32_0 = arith.constant 0 : i32
    %c0_i32_1 = arith.constant 0 : i32
    return %c0_i32, %c0_i32_0 : i32, i32
  }
  func.func @transform_16(%arg0: i32) -> (i32, i32) {
    %c0_i32 = arith.constant 0 : i32
    %c0_i32_0 = arith.constant 0 : i32
    %c0_i32_1 = arith.constant 0 : i32
    return %c0_i32, %c0_i32_0 : i32, i32
  }
  func.func @transform_17(%arg0: i32) -> (i32, i32) {
    %c0_i32 = arith.constant 0 : i32
    %c0_i32_0 = arith.constant 0 : i32
    %c0_i32_1 = arith.constant 0 : i32
    return %c0_i32, %c0_i32_0 : i32, i32
  }
  func.func @transform_18(%arg0: i32) -> (i32, i32) {
    %c0_i32 = arith.constant 0 : i32
    %c0_i32_0 = arith.constant 0 : i32
    %c0_i32_1 = arith.constant 0 : i32
    return %c0_i32, %c0_i32_0 : i32, i32
  }
  func.func @transform_19(%arg0: i32) -> (i32, i32) {
    %c0_i32 = arith.constant 0 : i32
    %c0_i32_0 = arith.constant 0 : i32
    %c0_i32_1 = arith.constant 0 : i32
    return %c0_i32, %c0_i32_0 : i32, i32
  }
  func.func @transform_20(%arg0: i32) -> (i32, i32) {
    %c0_i32 = arith.constant 0 : i32
    %c0_i32_0 = arith.constant 0 : i32
    %c0_i32_1 = arith.constant 0 : i32
    return %c0_i32, %c0_i32_0 : i32, i32
  }
  func.func @transform_21(%arg0: i32) -> (i32, i32, i32) {
    %c0_i32 = arith.constant 0 : i32
    %c0_i32_0 = arith.constant 0 : i32
    %c0_i32_1 = arith.constant 0 : i32
    return %arg0, %c0_i32, %c0_i32_0 : i32, i32, i32
  }
}

</mosaic_0001>

<llo_original>
// kernel: tpu_custom_call.1
$region0: #{tpu_custom_call.1}
  #allocation0 [shape = 'u32[]', space=smem, size = 0x4, offset = 0x4, fixed_abs, tag = 'smem constant byte address 0x4 - core index']
  #allocation1 [shape = 'u32[72,128]{1,0:T(1,128)}', space=vmem, size = 0x9000, scoped, tag = 'internal scratch']
  %s0 = inlined_call_operand.vmem [shape: f32[2,8,32], index: 0, kind: input, shape index: {}]
  %s1 = inlined_call_operand.hbm [shape: f32[2,8,32], index: 1, kind: input, shape index: {}]
  %s2 = inlined_call_operand.vmem [shape: f32[2,16,32], index: 2, kind: input, shape index: {}]
  %s3 = inlined_call_operand.hbm [shape: f32[2,16,32], index: 3, kind: input, shape index: {}]
  %s4 = inlined_call_operand.hbm [shape: f32[2,16,32], index: 4, kind: input, shape index: {}]
  %s5 = inlined_call_operand.hbm [shape: bf16[32,32], index: 5, kind: input, shape index: {}]
  %s6 = inlined_call_operand.hbm [shape: f32[1,32], index: 6, kind: input, shape index: {}]
  %s7 = inlined_call_operand.hbm [shape: bf16[32,32], index: 7, kind: input, shape index: {}]
  %s8 = inlined_call_operand.hbm [shape: f32[1,32], index: 8, kind: input, shape index: {}]
  %s9 = inlined_call_operand.hbm [shape: bf16[32,32], index: 9, kind: input, shape index: {}]
  %s10 = inlined_call_operand.hbm [shape: f32[1,32], index: 10, kind: input, shape index: {}]
  %s11 = inlined_call_operand.hbm [shape: bf16[32,32], index: 11, kind: input, shape index: {}]
  %s12 = inlined_call_operand.hbm [shape: f32[1,32], index: 12, kind: input, shape index: {}]
  %s13 = inlined_call_operand.hbm [shape: f32[1,32], index: 13, kind: input, shape index: {}]
  %s14 = inlined_call_operand.hbm [shape: f32[1,32], index: 14, kind: input, shape index: {}]
  %s15 = inlined_call_operand.hbm [shape: bf16[32,64], index: 15, kind: input, shape index: {}]
  %s16 = inlined_call_operand.hbm [shape: f32[1,64], index: 16, kind: input, shape index: {}]
  %s17 = inlined_call_operand.vmem [shape: bf16[64,32], index: 17, kind: input, shape index: {}]
  %s18 = inlined_call_operand.vmem [shape: f32[1,32], index: 18, kind: input, shape index: {}]
  %s19 = inlined_call_operand.vmem [shape: f32[1,32], index: 19, kind: input, shape index: {}]
  %s20 = inlined_call_operand.vmem [shape: f32[1,32], index: 20, kind: input, shape index: {}]
  %s21 = inlined_call_operand.hbm [shape: f32[2,8,32], index: 21, kind: output, shape index: {}]
  %s22 = sld [smem:[#allocation0]]
  $region154: #{tpu_custom_call.1} parent=0
    _
  %s24 = ssub.s32 1, %s22
  %s25 = scalar_select 0, %s24, %s22
  $region1: #{tpu_custom_call.1} parent=0
    #allocation2 [shape = 'u8[8192]{0}', space=vmem, size = 0x2000, scoped, tag = 'input window, operand 1, single buffered']
    #allocation3 [shape = 's32[1]{0}', space=sflag, size = 0x4, scoped, tag = 'scoped memory for tpu_custom_call.1']
    #allocation4 [shape = 's32[1]{0}', space=sflag, size = 0x4, scoped, tag = 'scoped memory for tpu_custom_call.1']
    #allocation5 [shape = 'u8[16384]{0}', space=vmem, size = 0x4000, scoped, tag = 'input window, operand 3, single buffered']
    #allocation6 [shape = 's32[1]{0}', space=sflag, size = 0x4, scoped, tag = 'scoped memory for tpu_custom_call.1']
    #allocation7 [shape = 'u8[16384]{0}', space=vmem, size = 0x4000, scoped, tag = 'input window, operand 4, single buffered']
    #allocation8 [shape = 'u8[8192]{0}', space=vmem, size = 0x2000, scoped, tag = 'input window, operand 5, single buffered']
    #allocation9 [shape = 's32[1]{0}', space=sflag, size = 0x4, scoped, tag = 'scoped memory for tpu_custom_call.1']
    #allocation10 [shape = 'u8[512]{0}', space=vmem, size = 0x400, scoped, tag = 'input window, operand 6, single buffered']
    #allocation11 [shape = 'u8[8192]{0}', space=vmem, size = 0x2000, scoped, tag = 'input window, operand 7, single buffered']
    #allocation12 [shape = 's32[1]{0}', space=sflag, size = 0x4, scoped, tag = 'scoped memory for tpu_custom_call.1']
    #allocation13 [shape = 'u8[512]{0}', space=vmem, size = 0x400, scoped, tag = 'input window, operand 8, single buffered']
    #allocation14 [shape = 'u8[8192]{0}', space=vmem, size = 0x2000, scoped, tag = 'input window, operand 9, single buffered']
    #allocation15 [shape = 's32[1]{0}', space=sflag, size = 0x4, scoped, tag = 'scoped memory for tpu_custom_call.1']
    #allocation16 [shape = 'u8[512]{0}', space=vmem, size = 0x400, scoped, tag = 'input window, operand 10, single buffered']
    #allocation17 [shape = 'u8[8192]{0}', space=vmem, size = 0x2000, scoped, tag = 'input window, operand 11, single buffered']
    #allocation18 [shape = 's32[1]{0}', space=sflag, size = 0x4, scoped, tag = 'scoped memory for tpu_custom_call.1']
    #allocation19 [shape = 'u8[512]{0}', space=vmem, size = 0x400, scoped, tag = 'input window, operand 12, single buffered']
    #allocation20 [shape = 'u8[512]{0}', space=vmem, size = 0x400, scoped, tag = 'input window, operand 13, single buffered']
    #allocation21 [shape = 's32[1]{0}', space=sflag, size = 0x4, scoped, tag = 'scoped memory for tpu_custom_call.1']
    #allocation22 [shape = 'u8[512]{0}', space=vmem, size = 0x400, scoped, tag = 'input window, operand 14, single buffered']
    #allocation23 [shape = 'u8[8192]{0}', space=vmem, size = 0x2000, scoped, tag = 'input window, operand 15, single buffered']
    #allocation24 [shape = 's32[1]{0}', space=sflag, size = 0x4, scoped, tag = 'scoped memory for tpu_custom_call.1']
    #allocation25 [shape = 'u8[512]{0}', space=vmem, size = 0x400, scoped, tag = 'input window, operand 16, single buffered']
    #allocation26 [shape = 'u8[8192]{0}', space=vmem, size = 0x2000, scoped, tag = 'output window, operand 0, single buffered']
    %26 = vsyncpa [#allocation3], 0
    %27 = vsyncpa [#allocation6], 0
    %28 = vsyncpa [#allocation9], 0
    %29 = vsyncpa [#allocation12], 0
    %30 = vsyncpa [#allocation15], 0
    %31 = vsyncpa [#allocation18], 0
    %32 = vsyncpa [#allocation21], 0
    %33 = vsyncpa [#allocation24], 0
    %34 = vsyncpa [#allocation4], 0
    // Predicated region
    $region2: #{tpu_custom_call.1} parent=1 // pred_check
      _
    $region3: #{tpu_custom_call.1} parent=1 // pred_check_branch
      %36 = sbr.rel (0) target = $region5
    $region4: #{tpu_custom_call.1} parent=1 // pred_region
      _
    $region5: #{tpu_custom_call.1} parent=1 // pred_fallthru
      _
    // Predicated region
    $region6: #{tpu_custom_call.1} parent=1 // pred_check
      _
    $region7: #{tpu_custom_call.1} parent=1 // pred_check_branch
      %38 = sbr.rel (0) target = $region9
    $region8: #{tpu_custom_call.1} parent=1 // pred_region
      %40 = vsyncadd [#allocation3], 0
      %s41 = sshll.u32 %s1, 4
      %s42 = int_to_ptr.hbm [resolvable:$true] %s41
      %s43 = sshll.u32 [#allocation2], 4
      %s44 = int_to_ptr.vmem [resolvable:$true] %s43
      %49 = dma.hbm_to_vmem [thread:$0]  %s42, 256, %s44, [#allocation3], 128, 128, 8
    $region9: #{tpu_custom_call.1} parent=1 // pred_fallthru
      _
    // Predicated region
    $region10: #{tpu_custom_call.1} parent=1 // pred_check
      _
    $region11: #{tpu_custom_call.1} parent=1 // pred_check_branch
      %51 = sbr.rel (0) target = $region13
    $region12: #{tpu_custom_call.1} parent=1 // pred_region
      _
    $region13: #{tpu_custom_call.1} parent=1 // pred_fallthru
      _
    // Predicated region
    $region14: #{tpu_custom_call.1} parent=1 // pred_check
      _
    $region15: #{tpu_custom_call.1} parent=1 // pred_check_branch
      %53 = sbr.rel (0) target = $region17
    $region16: #{tpu_custom_call.1} parent=1 // pred_region
      %55 = vsyncadd [#allocation6], 0
      %s56 = sshll.u32 %s3, 4
      %s57 = int_to_ptr.hbm [resolvable:$true] %s56
      %s58 = sshll.u32 [#allocation5], 4
      %s59 = int_to_ptr.vmem [resolvable:$true] %s58
      %64 = dma.hbm_to_vmem [thread:$0]  %s57, 512, %s59, [#allocation6], 128, 128, 8
    $region17: #{tpu_custom_call.1} parent=1 // pred_fallthru
      _
    // Predicated region
    $region18: #{tpu_custom_call.1} parent=1 // pred_check
      _
    $region19: #{tpu_custom_call.1} parent=1 // pred_check_branch
      %66 = sbr.rel (0) target = $region21
    $region20: #{tpu_custom_call.1} parent=1 // pred_region
      %68 = vsyncadd [#allocation6], 0
      %s69 = sshll.u32 %s4, 4
      %s70 = int_to_ptr.hbm [resolvable:$true] %s69
      %s71 = sshll.u32 [#allocation7], 4
      %s72 = int_to_ptr.vmem [resolvable:$true] %s71
      %77 = dma.hbm_to_vmem [thread:$0]  %s70, 512, %s72, [#allocation6], 128, 128, 8
    $region21: #{tpu_custom_call.1} parent=1 // pred_fallthru
      _
    // Predicated region
    $region22: #{tpu_custom_call.1} parent=1 // pred_check
      _
    $region23: #{tpu_custom_call.1} parent=1 // pred_check_branch
      %79 = sbr.rel (0) target = $region25
    $region24: #{tpu_custom_call.1} parent=1 // pred_region
      %81 = vsyncadd [#allocation9], 0
      %s82 = sshll.u32 %s5, 4
      %s83 = int_to_ptr.hbm [resolvable:$true] %s82
      %s84 = sshll.u32 [#allocation8], 4
      %s85 = int_to_ptr.vmem [resolvable:$true] %s84
      %90 = dma.hbm_to_vmem [thread:$0]  %s83, 256, %s85, [#allocation9], 64, 64, 4
    $region25: #{tpu_custom_call.1} parent=1 // pred_fallthru
      _
    // Predicated region
    $region26: #{tpu_custom_call.1} parent=1 // pred_check
      _
    $region27: #{tpu_custom_call.1} parent=1 // pred_check_branch
      %92 = sbr.rel (0) target = $region29
    $region28: #{tpu_custom_call.1} parent=1 // pred_region
      %94 = vsyncadd [#allocation9], 0
      %s96 = sshll.u32 %s6, 4
      %s97 = int_to_ptr.hbm [resolvable:$true] %s96
      %s98 = sshll.u32 [#allocation10], 4
      %s99 = int_to_ptr.vmem [resolvable:$true] %s98
      %101 = dma.hbm_to_vmem [thread:$0]  %s97, 16, %s99, [#allocation9]
    $region29: #{tpu_custom_call.1} parent=1 // pred_fallthru
      _
    // Predicated region
    $region30: #{tpu_custom_call.1} parent=1 // pred_check
      _
    $region31: #{tpu_custom_call.1} parent=1 // pred_check_branch
      %103 = sbr.rel (0) target = $region33
    $region32: #{tpu_custom_call.1} parent=1 // pred_region
      %105 = vsyncadd [#allocation12], 0
      %s106 = sshll.u32 %s7, 4
      %s107 = int_to_ptr.hbm [resolvable:$true] %s106
      %s108 = sshll.u32 [#allocation11], 4
      %s109 = int_to_ptr.vmem [resolvable:$true] %s108
      %114 = dma.hbm_to_vmem [thread:$0]  %s107, 256, %s109, [#allocation12], 64, 64, 4
    $region33: #{tpu_custom_call.1} parent=1 // pred_fallthru
      _
    // Predicated region
    $region34: #{tpu_custom_call.1} parent=1 // pred_check
      _
    $region35: #{tpu_custom_call.1} parent=1 // pred_check_branch
      %116 = sbr.rel (0) target = $region37
    $region36: #{tpu_custom_call.1} parent=1 // pred_region
      %118 = vsyncadd [#allocation12], 0
      %s120 = sshll.u32 %s8, 4
      %s121 = int_to_ptr.hbm [resolvable:$true] %s120
      %s122 = sshll.u32 [#allocation13], 4
      %s123 = int_to_ptr.vmem [resolvable:$true] %s122
      %125 = dma.hbm_to_vmem [thread:$0]  %s121, 16, %s123, [#allocation12]
    $region37: #{tpu_custom_call.1} parent=1 // pred_fallthru
      _
    // Predicated region
    $region38: #{tpu_custom_call.1} parent=1 // pred_check
      _
    $region39: #{tpu_custom_call.1} parent=1 // pred_check_branch
      %127 = sbr.rel (0) target = $region41
    $region40: #{tpu_custom_call.1} parent=1 // pred_region
      %129 = vsyncadd [#allocation15], 0
      %s130 = sshll.u32 %s9, 4
      %s131 = int_to_ptr.hbm [resolvable:$true] %s130
      %s132 = sshll.u32 [#allocation14], 4
      %s133 = int_to_ptr.vmem [resolvable:$true] %s132
      %138 = dma.hbm_to_vmem [thread:$0]  %s131, 256, %s133, [#allocation15], 64, 64, 4
    $region41: #{tpu_custom_call.1} parent=1 // pred_fallthru
      _
    // Predicated region
    $region42: #{tpu_custom_call.1} parent=1 // pred_check
      _
    $region43: #{tpu_custom_call.1} parent=1 // pred_check_branch
      %140 = sbr.rel (0) target = $region45
    $region44: #{tpu_custom_call.1} parent=1 // pred_region
      %142 = vsyncadd [#allocation15], 0
      %s144 = sshll.u32 %s10, 4
      %s145 = int_to_ptr.hbm [resolvable:$true] %s144
      %s146 = sshll.u32 [#allocation16], 4
      %s147 = int_to_ptr.vmem [resolvable:$true] %s146
      %149 = dma.hbm_to_vmem [thread:$0]  %s145, 16, %s147, [#allocation15]
    $region45: #{tpu_custom_call.1} parent=1 // pred_fallthru
      _
    // Predicated region
    $region46: #{tpu_custom_call.1} parent=1 // pred_check
      _
    $region47: #{tpu_custom_call.1} parent=1 // pred_check_branch
      %151 = sbr.rel (0) target = $region49
    $region48: #{tpu_custom_call.1} parent=1 // pred_region
      %153 = vsyncadd [#allocation18], 0
      %s154 = sshll.u32 %s11, 4
      %s155 = int_to_ptr.hbm [resolvable:$true] %s154
      %s156 = sshll.u32 [#allocation17], 4
      %s157 = int_to_ptr.vmem [resolvable:$true] %s156
      %162 = dma.hbm_to_vmem [thread:$0]  %s155, 256, %s157, [#allocation18], 64, 64, 4
    $region49: #{tpu_custom_call.1} parent=1 // pred_fallthru
      _
    // Predicated region
    $region50: #{tpu_custom_call.1} parent=1 // pred_check
      _
    $region51: #{tpu_custom_call.1} parent=1 // pred_check_branch
      %164 = sbr.rel (0) target = $region53
    $region52: #{tpu_custom_call.1} parent=1 // pred_region
      %166 = vsyncadd [#allocation18], 0
      %s168 = sshll.u32 %s12, 4
      %s169 = int_to_ptr.hbm [resolvable:$true] %s168
      %s170 = sshll.u32 [#allocation19], 4
      %s171 = int_to_ptr.vmem [resolvable:$true] %s170
      %173 = dma.hbm_to_vmem [thread:$0]  %s169, 16, %s171, [#allocation18]
    $region53: #{tpu_custom_call.1} parent=1 // pred_fallthru
      _
    // Predicated region
    $region54: #{tpu_custom_call.1} parent=1 // pred_check
      _
    $region55: #{tpu_custom_call.1} parent=1 // pred_check_branch
      %175 = sbr.rel (0) target = $region57
    $region56: #{tpu_custom_call.1} parent=1 // pred_region
      %177 = vsyncadd [#allocation21], 0
      %s179 = sshll.u32 %s13, 4
      %s180 = int_to_ptr.hbm [resolvable:$true] %s179
      %s181 = sshll.u32 [#allocation20], 4
      %s182 = int_to_ptr.vmem [resolvable:$true] %s181
      %184 = dma.hbm_to_vmem [thread:$0]  %s180, 16, %s182, [#allocation21]
    $region57: #{tpu_custom_call.1} parent=1 // pred_fallthru
      _
    // Predicated region
    $region58: #{tpu_custom_call.1} parent=1 // pred_check
      _
    $region59: #{tpu_custom_call.1} parent=1 // pred_check_branch
      %186 = sbr.rel (0) target = $region61
    $region60: #{tpu_custom_call.1} parent=1 // pred_region
      %188 = vsyncadd [#allocation21], 0
      %s190 = sshll.u32 %s14, 4
      %s191 = int_to_ptr.hbm [resolvable:$true] %s190
      %s192 = sshll.u32 [#allocation22], 4
      %s193 = int_to_ptr.vmem [resolvable:$true] %s192
      %195 = dma.hbm_to_vmem [thread:$0]  %s191, 16, %s193, [#allocation21]
    $region61: #{tpu_custom_call.1} parent=1 // pred_fallthru
      _
    // Predicated region
    $region62: #{tpu_custom_call.1} parent=1 // pred_check
      _
    $region63: #{tpu_custom_call.1} parent=1 // pred_check_branch
      %197 = sbr.rel (0) target = $region65
    $region64: #{tpu_custom_call.1} parent=1 // pred_region
      %199 = vsyncadd [#allocation24], 0
      %s200 = sshll.u32 %s15, 4
      %s201 = int_to_ptr.hbm [resolvable:$true] %s200
      %s202 = sshll.u32 [#allocation23], 4
      %s203 = int_to_ptr.vmem [resolvable:$true] %s202
      %208 = dma.hbm_to_vmem [thread:$0]  %s201, 256, %s203, [#allocation24], 64, 64, 4
    $region65: #{tpu_custom_call.1} parent=1 // pred_fallthru
      _
    // Predicated region
    $region66: #{tpu_custom_call.1} parent=1 // pred_check
      _
    $region67: #{tpu_custom_call.1} parent=1 // pred_check_branch
      %210 = sbr.rel (0) target = $region69
    $region68: #{tpu_custom_call.1} parent=1 // pred_region
      %212 = vsyncadd [#allocation24], 0
      %s214 = sshll.u32 %s16, 4
      %s215 = int_to_ptr.hbm [resolvable:$true] %s214
      %s216 = sshll.u32 [#allocation25], 4
      %s217 = int_to_ptr.vmem [resolvable:$true] %s216
      %219 = dma.hbm_to_vmem [thread:$0]  %s215, 16, %s217, [#allocation24]
    $region69: #{tpu_custom_call.1} parent=1 // pred_fallthru
      _
    // Predicated region
    $region70: #{tpu_custom_call.1} parent=1 // pred_check
      _
    $region71: #{tpu_custom_call.1} parent=1 // pred_check_branch
      %221 = sbr.rel (0) target = $region73
    $region72: #{tpu_custom_call.1} parent=1 // pred_region
      _
    $region73: #{tpu_custom_call.1} parent=1 // pred_fallthru
      _
    // Predicated region
    $region74: #{tpu_custom_call.1} parent=1 // pred_check
      _
    $region75: #{tpu_custom_call.1} parent=1 // pred_check_branch
      %223 = sbr.rel (0) target = $region77
    $region76: #{tpu_custom_call.1} parent=1 // pred_region
      _
    $region77: #{tpu_custom_call.1} parent=1 // pred_fallthru
      _
    // Predicated region
    $region78: #{tpu_custom_call.1} parent=1 // pred_check
      _
    $region79: #{tpu_custom_call.1} parent=1 // pred_check_branch
      %225 = sbr.rel (0) target = $region81
    $region80: #{tpu_custom_call.1} parent=1 // pred_region
      _
    $region81: #{tpu_custom_call.1} parent=1 // pred_fallthru
      _
    // Predicated region
    $region82: #{tpu_custom_call.1} parent=1 // pred_check
      _
    $region83: #{tpu_custom_call.1} parent=1 // pred_check_branch
      %227 = sbr.rel (0) target = $region85
    $region84: #{tpu_custom_call.1} parent=1 // pred_region
      _
    $region85: #{tpu_custom_call.1} parent=1 // pred_fallthru
      _
    // Predicated region
    $region86: #{tpu_custom_call.1} parent=1 // pred_check
      _
    $region87: #{tpu_custom_call.1} parent=1 // pred_check_branch
      %229 = sbr.rel (0) target = $region89
    $region88: #{tpu_custom_call.1} parent=1 // pred_region
      %231 = dma.done [#allocation3], 256
    $region89: #{tpu_custom_call.1} parent=1 // pred_fallthru
      _
    // Predicated region
    $region90: #{tpu_custom_call.1} parent=1 // pred_check
      _
    $region91: #{tpu_custom_call.1} parent=1 // pred_check_branch
      %233 = sbr.rel (0) target = $region93
    $region92: #{tpu_custom_call.1} parent=1 // pred_region
      %235 = dma.done [#allocation6], 512
    $region93: #{tpu_custom_call.1} parent=1 // pred_fallthru
      _
    // Predicated region
    $region94: #{tpu_custom_call.1} parent=1 // pred_check
      _
    $region95: #{tpu_custom_call.1} parent=1 // pred_check_branch
      %237 = sbr.rel (0) target = $region97
    $region96: #{tpu_custom_call.1} parent=1 // pred_region
      %239 = dma.done [#allocation6], 512
    $region97: #{tpu_custom_call.1} parent=1 // pred_fallthru
      _
    // Predicated region
    $region98: #{tpu_custom_call.1} parent=1 // pred_check
      _
    $region99: #{tpu_custom_call.1} parent=1 // pred_check_branch
      %241 = sbr.rel (0) target = $region101
    $region100: #{tpu_custom_call.1} parent=1 // pred_region
      %243 = dma.done [#allocation9], 256
    $region101: #{tpu_custom_call.1} parent=1 // pred_fallthru
      _
    // Predicated region
    $region102: #{tpu_custom_call.1} parent=1 // pred_check
      _
    $region103: #{tpu_custom_call.1} parent=1 // pred_check_branch
      %245 = sbr.rel (0) target = $region105
    $region104: #{tpu_custom_call.1} parent=1 // pred_region
      %247 = dma.done [#allocation9], 16
    $region105: #{tpu_custom_call.1} parent=1 // pred_fallthru
      _
    // Predicated region
    $region106: #{tpu_custom_call.1} parent=1 // pred_check
      _
    $region107: #{tpu_custom_call.1} parent=1 // pred_check_branch
      %249 = sbr.rel (0) target = $region109
    $region108: #{tpu_custom_call.1} parent=1 // pred_region
      %251 = dma.done [#allocation12], 256
    $region109: #{tpu_custom_call.1} parent=1 // pred_fallthru
      _
    // Predicated region
    $region110: #{tpu_custom_call.1} parent=1 // pred_check
      _
    $region111: #{tpu_custom_call.1} parent=1 // pred_check_branch
      %253 = sbr.rel (0) target = $region113
    $region112: #{tpu_custom_call.1} parent=1 // pred_region
      %255 = dma.done [#allocation12], 16
    $region113: #{tpu_custom_call.1} parent=1 // pred_fallthru
      _
    // Predicated region
    $region114: #{tpu_custom_call.1} parent=1 // pred_check
      _
    $region115: #{tpu_custom_call.1} parent=1 // pred_check_branch
      %257 = sbr.rel (0) target = $region117
    $region116: #{tpu_custom_call.1} parent=1 // pred_region
      %259 = dma.done [#allocation15], 256
    $region117: #{tpu_custom_call.1} parent=1 // pred_fallthru
      _
    // Predicated region
    $region118: #{tpu_custom_call.1} parent=1 // pred_check
      _
    $region119: #{tpu_custom_call.1} parent=1 // pred_check_branch
      %261 = sbr.rel (0) target = $region121
    $region120: #{tpu_custom_call.1} parent=1 // pred_region
      %263 = dma.done [#allocation15], 16
    $region121: #{tpu_custom_call.1} parent=1 // pred_fallthru
      _
    // Predicated region
    $region122: #{tpu_custom_call.1} parent=1 // pred_check
      _
    $region123: #{tpu_custom_call.1} parent=1 // pred_check_branch
      %265 = sbr.rel (0) target = $region125
    $region124: #{tpu_custom_call.1} parent=1 // pred_region
      %267 = dma.done [#allocation18], 256
    $region125: #{tpu_custom_call.1} parent=1 // pred_fallthru
      _
    // Predicated region
    $region126: #{tpu_custom_call.1} parent=1 // pred_check
      _
    $region127: #{tpu_custom_call.1} parent=1 // pred_check_branch
      %269 = sbr.rel (0) target = $region129
    $region128: #{tpu_custom_call.1} parent=1 // pred_region
      %271 = dma.done [#allocation18], 16
    $region129: #{tpu_custom_call.1} parent=1 // pred_fallthru
      _
    // Predicated region
    $region130: #{tpu_custom_call.1} parent=1 // pred_check
      _
    $region131: #{tpu_custom_call.1} parent=1 // pred_check_branch
      %273 = sbr.rel (0) target = $region133
    $region132: #{tpu_custom_call.1} parent=1 // pred_region
      %275 = dma.done [#allocation21], 16
    $region133: #{tpu_custom_call.1} parent=1 // pred_fallthru
      _
    // Predicated region
    $region134: #{tpu_custom_call.1} parent=1 // pred_check
      _
    $region135: #{tpu_custom_call.1} parent=1 // pred_check_branch
      %277 = sbr.rel (0) target = $region137
    $region136: #{tpu_custom_call.1} parent=1 // pred_region
      %279 = dma.done [#allocation21], 16
    $region137: #{tpu_custom_call.1} parent=1 // pred_fallthru
      _
    // Predicated region
    $region138: #{tpu_custom_call.1} parent=1 // pred_check
      _
    $region139: #{tpu_custom_call.1} parent=1 // pred_check_branch
      %281 = sbr.rel (0) target = $region141
    $region140: #{tpu_custom_call.1} parent=1 // pred_region
      %283 = dma.done [#allocation24], 256
    $region141: #{tpu_custom_call.1} parent=1 // pred_fallthru
      _
    // Predicated region
    $region142: #{tpu_custom_call.1} parent=1 // pred_check
      _
    $region143: #{tpu_custom_call.1} parent=1 // pred_check_branch
      %285 = sbr.rel (0) target = $region145
    $region144: #{tpu_custom_call.1} parent=1 // pred_region
      %287 = dma.done [#allocation24], 16
    $region145: #{tpu_custom_call.1} parent=1 // pred_fallthru
      _
    %v289 = vld [vmem:[%s0] sm:$0xff]
    %v290 = vld [vmem:[%s0 + $0x8] sm:$0xff]
    %v291 = vld [vmem:[#allocation2] sm:$0xff]
    %v292 = vld [vmem:[#allocation2 + $0x8] sm:$0xff]
    %v293 = vld [vmem:[%s2] sm:$0xff]
    %v294 = vld [vmem:[%s2 + $0x8] sm:$0xff]
    %v295 = vld [vmem:[%s2 + $0x10] sm:$0xff]
    %v296 = vld [vmem:[%s2 + $0x18] sm:$0xff]
    %v297 = vld [vmem:[#allocation5] sm:$0xff]
    %v298 = vld [vmem:[#allocation5 + $0x8] sm:$0xff]
    %v299 = vld [vmem:[#allocation5 + $0x10] sm:$0xff]
    %v300 = vld [vmem:[#allocation5 + $0x18] sm:$0xff]
    %v301 = vld [vmem:[#allocation7] sm:$0xff]
    %v302 = vld [vmem:[#allocation7 + $0x8] sm:$0xff]
    %v303 = vld [vmem:[#allocation7 + $0x10] sm:$0xff]
    %v304 = vld [vmem:[#allocation7 + $0x18] sm:$0xff]
    %v305 = vadd.f32 %v289, %v291
    %v306 = vadd.f32 %v290, %v292
    %v307 = vpack.c.bf16 %v306, %v305
    %v308 = vld [vmem:[#allocation8] sm:$0xf]
    %v309 = vld [vmem:[#allocation8 + $0x4] sm:$0xf]
    %v310 = vld [vmem:[#allocation8 + $0x8] sm:$0xf]
    %v311 = vld [vmem:[#allocation8 + $0xc] sm:$0xf]
    %v312 = vld [vmem:[#allocation10] sm:$0x1]
    %v314 = vperm.slane %v312, 0
    %v320 = vunpack.c.l.b16 %v308
    %v321 = vunpack.c.l.b16 %v309
    %v322 = vunpack.c.l.b16 %v310
    %v323 = vunpack.c.l.b16 %v311
    %v324 = vpack.c.b16 %v321, %v320
    %v325 = vpack.c.b16 %v323, %v322
    %vm328 = vcmask 261120
    %v330 = vsel %vm328, %v307, 0
    %332 = vmatpush.bf16.msra.mxu0 0
    %333 = vmatpush.bf16.msra.mxu0 0
    %334 = vmatpush.bf16.msra.mxu0 0
    %335 = vmatpush.bf16.msra.mxu0 0
    %336 = vmatpush.bf16.msra.mxu0 0
    %337 = vmatpush.bf16.msra.mxu0 0
    %338 = vmatpush.bf16.msra.mxu0 %v325
    %339 = vmatpush.bf16.msra.mxu0 %v324
    %340 = vmatmul.bf16.gmra.mxu0 %v330
    %v341 = vpop.f32.mrf.mxu0
    %v342 = vadd.f32 %v314, %v341
    %v343 = vpop.f32.mrf.mxu0
    %v344 = vadd.f32 %v314, %v343
    %345 = vdwg.mxu0
    %v346 = vadd.f32 %v293, %v297
    %v347 = vadd.f32 %v294, %v298
    %v348 = vadd.f32 %v295, %v299
    %v349 = vadd.f32 %v296, %v300
    %v350 = vpack.c.bf16 %v347, %v346
    %v351 = vpack.c.bf16 %v349, %v348
    %v352 = vld [vmem:[#allocation11] sm:$0xf]
    %v353 = vld [vmem:[#allocation11 + $0x4] sm:$0xf]
    %v354 = vld [vmem:[#allocation11 + $0x8] sm:$0xf]
    %v355 = vld [vmem:[#allocation11 + $0xc] sm:$0xf]
    %v356 = vld [vmem:[#allocation13] sm:$0x1]
    %v358 = vperm.slane %v356, 0
    %v364 = vunpack.c.l.b16 %v352
    %v365 = vunpack.c.l.b16 %v353
    %v366 = vunpack.c.l.b16 %v354
    %v367 = vunpack.c.l.b16 %v355
    %v368 = vpack.c.b16 %v365, %v364
    %v369 = vpack.c.b16 %v367, %v366
    %v373 = vsel %vm328, %v350, 0
    %v376 = vsel %vm328, %v351, 0
    %378 = vmatpush.bf16.msra.mxu0 0
    %379 = vmatpush.bf16.msra.mxu0 0
    %380 = vmatpush.bf16.msra.mxu0 0
    %381 = vmatpush.bf16.msra.mxu0 0
    %382 = vmatpush.bf16.msra.mxu0 0
    %383 = vmatpush.bf16.msra.mxu0 0
    %384 = vmatpush.bf16.msra.mxu0 %v369
    %385 = vmatpush.bf16.msra.mxu0 %v368
    %386 = vmatmul.bf16.gmra.mxu0 %v373
    %v387 = vpop.f32.mrf.mxu0
    %v388 = vadd.f32 %v358, %v387
    %v389 = vpop.f32.mrf.mxu0
    %v390 = vadd.f32 %v358, %v389
    %391 = vmatmul.bf16.gmra.mxu0 %v376
    %v392 = vpop.f32.mrf.mxu0
    %v393 = vadd.f32 %v358, %v392
    %v394 = vpop.f32.mrf.mxu0
    %v395 = vadd.f32 %v358, %v394
    %396 = vdwg.mxu0
    %v397 = vpack.c.bf16 %v294, %v293
    %v398 = vpack.c.bf16 %v296, %v295
    %v399 = vld [vmem:[#allocation14] sm:$0xf]
    %v400 = vld [vmem:[#allocation14 + $0x4] sm:$0xf]
    %v401 = vld [vmem:[#allocation14 + $0x8] sm:$0xf]
    %v402 = vld [vmem:[#allocation14 + $0xc] sm:$0xf]
    %v403 = vld [vmem:[#allocation16] sm:$0x1]
    %v405 = vperm.slane %v403, 0
    %v411 = vunpack.c.l.b16 %v399
    %v412 = vunpack.c.l.b16 %v400
    %v413 = vunpack.c.l.b16 %v401
    %v414 = vunpack.c.l.b16 %v402
    %v415 = vpack.c.b16 %v412, %v411
    %v416 = vpack.c.b16 %v414, %v413
    %v420 = vsel %vm328, %v397, 0
    %v423 = vsel %vm328, %v398, 0
    %425 = vmatpush.bf16.msra.mxu0 0
    %426 = vmatpush.bf16.msra.mxu0 0
    %427 = vmatpush.bf16.msra.mxu0 0
    %428 = vmatpush.bf16.msra.mxu0 0
    %429 = vmatpush.bf16.msra.mxu0 0
    %430 = vmatpush.bf16.msra.mxu0 0
    %431 = vmatpush.bf16.msra.mxu0 %v416
    %432 = vmatpush.bf16.msra.mxu0 %v415
    %433 = vmatmul.bf16.gmra.mxu0 %v420
    %v434 = vpop.f32.mrf.mxu0
    %v435 = vadd.f32 %v405, %v434
    %v436 = vpop.f32.mrf.mxu0
    %v437 = vadd.f32 %v405, %v436
    %438 = vmatmul.bf16.gmra.mxu0 %v423
    %v439 = vpop.f32.mrf.mxu0
    %v440 = vadd.f32 %v405, %v439
    %v441 = vpop.f32.mrf.mxu0
    %v442 = vadd.f32 %v405, %v441
    %443 = vdwg.mxu0
    %v444 = vadd.f32 %v301, %v297
    %v445 = vadd.f32 %v302, %v298
    %v446 = vadd.f32 %v303, %v299
    %v447 = vadd.f32 %v304, %v300
    %v448 = vpack.c.bf16 %v445, %v444
    %v449 = vpack.c.bf16 %v447, %v446
    %v451 = vsel %vm328, %v448, 0
    %v454 = vsel %vm328, %v449, 0
    %456 = vmatpush.bf16.msra.mxu0 0
    %457 = vmatpush.bf16.msra.mxu0 0
    %458 = vmatpush.bf16.msra.mxu0 0
    %459 = vmatpush.bf16.msra.mxu0 0
    %460 = vmatpush.bf16.msra.mxu0 0
    %461 = vmatpush.bf16.msra.mxu0 0
    %462 = vmatpush.bf16.msra.mxu0 %v369
    %463 = vmatpush.bf16.msra.mxu0 %v368
    %464 = vmatmul.bf16.gmra.mxu0 %v451
    %v465 = vpop.f32.mrf.mxu0
    %v466 = vadd.f32 %v358, %v465
    %v467 = vpop.f32.mrf.mxu0
    %v468 = vadd.f32 %v358, %v467
    %469 = vmatmul.bf16.gmra.mxu0 %v454
    %v470 = vpop.f32.mrf.mxu0
    %v471 = vadd.f32 %v358, %v470
    %v472 = vpop.f32.mrf.mxu0
    %v473 = vadd.f32 %v358, %v472
    %474 = vdwg.mxu0
    %v475 = vpack.c.bf16 %v302, %v301
    %v476 = vpack.c.bf16 %v304, %v303
    %v478 = vsel %vm328, %v475, 0
    %v481 = vsel %vm328, %v476, 0
    %483 = vmatpush.bf16.msra.mxu0 0
    %484 = vmatpush.bf16.msra.mxu0 0
    %485 = vmatpush.bf16.msra.mxu0 0
    %486 = vmatpush.bf16.msra.mxu0 0
    %487 = vmatpush.bf16.msra.mxu0 0
    %488 = vmatpush.bf16.msra.mxu0 0
    %489 = vmatpush.bf16.msra.mxu0 %v416
    %490 = vmatpush.bf16.msra.mxu0 %v415
    %491 = vmatmul.bf16.gmra.mxu0 %v478
    %v492 = vpop.f32.mrf.mxu0
    %v493 = vadd.f32 %v405, %v492
    %v494 = vpop.f32.mrf.mxu0
    %v495 = vadd.f32 %v405, %v494
    %496 = vmatmul.bf16.gmra.mxu0 %v481
    %v497 = vpop.f32.mrf.mxu0
    %v498 = vadd.f32 %v405, %v497
    %v499 = vpop.f32.mrf.mxu0
    %v500 = vadd.f32 %v405, %v499
    %501 = vdwg.mxu0
    %503 = vrot.lane.b32.xlu0 %v342, 120
    %v504 = vpop.permute.xlu0 %503
    %506 = vrot.lane.b32.xlu0 %v342, 112
    %v507 = vpop.permute.xlu0 %506
    %509 = vrot.lane.b32.xlu0 %v342, 104
    %v510 = vpop.permute.xlu0 %509
    %v512 = vrot.slane %v507, 4
    %vm513 = vcmask 1047556
    %v514 = vsel %vm513, %v512, %v342
    %v515 = vrot.slane %v342, 4
    %v516 = vsel %vm513, %v507, %v515
    %v518 = vunpack.c.l.s4 1983009808
    %v519 = vunpack.c.0.s8 %v518
    %v520 = vperm.slane %v514, %v519
    %v522 = vunpack.c.l.s4 1983009808
    %v523 = vunpack.c.0.s8 %v522
    %v524 = vperm.slane %v516, %v523
    %v525 = vrot.slane %v510, 4
    %v526 = vsel %vm513, %v525, %v504
    %v527 = vrot.slane %v504, 4
    %v528 = vsel %vm513, %v510, %v527
    %v530 = vunpack.c.l.s4 1983009808
    %v531 = vunpack.c.0.s8 %v530
    %v532 = vperm.slane %v526, %v531
    %v534 = vunpack.c.l.s4 1983009808
    %v535 = vunpack.c.0.s8 %v534
    %v536 = vperm.slane %v528, %v535
    %v537 = vrot.slane %v532, 4
    %v538 = vsel %vm513, %v537, %v520
    %v539 = vrot.slane %v520, 4
    %v540 = vsel %vm513, %v532, %v539
    %v542 = vunpack.c.l.s4 1934713408
    %v543 = vunpack.c.0.s8 %v542
    %v544 = vperm.slane %v538, %v543
    %v546 = vunpack.c.l.s4 1934713408
    %v547 = vunpack.c.0.s8 %v546
    %v548 = vperm.slane %v540, %v547
    %v549 = vrot.slane %v536, 4
    %v550 = vsel %vm513, %v549, %v524
    %v551 = vrot.slane %v524, 4
    %v552 = vsel %vm513, %v536, %v551
    %v554 = vunpack.c.l.s4 1934713408
    %v555 = vunpack.c.0.s8 %v554
    %v556 = vperm.slane %v550, %v555
    %v558 = vunpack.c.l.s4 1934713408
    %v559 = vunpack.c.0.s8 %v558
    %v560 = vperm.slane %v552, %v559
    %v561 = vrot.slane %v544, 4
    %v562 = vsel %vm513, 0.0, %v561
    %v563 = vrot.slane %v548, 4
    %v564 = vsel %vm513, 0.0, %v563
    %v565 = vrot.slane %v556, 4
    %v566 = vsel %vm513, 0.0, %v565
    %v567 = vrot.slane %v560, 4
    %v568 = vsel %vm513, 0.0, %v567
    %571 = vrot.lane.b32.xlu0 %v388, 120
    %v572 = vpop.permute.xlu0 %571
    %573 = vrot.lane.b32.xlu0 %v390, 120
    %v574 = vpop.permute.xlu0 %573
    %577 = vrot.lane.b32.xlu0 %v388, 112
    %v578 = vpop.permute.xlu0 %577
    %579 = vrot.lane.b32.xlu0 %v390, 112
    %v580 = vpop.permute.xlu0 %579
    %583 = vrot.lane.b32.xlu0 %v388, 104
    %v584 = vpop.permute.xlu0 %583
    %585 = vrot.lane.b32.xlu0 %v390, 104
    %v586 = vpop.permute.xlu0 %585
    %v589 = vrot.slane %v578, 4
    %v590 = vsel %vm513, %v589, %v388
    %v591 = vrot.slane %v388, 4
    %v592 = vsel %vm513, %v578, %v591
    %v594 = vunpack.c.l.s4 1983009808
    %v595 = vunpack.c.0.s8 %v594
    %v596 = vperm.slane %v590, %v595
    %v598 = vunpack.c.l.s4 1983009808
    %v599 = vunpack.c.0.s8 %v598
    %v600 = vperm.slane %v592, %v599
    %v601 = vrot.slane %v584, 4
    %v602 = vsel %vm513, %v601, %v572
    %v603 = vrot.slane %v572, 4
    %v604 = vsel %vm513, %v584, %v603
    %v606 = vunpack.c.l.s4 1983009808
    %v607 = vunpack.c.0.s8 %v606
    %v608 = vperm.slane %v602, %v607
    %v610 = vunpack.c.l.s4 1983009808
    %v611 = vunpack.c.0.s8 %v610
    %v612 = vperm.slane %v604, %v611
    %v613 = vrot.slane %v608, 4
    %v614 = vsel %vm513, %v613, %v596
    %v615 = vrot.slane %v596, 4
    %v616 = vsel %vm513, %v608, %v615
    %v618 = vunpack.c.l.s4 1934713408
    %v619 = vunpack.c.0.s8 %v618
    %v620 = vperm.slane %v614, %v619
    %v622 = vunpack.c.l.s4 1934713408
    %v623 = vunpack.c.0.s8 %v622
    %v624 = vperm.slane %v616, %v623
    %v625 = vrot.slane %v612, 4
    %v626 = vsel %vm513, %v625, %v600
    %v627 = vrot.slane %v600, 4
    %v628 = vsel %vm513, %v612, %v627
    %v630 = vunpack.c.l.s4 1934713408
    %v631 = vunpack.c.0.s8 %v630
    %v632 = vperm.slane %v626, %v631
    %v634 = vunpack.c.l.s4 1934713408
    %v635 = vunpack.c.0.s8 %v634
    %v636 = vperm.slane %v628, %v635
    %v637 = vrot.slane %v620, 4
    %v638 = vsel %vm513, 0.0, %v637
    %v639 = vrot.slane %v624, 4
    %v640 = vsel %vm513, 0.0, %v639
    %v641 = vrot.slane %v632, 4
    %v642 = vsel %vm513, 0.0, %v641
    %v643 = vrot.slane %v636, 4
    %v644 = vsel %vm513, 0.0, %v643
    %v645 = vrot.slane %v580, 4
    %v646 = vsel %vm513, %v645, %v390
    %v647 = vrot.slane %v390, 4
    %v648 = vsel %vm513, %v580, %v647
    %v650 = vunpack.c.l.s4 1983009808
    %v651 = vunpack.c.0.s8 %v650
    %v652 = vperm.slane %v646, %v651
    %v654 = vunpack.c.l.s4 1983009808
    %v655 = vunpack.c.0.s8 %v654
    %v656 = vperm.slane %v648, %v655
    %v657 = vrot.slane %v586, 4
    %v658 = vsel %vm513, %v657, %v574
    %v659 = vrot.slane %v574, 4
    %v660 = vsel %vm513, %v586, %v659
    %v662 = vunpack.c.l.s4 1983009808
    %v663 = vunpack.c.0.s8 %v662
    %v664 = vperm.slane %v658, %v663
    %v666 = vunpack.c.l.s4 1983009808
    %v667 = vunpack.c.0.s8 %v666
    %v668 = vperm.slane %v660, %v667
    %v669 = vrot.slane %v664, 4
    %v670 = vsel %vm513, %v669, %v652
    %v671 = vrot.slane %v652, 4
    %v672 = vsel %vm513, %v664, %v671
    %v674 = vunpack.c.l.s4 1934713408
    %v675 = vunpack.c.0.s8 %v674
    %v676 = vperm.slane %v670, %v675
    %v678 = vunpack.c.l.s4 1934713408
    %v679 = vunpack.c.0.s8 %v678
    %v680 = vperm.slane %v672, %v679
    %v681 = vrot.slane %v668, 4
    %v682 = vsel %vm513, %v681, %v656
    %v683 = vrot.slane %v656, 4
    %v684 = vsel %vm513, %v668, %v683
    %v686 = vunpack.c.l.s4 1934713408
    %v687 = vunpack.c.0.s8 %v686
    %v688 = vperm.slane %v682, %v687
    %v690 = vunpack.c.l.s4 1934713408
    %v691 = vunpack.c.0.s8 %v690
    %v692 = vperm.slane %v684, %v691
    %v693 = vrot.slane %v676, 4
    %v694 = vsel %vm513, 0.0, %v693
    %v695 = vrot.slane %v680, 4
    %v696 = vsel %vm513, 0.0, %v695
    %v697 = vrot.slane %v688, 4
    %v698 = vsel %vm513, 0.0, %v697
    %v699 = vrot.slane %v692, 4
    %v700 = vsel %vm513, 0.0, %v699
    %703 = vrot.lane.b32.xlu0 %v435, 120
    %v704 = vpop.permute.xlu0 %703
    %705 = vrot.lane.b32.xlu0 %v437, 120
    %v706 = vpop.permute.xlu0 %705
    %709 = vrot.lane.b32.xlu0 %v435, 112
    %v710 = vpop.permute.xlu0 %709
    %711 = vrot.lane.b32.xlu0 %v437, 112
    %v712 = vpop.permute.xlu0 %711
    %715 = vrot.lane.b32.xlu0 %v435, 104
    %v716 = vpop.permute.xlu0 %715
    %717 = vrot.lane.b32.xlu0 %v437, 104
    %v718 = vpop.permute.xlu0 %717
    %v721 = vrot.slane %v710, 4
    %v722 = vsel %vm513, %v721, %v435
    %v723 = vrot.slane %v435, 4
    %v724 = vsel %vm513, %v710, %v723
    %v726 = vunpack.c.l.s4 1983009808
    %v727 = vunpack.c.0.s8 %v726
    %v728 = vperm.slane %v722, %v727
    %v730 = vunpack.c.l.s4 1983009808
    %v731 = vunpack.c.0.s8 %v730
    %v732 = vperm.slane %v724, %v731
    %v733 = vrot.slane %v716, 4
    %v734 = vsel %vm513, %v733, %v704
    %v735 = vrot.slane %v704, 4
    %v736 = vsel %vm513, %v716, %v735
    %v738 = vunpack.c.l.s4 1983009808
    %v739 = vunpack.c.0.s8 %v738
    %v740 = vperm.slane %v734, %v739
    %v742 = vunpack.c.l.s4 1983009808
    %v743 = vunpack.c.0.s8 %v742
    %v744 = vperm.slane %v736, %v743
    %v745 = vrot.slane %v740, 4
    %v746 = vsel %vm513, %v745, %v728
    %v747 = vrot.slane %v728, 4
    %v748 = vsel %vm513, %v740, %v747
    %v750 = vunpack.c.l.s4 1934713408
    %v751 = vunpack.c.0.s8 %v750
    %v752 = vperm.slane %v746, %v751
    %v754 = vunpack.c.l.s4 1934713408
    %v755 = vunpack.c.0.s8 %v754
    %v756 = vperm.slane %v748, %v755
    %v757 = vrot.slane %v744, 4
    %v758 = vsel %vm513, %v757, %v732
    %v759 = vrot.slane %v732, 4
    %v760 = vsel %vm513, %v744, %v759
    %v762 = vunpack.c.l.s4 1934713408
    %v763 = vunpack.c.0.s8 %v762
    %v764 = vperm.slane %v758, %v763
    %v766 = vunpack.c.l.s4 1934713408
    %v767 = vunpack.c.0.s8 %v766
    %v768 = vperm.slane %v760, %v767
    %v769 = vrot.slane %v752, 4
    %v770 = vsel %vm513, 0.0, %v769
    %v771 = vrot.slane %v756, 4
    %v772 = vsel %vm513, 0.0, %v771
    %v773 = vrot.slane %v764, 4
    %v774 = vsel %vm513, 0.0, %v773
    %v775 = vrot.slane %v768, 4
    %v776 = vsel %vm513, 0.0, %v775
    %v777 = vrot.slane %v712, 4
    %v778 = vsel %vm513, %v777, %v437
    %v779 = vrot.slane %v437, 4
    %v780 = vsel %vm513, %v712, %v779
    %v782 = vunpack.c.l.s4 1983009808
    %v783 = vunpack.c.0.s8 %v782
    %v784 = vperm.slane %v778, %v783
    %v786 = vunpack.c.l.s4 1983009808
    %v787 = vunpack.c.0.s8 %v786
    %v788 = vperm.slane %v780, %v787
    %v789 = vrot.slane %v718, 4
    %v790 = vsel %vm513, %v789, %v706
    %v791 = vrot.slane %v706, 4
    %v792 = vsel %vm513, %v718, %v791
    %v794 = vunpack.c.l.s4 1983009808
    %v795 = vunpack.c.0.s8 %v794
    %v796 = vperm.slane %v790, %v795
    %v798 = vunpack.c.l.s4 1983009808
    %v799 = vunpack.c.0.s8 %v798
    %v800 = vperm.slane %v792, %v799
    %v801 = vrot.slane %v796, 4
    %v802 = vsel %vm513, %v801, %v784
    %v803 = vrot.slane %v784, 4
    %v804 = vsel %vm513, %v796, %v803
    %v806 = vunpack.c.l.s4 1934713408
    %v807 = vunpack.c.0.s8 %v806
    %v808 = vperm.slane %v802, %v807
    %v810 = vunpack.c.l.s4 1934713408
    %v811 = vunpack.c.0.s8 %v810
    %v812 = vperm.slane %v804, %v811
    %v813 = vrot.slane %v800, 4
    %v814 = vsel %vm513, %v813, %v788
    %v815 = vrot.slane %v788, 4
    %v816 = vsel %vm513, %v800, %v815
    %v818 = vunpack.c.l.s4 1934713408
    %v819 = vunpack.c.0.s8 %v818
    %v820 = vperm.slane %v814, %v819
    %v822 = vunpack.c.l.s4 1934713408
    %v823 = vunpack.c.0.s8 %v822
    %v824 = vperm.slane %v816, %v823
    %v825 = vrot.slane %v808, 4
    %v826 = vsel %vm513, 0.0, %v825
    %v827 = vrot.slane %v812, 4
    %v828 = vsel %vm513, 0.0, %v827
    %v829 = vrot.slane %v820, 4
    %v830 = vsel %vm513, 0.0, %v829
    %v831 = vrot.slane %v824, 4
    %v832 = vsel %vm513, 0.0, %v831
    %v833 = vsel %vm513, %v563, %v544
    %v835 = vunpack.c.l.s4 1983009808
    %v836 = vunpack.c.0.s8 %v835
    %v837 = vperm.slane %v833, %v836
    %v838 = vrot.slane %v564, 4
    %v839 = vsel %vm513, %v838, %v562
    %v841 = vunpack.c.l.s4 1983009808
    %v842 = vunpack.c.0.s8 %v841
    %v843 = vperm.slane %v839, %v842
    %v844 = vsel %vm513, %v567, %v556
    %v846 = vunpack.c.l.s4 1983009808
    %v847 = vunpack.c.0.s8 %v846
    %v848 = vperm.slane %v844, %v847
    %v849 = vrot.slane %v568, 4
    %v850 = vsel %vm513, %v849, %v566
    %v852 = vunpack.c.l.s4 1983009808
    %v853 = vunpack.c.0.s8 %v852
    %v854 = vperm.slane %v850, %v853
    %v855 = vrot.slane %v843, 4
    %v856 = vsel %vm513, %v855, %v837
    %v857 = vrot.slane %v837, 4
    %v858 = vsel %vm513, %v843, %v857
    %v860 = vunpack.c.l.s4 1934713408
    %v861 = vunpack.c.0.s8 %v860
    %v862 = vperm.slane %v856, %v861
    %v864 = vunpack.c.l.s4 1934713408
    %v865 = vunpack.c.0.s8 %v864
    %v866 = vperm.slane %v858, %v865
    %v867 = vrot.slane %v854, 4
    %v868 = vsel %vm513, %v867, %v848
    %v869 = vrot.slane %v848, 4
    %v870 = vsel %vm513, %v854, %v869
    %v872 = vunpack.c.l.s4 1934713408
    %v873 = vunpack.c.0.s8 %v872
    %v874 = vperm.slane %v868, %v873
    %v876 = vunpack.c.l.s4 1934713408
    %v877 = vunpack.c.0.s8 %v876
    %v878 = vperm.slane %v870, %v877
    %v879 = vrot.slane %v874, 4
    %v880 = vsel %vm513, %v879, %v862
    %v881 = vrot.slane %v862, 4
    %v882 = vsel %vm513, %v874, %v881
    %v883 = vrot.slane %v878, 4
    %v884 = vsel %vm513, %v883, %v866
    %v885 = vrot.slane %v866, 4
    %v886 = vsel %vm513, %v878, %v885
    %v887 = vpack.c.bf16 %v880, %v880
    %v888 = vpack.c.bf16 %v882, %v882
    %v889 = vpack.c.bf16 %v884, %v884
    %v890 = vpack.c.bf16 %v886, %v886
    %v891 = vsel %vm513, %v639, %v620
    %v893 = vunpack.c.l.s4 1983009808
    %v894 = vunpack.c.0.s8 %v893
    %v895 = vperm.slane %v891, %v894
    %v896 = vrot.slane %v640, 4
    %v897 = vsel %vm513, %v896, %v638
    %v899 = vunpack.c.l.s4 1983009808
    %v900 = vunpack.c.0.s8 %v899
    %v901 = vperm.slane %v897, %v900
    %v902 = vsel %vm513, %v643, %v632
    %v904 = vunpack.c.l.s4 1983009808
    %v905 = vunpack.c.0.s8 %v904
    %v906 = vperm.slane %v902, %v905
    %v907 = vrot.slane %v644, 4
    %v908 = vsel %vm513, %v907, %v642
    %v910 = vunpack.c.l.s4 1983009808
    %v911 = vunpack.c.0.s8 %v910
    %v912 = vperm.slane %v908, %v911
    %v913 = vrot.slane %v901, 4
    %v914 = vsel %vm513, %v913, %v895
    %v915 = vrot.slane %v895, 4
    %v916 = vsel %vm513, %v901, %v915
    %v918 = vunpack.c.l.s4 1934713408
    %v919 = vunpack.c.0.s8 %v918
    %v920 = vperm.slane %v914, %v919
    %v922 = vunpack.c.l.s4 1934713408
    %v923 = vunpack.c.0.s8 %v922
    %v924 = vperm.slane %v916, %v923
    %v925 = vrot.slane %v912, 4
    %v926 = vsel %vm513, %v925, %v906
    %v927 = vrot.slane %v906, 4
    %v928 = vsel %vm513, %v912, %v927
    %v930 = vunpack.c.l.s4 1934713408
    %v931 = vunpack.c.0.s8 %v930
    %v932 = vperm.slane %v926, %v931
    %v934 = vunpack.c.l.s4 1934713408
    %v935 = vunpack.c.0.s8 %v934
    %v936 = vperm.slane %v928, %v935
    %v937 = vrot.slane %v932, 4
    %v938 = vsel %vm513, %v937, %v920
    %v939 = vrot.slane %v920, 4
    %v940 = vsel %vm513, %v932, %v939
    %v941 = vrot.slane %v936, 4
    %v942 = vsel %vm513, %v941, %v924
    %v943 = vrot.slane %v924, 4
    %v944 = vsel %vm513, %v936, %v943
    %v945 = vsel %vm513, %v695, %v676
    %v947 = vunpack.c.l.s4 1983009808
    %v948 = vunpack.c.0.s8 %v947
    %v949 = vperm.slane %v945, %v948
    %v950 = vrot.slane %v696, 4
    %v951 = vsel %vm513, %v950, %v694
    %v953 = vunpack.c.l.s4 1983009808
    %v954 = vunpack.c.0.s8 %v953
    %v955 = vperm.slane %v951, %v954
    %v956 = vsel %vm513, %v699, %v688
    %v958 = vunpack.c.l.s4 1983009808
    %v959 = vunpack.c.0.s8 %v958
    %v960 = vperm.slane %v956, %v959
    %v961 = vrot.slane %v700, 4
    %v962 = vsel %vm513, %v961, %v698
    %v964 = vunpack.c.l.s4 1983009808
    %v965 = vunpack.c.0.s8 %v964
    %v966 = vperm.slane %v962, %v965
    %v967 = vrot.slane %v955, 4
    %v968 = vsel %vm513, %v967, %v949
    %v969 = vrot.slane %v949, 4
    %v970 = vsel %vm513, %v955, %v969
    %v972 = vunpack.c.l.s4 1934713408
    %v973 = vunpack.c.0.s8 %v972
    %v974 = vperm.slane %v968, %v973
    %v976 = vunpack.c.l.s4 1934713408
    %v977 = vunpack.c.0.s8 %v976
    %v978 = vperm.slane %v970, %v977
    %v979 = vrot.slane %v966, 4
    %v980 = vsel %vm513, %v979, %v960
    %v981 = vrot.slane %v960, 4
    %v982 = vsel %vm513, %v966, %v981
    %v984 = vunpack.c.l.s4 1934713408
    %v985 = vunpack.c.0.s8 %v984
    %v986 = vperm.slane %v980, %v985
    %v988 = vunpack.c.l.s4 1934713408
    %v989 = vunpack.c.0.s8 %v988
    %v990 = vperm.slane %v982, %v989
    %v991 = vrot.slane %v986, 4
    %v992 = vsel %vm513, %v991, %v974
    %v993 = vrot.slane %v974, 4
    %v994 = vsel %vm513, %v986, %v993
    %v995 = vrot.slane %v990, 4
    %v996 = vsel %vm513, %v995, %v978
    %v997 = vrot.slane %v978, 4
    %v998 = vsel %vm513, %v990, %v997
    %v999 = vpack.c.bf16 %v938, %v938
    %v1000 = vpack.c.bf16 %v992, %v992
    %v1001 = vpack.c.bf16 %v940, %v940
    %v1002 = vpack.c.bf16 %v994, %v994
    %v1003 = vpack.c.bf16 %v942, %v942
    %v1004 = vpack.c.bf16 %v996, %v996
    %v1005 = vpack.c.bf16 %v944, %v944
    %v1006 = vpack.c.bf16 %v998, %v998
    %v1007 = vsel %vm513, %v771, %v752
    %v1009 = vunpack.c.l.s4 1983009808
    %v1010 = vunpack.c.0.s8 %v1009
    %v1011 = vperm.slane %v1007, %v1010
    %v1012 = vrot.slane %v772, 4
    %v1013 = vsel %vm513, %v1012, %v770
    %v1015 = vunpack.c.l.s4 1983009808
    %v1016 = vunpack.c.0.s8 %v1015
    %v1017 = vperm.slane %v1013, %v1016
    %v1018 = vsel %vm513, %v775, %v764
    %v1020 = vunpack.c.l.s4 1983009808
    %v1021 = vunpack.c.0.s8 %v1020
    %v1022 = vperm.slane %v1018, %v1021
    %v1023 = vrot.slane %v776, 4
    %v1024 = vsel %vm513, %v1023, %v774
    %v1026 = vunpack.c.l.s4 1983009808
    %v1027 = vunpack.c.0.s8 %v1026
    %v1028 = vperm.slane %v1024, %v1027
    %v1029 = vrot.slane %v1017, 4
    %v1030 = vsel %vm513, %v1029, %v1011
    %v1031 = vrot.slane %v1011, 4
    %v1032 = vsel %vm513, %v1017, %v1031
    %v1034 = vunpack.c.l.s4 1934713408
    %v1035 = vunpack.c.0.s8 %v1034
    %v1036 = vperm.slane %v1030, %v1035
    %v1038 = vunpack.c.l.s4 1934713408
    %v1039 = vunpack.c.0.s8 %v1038
    %v1040 = vperm.slane %v1032, %v1039
    %v1041 = vrot.slane %v1028, 4
    %v1042 = vsel %vm513, %v1041, %v1022
    %v1043 = vrot.slane %v1022, 4
    %v1044 = vsel %vm513, %v1028, %v1043
    %v1046 = vunpack.c.l.s4 1934713408
    %v1047 = vunpack.c.0.s8 %v1046
    %v1048 = vperm.slane %v1042, %v1047
    %v1050 = vunpack.c.l.s4 1934713408
    %v1051 = vunpack.c.0.s8 %v1050
    %v1052 = vperm.slane %v1044, %v1051
    %v1053 = vrot.slane %v1048, 4
    %v1054 = vsel %vm513, %v1053, %v1036
    %v1055 = vrot.slane %v1036, 4
    %v1056 = vsel %vm513, %v1048, %v1055
    %v1057 = vrot.slane %v1052, 4
    %v1058 = vsel %vm513, %v1057, %v1040
    %v1059 = vrot.slane %v1040, 4
    %v1060 = vsel %vm513, %v1052, %v1059
    %v1061 = vsel %vm513, %v827, %v808
    %v1063 = vunpack.c.l.s4 1983009808
    %v1064 = vunpack.c.0.s8 %v1063
    %v1065 = vperm.slane %v1061, %v1064
    %v1066 = vrot.slane %v828, 4
    %v1067 = vsel %vm513, %v1066, %v826
    %v1069 = vunpack.c.l.s4 1983009808
    %v1070 = vunpack.c.0.s8 %v1069
    %v1071 = vperm.slane %v1067, %v1070
    %v1072 = vsel %vm513, %v831, %v820
    %v1074 = vunpack.c.l.s4 1983009808
    %v1075 = vunpack.c.0.s8 %v1074
    %v1076 = vperm.slane %v1072, %v1075
    %v1077 = vrot.slane %v832, 4
    %v1078 = vsel %vm513, %v1077, %v830
    %v1080 = vunpack.c.l.s4 1983009808
    %v1081 = vunpack.c.0.s8 %v1080
    %v1082 = vperm.slane %v1078, %v1081
    %v1083 = vrot.slane %v1071, 4
    %v1084 = vsel %vm513, %v1083, %v1065
    %v1085 = vrot.slane %v1065, 4
    %v1086 = vsel %vm513, %v1071, %v1085
    %v1088 = vunpack.c.l.s4 1934713408
    %v1089 = vunpack.c.0.s8 %v1088
    %v1090 = vperm.slane %v1084, %v1089
    %v1092 = vunpack.c.l.s4 1934713408
    %v1093 = vunpack.c.0.s8 %v1092
    %v1094 = vperm.slane %v1086, %v1093
    %v1095 = vrot.slane %v1082, 4
    %v1096 = vsel %vm513, %v1095, %v1076
    %v1097 = vrot.slane %v1076, 4
    %v1098 = vsel %vm513, %v1082, %v1097
    %v1100 = vunpack.c.l.s4 1934713408
    %v1101 = vunpack.c.0.s8 %v1100
    %v1102 = vperm.slane %v1096, %v1101
    %v1104 = vunpack.c.l.s4 1934713408
    %v1105 = vunpack.c.0.s8 %v1104
    %v1106 = vperm.slane %v1098, %v1105
    %v1107 = vrot.slane %v1102, 4
    %v1108 = vsel %vm513, %v1107, %v1090
    %v1109 = vrot.slane %v1090, 4
    %v1110 = vsel %vm513, %v1102, %v1109
    %v1111 = vrot.slane %v1106, 4
    %v1112 = vsel %vm513, %v1111, %v1094
    %v1113 = vrot.slane %v1094, 4
    %v1114 = vsel %vm513, %v1106, %v1113
    %v1115 = vpack.c.bf16 %v1054, %v1054
    %v1116 = vpack.c.bf16 %v1108, %v1108
    %v1117 = vpack.c.bf16 %v1056, %v1056
    %v1118 = vpack.c.bf16 %v1110, %v1110
    %v1119 = vpack.c.bf16 %v1058, %v1058
    %v1120 = vpack.c.bf16 %v1112, %v1112
    %v1121 = vpack.c.bf16 %v1060, %v1060
    %v1122 = vpack.c.bf16 %v1114, %v1114
    %v1125 = vunpack.c.l.b16 %v999
    %v1126 = vunpack.c.l.b16 %v1000
    %v1127 = vpack.c.b16 %v1126, %v1125
    %vm1128 = vcmask 64512
    %v1130 = vsel %vm1128, %v887, 0
    %v1133 = vsel %vm1128, %v1127, 0
    %1135 = vmatpush.bf16.xpose.msra.mxu0 0
    %1136 = vmatpush.bf16.xpose.msra.mxu0 0
    %1137 = vmatpush.bf16.xpose.msra.mxu0 0
    %1138 = vmatpush.bf16.xpose.msra.mxu0 0
    %1139 = vmatpush.bf16.xpose.msra.mxu0 0
    %1140 = vmatpush.bf16.xpose.msra.mxu0 0
    %1141 = vmatpush.bf16.xpose.msra.mxu0 0
    %1142 = vmatpush.bf16.xpose.msra.mxu0 %v1133
    %1143 = vmatmul.bf16.gmra.mxu0 %v1130
    %v1144 = vpop.f32.mrf.mxu0
    %v1145 = vadd.f32 0.0, %v1144
    %v1146 = vpop.f32.mrf.mxu0
    %1147 = vdwg.mxu0
    %v1150 = vunpack.c.l.b16 %v1001
    %v1151 = vunpack.c.l.b16 %v1002
    %v1152 = vpack.c.b16 %v1151, %v1150
    %v1154 = vsel %vm1128, %v888, 0
    %v1157 = vsel %vm1128, %v1152, 0
    %1159 = vmatpush.bf16.xpose.msra.mxu0 0
    %1160 = vmatpush.bf16.xpose.msra.mxu0 0
    %1161 = vmatpush.bf16.xpose.msra.mxu0 0
    %1162 = vmatpush.bf16.xpose.msra.mxu0 0
    %1163 = vmatpush.bf16.xpose.msra.mxu0 0
    %1164 = vmatpush.bf16.xpose.msra.mxu0 0
    %1165 = vmatpush.bf16.xpose.msra.mxu0 0
    %1166 = vmatpush.bf16.xpose.msra.mxu0 %v1157
    %1167 = vmatmul.bf16.gmra.mxu0 %v1154
    %v1168 = vpop.f32.mrf.mxu0
    %v1169 = vadd.f32 0.0, %v1168
    %v1170 = vpop.f32.mrf.mxu0
    %1171 = vdwg.mxu0
    %v1174 = vunpack.c.l.b16 %v1003
    %v1175 = vunpack.c.l.b16 %v1004
    %v1176 = vpack.c.b16 %v1175, %v1174
    %v1178 = vsel %vm1128, %v889, 0
    %v1181 = vsel %vm1128, %v1176, 0
    %1183 = vmatpush.bf16.xpose.msra.mxu0 0
    %1184 = vmatpush.bf16.xpose.msra.mxu0 0
    %1185 = vmatpush.bf16.xpose.msra.mxu0 0
    %1186 = vmatpush.bf16.xpose.msra.mxu0 0
    %1187 = vmatpush.bf16.xpose.msra.mxu0 0
    %1188 = vmatpush.bf16.xpose.msra.mxu0 0
    %1189 = vmatpush.bf16.xpose.msra.mxu0 0
    %1190 = vmatpush.bf16.xpose.msra.mxu0 %v1181
    %1191 = vmatmul.bf16.gmra.mxu0 %v1178
    %v1192 = vpop.f32.mrf.mxu0
    %v1193 = vadd.f32 0.0, %v1192
    %v1194 = vpop.f32.mrf.mxu0
    %1195 = vdwg.mxu0
    %v1198 = vunpack.c.l.b16 %v1005
    %v1199 = vunpack.c.l.b16 %v1006
    %v1200 = vpack.c.b16 %v1199, %v1198
    %v1202 = vsel %vm1128, %v890, 0
    %v1205 = vsel %vm1128, %v1200, 0
    %1207 = vmatpush.bf16.xpose.msra.mxu0 0
    %1208 = vmatpush.bf16.xpose.msra.mxu0 0
    %1209 = vmatpush.bf16.xpose.msra.mxu0 0
    %1210 = vmatpush.bf16.xpose.msra.mxu0 0
    %1211 = vmatpush.bf16.xpose.msra.mxu0 0
    %1212 = vmatpush.bf16.xpose.msra.mxu0 0
    %1213 = vmatpush.bf16.xpose.msra.mxu0 0
    %1214 = vmatpush.bf16.xpose.msra.mxu0 %v1205
    %1215 = vmatmul.bf16.gmra.mxu0 %v1202
    %v1216 = vpop.f32.mrf.mxu0
    %v1217 = vadd.f32 0.0, %v1216
    %v1218 = vpop.f32.mrf.mxu0
    %1219 = vdwg.mxu0
    %vm1220 = vcmask 130048
    %v1221 = vsel %vm1220, %v1145, -inf
    %1222 = vmax.xlane.f32.xlu0 %v1221
    %v1223 = vpop.xlane.xlu0 %1222
    %v1224 = vsel %vm1220, %v1169, -inf
    %1225 = vmax.xlane.f32.xlu0 %v1224
    %v1226 = vpop.xlane.xlu0 %1225
    %v1227 = vsel %vm1220, %v1193, -inf
    %1228 = vmax.xlane.f32.xlu0 %v1227
    %v1229 = vpop.xlane.xlu0 %1228
    %v1230 = vsel %vm1220, %v1217, -inf
    %1231 = vmax.xlane.f32.xlu0 %v1230
    %v1232 = vpop.xlane.xlu0 %1231
    %v1233 = vsub.f32 %v1145, %v1223
    %v1234 = vsub.f32 %v1169, %v1226
    %v1235 = vsub.f32 %v1193, %v1229
    %v1236 = vsub.f32 %v1217, %v1232
    %v1237 = vmul.f32 %v1233, 1.442695
    %v1238 = vpow.pop %v1237
    %v1239 = vmul.f32 %v1234, 1.442695
    %v1240 = vpow.pop %v1239
    %v1241 = vmul.f32 %v1235, 1.442695
    %v1242 = vpow.pop %v1241
    %v1243 = vmul.f32 %v1236, 1.442695
    %v1244 = vpow.pop %v1243
    %v1245 = vsel %vm1220, %v1238, 0.0
    %1246 = vadd.xlane.f32.xlu0 %v1245
    %v1247 = vpop.xlane.xlu0 %1246
    %v1248 = vsel %vm1220, %v1240, 0.0
    %1249 = vadd.xlane.f32.xlu0 %v1248
    %v1250 = vpop.xlane.xlu0 %1249
    %v1251 = vsel %vm1220, %v1242, 0.0
    %1252 = vadd.xlane.f32.xlu0 %v1251
    %v1253 = vpop.xlane.xlu0 %1252
    %v1254 = vsel %vm1220, %v1244, 0.0
    %1255 = vadd.xlane.f32.xlu0 %v1254
    %v1256 = vpop.xlane.xlu0 %1255
    %v1257 = vrcp.pop %v1247
    %v1258 = vrcp.pop %v1250
    %v1259 = vrcp.pop %v1253
    %v1260 = vrcp.pop %v1256
    %v1261 = vmul.f32 %v1238, %v1257
    %v1262 = vmul.f32 %v1240, %v1258
    %v1263 = vmul.f32 %v1242, %v1259
    %v1264 = vmul.f32 %v1244, %v1260
    %v1265 = vpack.c.bf16 %v1261, %v1261
    %v1266 = vpack.c.bf16 %v1262, %v1262
    %v1267 = vpack.c.bf16 %v1263, %v1263
    %v1268 = vpack.c.bf16 %v1264, %v1264
    %v1271 = vunpack.c.l.b16 %v1115
    %v1272 = vunpack.c.l.b16 %v1116
    %v1273 = vpack.c.b16 %v1272, %v1271
    %v1276 = vsel %vm1220, %v1265, 0
    %1278 = vmatpush.bf16.msra.mxu0 0
    %1279 = vmatpush.bf16.msra.mxu0 0
    %1280 = vmatpush.bf16.msra.mxu0 0
    %1281 = vmatpush.bf16.msra.mxu0 0
    %1282 = vmatpush.bf16.msra.mxu0 0
    %1283 = vmatpush.bf16.msra.mxu0 0
    %1284 = vmatpush.bf16.msra.mxu0 0
    %1285 = vmatpush.bf16.msra.mxu0 %v1273
    %1286 = vmatmul.bf16.gmra.mxu0 %v1276
    %v1287 = vpop.f32.mrf.mxu0
    %v1288 = vadd.f32 0.0, %v1287
    %v1289 = vpop.f32.mrf.mxu0
    %1290 = vdwg.mxu0
    %v1293 = vunpack.c.l.b16 %v1117
    %v1294 = vunpack.c.l.b16 %v1118
    %v1295 = vpack.c.b16 %v1294, %v1293
    %v1298 = vsel %vm1220, %v1266, 0
    %1300 = vmatpush.bf16.msra.mxu0 0
    %1301 = vmatpush.bf16.msra.mxu0 0
    %1302 = vmatpush.bf16.msra.mxu0 0
    %1303 = vmatpush.bf16.msra.mxu0 0
    %1304 = vmatpush.bf16.msra.mxu0 0
    %1305 = vmatpush.bf16.msra.mxu0 0
    %1306 = vmatpush.bf16.msra.mxu0 0
    %1307 = vmatpush.bf16.msra.mxu0 %v1295
    %1308 = vmatmul.bf16.gmra.mxu0 %v1298
    %v1309 = vpop.f32.mrf.mxu0
    %v1310 = vadd.f32 0.0, %v1309
    %v1311 = vpop.f32.mrf.mxu0
    %1312 = vdwg.mxu0
    %v1315 = vunpack.c.l.b16 %v1119
    %v1316 = vunpack.c.l.b16 %v1120
    %v1317 = vpack.c.b16 %v1316, %v1315
    %v1320 = vsel %vm1220, %v1267, 0
    %1322 = vmatpush.bf16.msra.mxu0 0
    %1323 = vmatpush.bf16.msra.mxu0 0
    %1324 = vmatpush.bf16.msra.mxu0 0
    %1325 = vmatpush.bf16.msra.mxu0 0
    %1326 = vmatpush.bf16.msra.mxu0 0
    %1327 = vmatpush.bf16.msra.mxu0 0
    %1328 = vmatpush.bf16.msra.mxu0 0
    %1329 = vmatpush.bf16.msra.mxu0 %v1317
    %1330 = vmatmul.bf16.gmra.mxu0 %v1320
    %v1331 = vpop.f32.mrf.mxu0
    %v1332 = vadd.f32 0.0, %v1331
    %v1333 = vpop.f32.mrf.mxu0
    %1334 = vdwg.mxu0
    %v1337 = vunpack.c.l.b16 %v1121
    %v1338 = vunpack.c.l.b16 %v1122
    %v1339 = vpack.c.b16 %v1338, %v1337
    %v1342 = vsel %vm1220, %v1268, 0
    %1344 = vmatpush.bf16.msra.mxu0 0
    %1345 = vmatpush.bf16.msra.mxu0 0
    %1346 = vmatpush.bf16.msra.mxu0 0
    %1347 = vmatpush.bf16.msra.mxu0 0
    %1348 = vmatpush.bf16.msra.mxu0 0
    %1349 = vmatpush.bf16.msra.mxu0 0
    %1350 = vmatpush.bf16.msra.mxu0 0
    %1351 = vmatpush.bf16.msra.mxu0 %v1339
    %1352 = vmatmul.bf16.gmra.mxu0 %v1342
    %v1353 = vpop.f32.mrf.mxu0
    %v1354 = vadd.f32 0.0, %v1353
    %v1355 = vpop.f32.mrf.mxu0
    %1356 = vdwg.mxu0
    %v1357 = vrot.slane %v1332, 4
    %v1358 = vsel %vm513, %v1357, %v1288
    %v1359 = vrot.slane %v1288, 4
    %v1360 = vsel %vm513, %v1332, %v1359
    %v1362 = vunpack.c.l.s4 1983009808
    %v1363 = vunpack.c.0.s8 %v1362
    %v1364 = vperm.slane %v1358, %v1363
    %v1366 = vunpack.c.l.s4 1983009808
    %v1367 = vunpack.c.0.s8 %v1366
    %v1368 = vperm.slane %v1360, %v1367
    %v1369 = vrot.slane %v1354, 4
    %v1370 = vsel %vm513, %v1369, %v1310
    %v1371 = vrot.slane %v1310, 4
    %v1372 = vsel %vm513, %v1354, %v1371
    %v1374 = vunpack.c.l.s4 1983009808
    %v1375 = vunpack.c.0.s8 %v1374
    %v1376 = vperm.slane %v1370, %v1375
    %v1378 = vunpack.c.l.s4 1983009808
    %v1379 = vunpack.c.0.s8 %v1378
    %v1380 = vperm.slane %v1372, %v1379
    %v1381 = vrot.slane %v1376, 4
    %v1382 = vsel %vm513, %v1381, %v1364
    %v1383 = vrot.slane %v1364, 4
    %v1384 = vsel %vm513, %v1376, %v1383
    %v1386 = vunpack.c.l.s4 1934713408
    %v1387 = vunpack.c.0.s8 %v1386
    %v1388 = vperm.slane %v1382, %v1387
    %v1390 = vunpack.c.l.s4 1934713408
    %v1391 = vunpack.c.0.s8 %v1390
    %v1392 = vperm.slane %v1384, %v1391
    %v1393 = vrot.slane %v1380, 4
    %v1394 = vsel %vm513, %v1393, %v1368
    %v1395 = vrot.slane %v1368, 4
    %v1396 = vsel %vm513, %v1380, %v1395
    %v1398 = vunpack.c.l.s4 1934713408
    %v1399 = vunpack.c.0.s8 %v1398
    %v1400 = vperm.slane %v1394, %v1399
    %v1402 = vunpack.c.l.s4 1934713408
    %v1403 = vunpack.c.0.s8 %v1402
    %v1404 = vperm.slane %v1396, %v1403
    %v1405 = vrot.slane %v1388, 4
    %v1406 = vsel %vm513, 0.0, %v1405
    %v1407 = vrot.slane %v1392, 4
    %v1408 = vsel %vm513, 0.0, %v1407
    %v1409 = vrot.slane %v1400, 4
    %v1410 = vsel %vm513, 0.0, %v1409
    %v1411 = vrot.slane %v1404, 4
    %v1412 = vsel %vm513, 0.0, %v1411
    %v1413 = vsel %vm513, %v1407, %v1388
    %v1415 = vunpack.c.l.s4 1983009808
    %v1416 = vunpack.c.0.s8 %v1415
    %v1417 = vperm.slane %v1413, %v1416
    %v1418 = vrot.slane %v1408, 4
    %v1419 = vsel %vm513, %v1418, %v1406
    %v1421 = vunpack.c.l.s4 1983009808
    %v1422 = vunpack.c.0.s8 %v1421
    %v1423 = vperm.slane %v1419, %v1422
    %v1424 = vsel %vm513, %v1411, %v1400
    %v1426 = vunpack.c.l.s4 1983009808
    %v1427 = vunpack.c.0.s8 %v1426
    %v1428 = vperm.slane %v1424, %v1427
    %v1429 = vrot.slane %v1412, 4
    %v1430 = vsel %vm513, %v1429, %v1410
    %v1432 = vunpack.c.l.s4 1983009808
    %v1433 = vunpack.c.0.s8 %v1432
    %v1434 = vperm.slane %v1430, %v1433
    %v1435 = vrot.slane %v1423, 4
    %v1436 = vsel %vm513, %v1435, %v1417
    %v1437 = vrot.slane %v1417, 4
    %v1438 = vsel %vm513, %v1423, %v1437
    %v1440 = vunpack.c.l.s4 1934713408
    %v1441 = vunpack.c.0.s8 %v1440
    %v1442 = vperm.slane %v1436, %v1441
    %v1444 = vunpack.c.l.s4 1934713408
    %v1445 = vunpack.c.0.s8 %v1444
    %v1446 = vperm.slane %v1438, %v1445
    %v1447 = vrot.slane %v1434, 4
    %v1448 = vsel %vm513, %v1447, %v1428
    %v1449 = vrot.slane %v1428, 4
    %v1450 = vsel %vm513, %v1434, %v1449
    %v1452 = vunpack.c.l.s4 1934713408
    %v1453 = vunpack.c.0.s8 %v1452
    %v1454 = vperm.slane %v1448, %v1453
    %v1456 = vunpack.c.l.s4 1934713408
    %v1457 = vunpack.c.0.s8 %v1456
    %v1458 = vperm.slane %v1450, %v1457
    %v1459 = vrot.slane %v1454, 4
    %v1460 = vsel %vm513, %v1459, %v1442
    %v1461 = vrot.slane %v1442, 4
    %v1462 = vsel %vm513, %v1454, %v1461
    %v1463 = vrot.slane %v1458, 4
    %v1464 = vsel %vm513, %v1463, %v1446
    %v1465 = vrot.slane %v1446, 4
    %v1466 = vsel %vm513, %v1458, %v1465
    %1468 = vrot.lane.b32.xlu0 %v1462, 8
    %v1469 = vpop.permute.xlu0 %1468
    %1472 = vrot.lane.b32.xlu0 %v1464, 16
    %v1473 = vpop.permute.xlu0 %1472
    %1476 = vrot.lane.b32.xlu0 %v1466, 24
    %v1477 = vpop.permute.xlu0 %1476
    %v1479 = vsel %vm1128, %v1460, %v1469
    %v1480 = vsel %vm1220, %v1479, %v1473
    %vm1481 = vcmask 195584
    %v1482 = vsel %vm1481, %v1480, %v1477
    %1484 = vrot.lane.b32.xlu0 %v344, 120
    %v1485 = vpop.permute.xlu0 %1484
    %1487 = vrot.lane.b32.xlu0 %v344, 112
    %v1488 = vpop.permute.xlu0 %1487
    %1490 = vrot.lane.b32.xlu0 %v344, 104
    %v1491 = vpop.permute.xlu0 %1490
    %v1493 = vrot.slane %v1488, 4
    %v1494 = vsel %vm513, %v1493, %v344
    %v1495 = vrot.slane %v344, 4
    %v1496 = vsel %vm513, %v1488, %v1495
    %v1498 = vunpack.c.l.s4 1983009808
    %v1499 = vunpack.c.0.s8 %v1498
    %v1500 = vperm.slane %v1494, %v1499
    %v1502 = vunpack.c.l.s4 1983009808
    %v1503 = vunpack.c.0.s8 %v1502
    %v1504 = vperm.slane %v1496, %v1503
    %v1505 = vrot.slane %v1491, 4
    %v1506 = vsel %vm513, %v1505, %v1485
    %v1507 = vrot.slane %v1485, 4
    %v1508 = vsel %vm513, %v1491, %v1507
    %v1510 = vunpack.c.l.s4 1983009808
    %v1511 = vunpack.c.0.s8 %v1510
    %v1512 = vperm.slane %v1506, %v1511
    %v1514 = vunpack.c.l.s4 1983009808
    %v1515 = vunpack.c.0.s8 %v1514
    %v1516 = vperm.slane %v1508, %v1515
    %v1517 = vrot.slane %v1512, 4
    %v1518 = vsel %vm513, %v1517, %v1500
    %v1519 = vrot.slane %v1500, 4
    %v1520 = vsel %vm513, %v1512, %v1519
    %v1522 = vunpack.c.l.s4 1934713408
    %v1523 = vunpack.c.0.s8 %v1522
    %v1524 = vperm.slane %v1518, %v1523
    %v1526 = vunpack.c.l.s4 1934713408
    %v1527 = vunpack.c.0.s8 %v1526
    %v1528 = vperm.slane %v1520, %v1527
    %v1529 = vrot.slane %v1516, 4
    %v1530 = vsel %vm513, %v1529, %v1504
    %v1531 = vrot.slane %v1504, 4
    %v1532 = vsel %vm513, %v1516, %v1531
    %v1534 = vunpack.c.l.s4 1934713408
    %v1535 = vunpack.c.0.s8 %v1534
    %v1536 = vperm.slane %v1530, %v1535
    %v1538 = vunpack.c.l.s4 1934713408
    %v1539 = vunpack.c.0.s8 %v1538
    %v1540 = vperm.slane %v1532, %v1539
    %v1541 = vrot.slane %v1524, 4
    %v1542 = vsel %vm513, 0.0, %v1541
    %v1543 = vrot.slane %v1528, 4
    %v1544 = vsel %vm513, 0.0, %v1543
    %v1545 = vrot.slane %v1536, 4
    %v1546 = vsel %vm513, 0.0, %v1545
    %v1547 = vrot.slane %v1540, 4
    %v1548 = vsel %vm513, 0.0, %v1547
    %1551 = vrot.lane.b32.xlu0 %v393, 120
    %v1552 = vpop.permute.xlu0 %1551
    %1553 = vrot.lane.b32.xlu0 %v395, 120
    %v1554 = vpop.permute.xlu0 %1553
    %1557 = vrot.lane.b32.xlu0 %v393, 112
    %v1558 = vpop.permute.xlu0 %1557
    %1559 = vrot.lane.b32.xlu0 %v395, 112
    %v1560 = vpop.permute.xlu0 %1559
    %1563 = vrot.lane.b32.xlu0 %v393, 104
    %v1564 = vpop.permute.xlu0 %1563
    %1565 = vrot.lane.b32.xlu0 %v395, 104
    %v1566 = vpop.permute.xlu0 %1565
    %v1569 = vrot.slane %v1558, 4
    %v1570 = vsel %vm513, %v1569, %v393
    %v1571 = vrot.slane %v393, 4
    %v1572 = vsel %vm513, %v1558, %v1571
    %v1574 = vunpack.c.l.s4 1983009808
    %v1575 = vunpack.c.0.s8 %v1574
    %v1576 = vperm.slane %v1570, %v1575
    %v1578 = vunpack.c.l.s4 1983009808
    %v1579 = vunpack.c.0.s8 %v1578
    %v1580 = vperm.slane %v1572, %v1579
    %v1581 = vrot.slane %v1564, 4
    %v1582 = vsel %vm513, %v1581, %v1552
    %v1583 = vrot.slane %v1552, 4
    %v1584 = vsel %vm513, %v1564, %v1583
    %v1586 = vunpack.c.l.s4 1983009808
    %v1587 = vunpack.c.0.s8 %v1586
    %v1588 = vperm.slane %v1582, %v1587
    %v1590 = vunpack.c.l.s4 1983009808
    %v1591 = vunpack.c.0.s8 %v1590
    %v1592 = vperm.slane %v1584, %v1591
    %v1593 = vrot.slane %v1588, 4
    %v1594 = vsel %vm513, %v1593, %v1576
    %v1595 = vrot.slane %v1576, 4
    %v1596 = vsel %vm513, %v1588, %v1595
    %v1598 = vunpack.c.l.s4 1934713408
    %v1599 = vunpack.c.0.s8 %v1598
    %v1600 = vperm.slane %v1594, %v1599
    %v1602 = vunpack.c.l.s4 1934713408
    %v1603 = vunpack.c.0.s8 %v1602
    %v1604 = vperm.slane %v1596, %v1603
    %v1605 = vrot.slane %v1592, 4
    %v1606 = vsel %vm513, %v1605, %v1580
    %v1607 = vrot.slane %v1580, 4
    %v1608 = vsel %vm513, %v1592, %v1607
    %v1610 = vunpack.c.l.s4 1934713408
    %v1611 = vunpack.c.0.s8 %v1610
    %v1612 = vperm.slane %v1606, %v1611
    %v1614 = vunpack.c.l.s4 1934713408
    %v1615 = vunpack.c.0.s8 %v1614
    %v1616 = vperm.slane %v1608, %v1615
    %v1617 = vrot.slane %v1600, 4
    %v1618 = vsel %vm513, 0.0, %v1617
    %v1619 = vrot.slane %v1604, 4
    %v1620 = vsel %vm513, 0.0, %v1619
    %v1621 = vrot.slane %v1612, 4
    %v1622 = vsel %vm513, 0.0, %v1621
    %v1623 = vrot.slane %v1616, 4
    %v1624 = vsel %vm513, 0.0, %v1623
    %v1625 = vrot.slane %v1560, 4
    %v1626 = vsel %vm513, %v1625, %v395
    %v1627 = vrot.slane %v395, 4
    %v1628 = vsel %vm513, %v1560, %v1627
    %v1630 = vunpack.c.l.s4 1983009808
    %v1631 = vunpack.c.0.s8 %v1630
    %v1632 = vperm.slane %v1626, %v1631
    %v1634 = vunpack.c.l.s4 1983009808
    %v1635 = vunpack.c.0.s8 %v1634
    %v1636 = vperm.slane %v1628, %v1635
    %v1637 = vrot.slane %v1566, 4
    %v1638 = vsel %vm513, %v1637, %v1554
    %v1639 = vrot.slane %v1554, 4
    %v1640 = vsel %vm513, %v1566, %v1639
    %v1642 = vunpack.c.l.s4 1983009808
    %v1643 = vunpack.c.0.s8 %v1642
    %v1644 = vperm.slane %v1638, %v1643
    %v1646 = vunpack.c.l.s4 1983009808
    %v1647 = vunpack.c.0.s8 %v1646
    %v1648 = vperm.slane %v1640, %v1647
    %v1649 = vrot.slane %v1644, 4
    %v1650 = vsel %vm513, %v1649, %v1632
    %v1651 = vrot.slane %v1632, 4
    %v1652 = vsel %vm513, %v1644, %v1651
    %v1654 = vunpack.c.l.s4 1934713408
    %v1655 = vunpack.c.0.s8 %v1654
    %v1656 = vperm.slane %v1650, %v1655
    %v1658 = vunpack.c.l.s4 1934713408
    %v1659 = vunpack.c.0.s8 %v1658
    %v1660 = vperm.slane %v1652, %v1659
    %v1661 = vrot.slane %v1648, 4
    %v1662 = vsel %vm513, %v1661, %v1636
    %v1663 = vrot.slane %v1636, 4
    %v1664 = vsel %vm513, %v1648, %v1663
    %v1666 = vunpack.c.l.s4 1934713408
    %v1667 = vunpack.c.0.s8 %v1666
    %v1668 = vperm.slane %v1662, %v1667
    %v1670 = vunpack.c.l.s4 1934713408
    %v1671 = vunpack.c.0.s8 %v1670
    %v1672 = vperm.slane %v1664, %v1671
    %v1673 = vrot.slane %v1656, 4
    %v1674 = vsel %vm513, 0.0, %v1673
    %v1675 = vrot.slane %v1660, 4
    %v1676 = vsel %vm513, 0.0, %v1675
    %v1677 = vrot.slane %v1668, 4
    %v1678 = vsel %vm513, 0.0, %v1677
    %v1679 = vrot.slane %v1672, 4
    %v1680 = vsel %vm513, 0.0, %v1679
    %1683 = vrot.lane.b32.xlu0 %v440, 120
    %v1684 = vpop.permute.xlu0 %1683
    %1685 = vrot.lane.b32.xlu0 %v442, 120
    %v1686 = vpop.permute.xlu0 %1685
    %1689 = vrot.lane.b32.xlu0 %v440, 112
    %v1690 = vpop.permute.xlu0 %1689
    %1691 = vrot.lane.b32.xlu0 %v442, 112
    %v1692 = vpop.permute.xlu0 %1691
    %1695 = vrot.lane.b32.xlu0 %v440, 104
    %v1696 = vpop.permute.xlu0 %1695
    %1697 = vrot.lane.b32.xlu0 %v442, 104
    %v1698 = vpop.permute.xlu0 %1697
    %v1701 = vrot.slane %v1690, 4
    %v1702 = vsel %vm513, %v1701, %v440
    %v1703 = vrot.slane %v440, 4
    %v1704 = vsel %vm513, %v1690, %v1703
    %v1706 = vunpack.c.l.s4 1983009808
    %v1707 = vunpack.c.0.s8 %v1706
    %v1708 = vperm.slane %v1702, %v1707
    %v1710 = vunpack.c.l.s4 1983009808
    %v1711 = vunpack.c.0.s8 %v1710
    %v1712 = vperm.slane %v1704, %v1711
    %v1713 = vrot.slane %v1696, 4
    %v1714 = vsel %vm513, %v1713, %v1684
    %v1715 = vrot.slane %v1684, 4
    %v1716 = vsel %vm513, %v1696, %v1715
    %v1718 = vunpack.c.l.s4 1983009808
    %v1719 = vunpack.c.0.s8 %v1718
    %v1720 = vperm.slane %v1714, %v1719
    %v1722 = vunpack.c.l.s4 1983009808
    %v1723 = vunpack.c.0.s8 %v1722
    %v1724 = vperm.slane %v1716, %v1723
    %v1725 = vrot.slane %v1720, 4
    %v1726 = vsel %vm513, %v1725, %v1708
    %v1727 = vrot.slane %v1708, 4
    %v1728 = vsel %vm513, %v1720, %v1727
    %v1730 = vunpack.c.l.s4 1934713408
    %v1731 = vunpack.c.0.s8 %v1730
    %v1732 = vperm.slane %v1726, %v1731
    %v1734 = vunpack.c.l.s4 1934713408
    %v1735 = vunpack.c.0.s8 %v1734
    %v1736 = vperm.slane %v1728, %v1735
    %v1737 = vrot.slane %v1724, 4
    %v1738 = vsel %vm513, %v1737, %v1712
    %v1739 = vrot.slane %v1712, 4
    %v1740 = vsel %vm513, %v1724, %v1739
    %v1742 = vunpack.c.l.s4 1934713408
    %v1743 = vunpack.c.0.s8 %v1742
    %v1744 = vperm.slane %v1738, %v1743
    %v1746 = vunpack.c.l.s4 1934713408
    %v1747 = vunpack.c.0.s8 %v1746
    %v1748 = vperm.slane %v1740, %v1747
    %v1749 = vrot.slane %v1732, 4
    %v1750 = vsel %vm513, 0.0, %v1749
    %v1751 = vrot.slane %v1736, 4
    %v1752 = vsel %vm513, 0.0, %v1751
    %v1753 = vrot.slane %v1744, 4
    %v1754 = vsel %vm513, 0.0, %v1753
    %v1755 = vrot.slane %v1748, 4
    %v1756 = vsel %vm513, 0.0, %v1755
    %v1757 = vrot.slane %v1692, 4
    %v1758 = vsel %vm513, %v1757, %v442
    %v1759 = vrot.slane %v442, 4
    %v1760 = vsel %vm513, %v1692, %v1759
    %v1762 = vunpack.c.l.s4 1983009808
    %v1763 = vunpack.c.0.s8 %v1762
    %v1764 = vperm.slane %v1758, %v1763
    %v1766 = vunpack.c.l.s4 1983009808
    %v1767 = vunpack.c.0.s8 %v1766
    %v1768 = vperm.slane %v1760, %v1767
    %v1769 = vrot.slane %v1698, 4
    %v1770 = vsel %vm513, %v1769, %v1686
    %v1771 = vrot.slane %v1686, 4
    %v1772 = vsel %vm513, %v1698, %v1771
    %v1774 = vunpack.c.l.s4 1983009808
    %v1775 = vunpack.c.0.s8 %v1774
    %v1776 = vperm.slane %v1770, %v1775
    %v1778 = vunpack.c.l.s4 1983009808
    %v1779 = vunpack.c.0.s8 %v1778
    %v1780 = vperm.slane %v1772, %v1779
    %v1781 = vrot.slane %v1776, 4
    %v1782 = vsel %vm513, %v1781, %v1764
    %v1783 = vrot.slane %v1764, 4
    %v1784 = vsel %vm513, %v1776, %v1783
    %v1786 = vunpack.c.l.s4 1934713408
    %v1787 = vunpack.c.0.s8 %v1786
    %v1788 = vperm.slane %v1782, %v1787
    %v1790 = vunpack.c.l.s4 1934713408
    %v1791 = vunpack.c.0.s8 %v1790
    %v1792 = vperm.slane %v1784, %v1791
    %v1793 = vrot.slane %v1780, 4
    %v1794 = vsel %vm513, %v1793, %v1768
    %v1795 = vrot.slane %v1768, 4
    %v1796 = vsel %vm513, %v1780, %v1795
    %v1798 = vunpack.c.l.s4 1934713408
    %v1799 = vunpack.c.0.s8 %v1798
    %v1800 = vperm.slane %v1794, %v1799
    %v1802 = vunpack.c.l.s4 1934713408
    %v1803 = vunpack.c.0.s8 %v1802
    %v1804 = vperm.slane %v1796, %v1803
    %v1805 = vrot.slane %v1788, 4
    %v1806 = vsel %vm513, 0.0, %v1805
    %v1807 = vrot.slane %v1792, 4
    %v1808 = vsel %vm513, 0.0, %v1807
    %v1809 = vrot.slane %v1800, 4
    %v1810 = vsel %vm513, 0.0, %v1809
    %v1811 = vrot.slane %v1804, 4
    %v1812 = vsel %vm513, 0.0, %v1811
    %v1813 = vsel %vm513, %v1543, %v1524
    %v1815 = vunpack.c.l.s4 1983009808
    %v1816 = vunpack.c.0.s8 %v1815
    %v1817 = vperm.slane %v1813, %v1816
    %v1818 = vrot.slane %v1544, 4
    %v1819 = vsel %vm513, %v1818, %v1542
    %v1821 = vunpack.c.l.s4 1983009808
    %v1822 = vunpack.c.0.s8 %v1821
    %v1823 = vperm.slane %v1819, %v1822
    %v1824 = vsel %vm513, %v1547, %v1536
    %v1826 = vunpack.c.l.s4 1983009808
    %v1827 = vunpack.c.0.s8 %v1826
    %v1828 = vperm.slane %v1824, %v1827
    %v1829 = vrot.slane %v1548, 4
    %v1830 = vsel %vm513, %v1829, %v1546
    %v1832 = vunpack.c.l.s4 1983009808
    %v1833 = vunpack.c.0.s8 %v1832
    %v1834 = vperm.slane %v1830, %v1833
    %v1835 = vrot.slane %v1823, 4
    %v1836 = vsel %vm513, %v1835, %v1817
    %v1837 = vrot.slane %v1817, 4
    %v1838 = vsel %vm513, %v1823, %v1837
    %v1840 = vunpack.c.l.s4 1934713408
    %v1841 = vunpack.c.0.s8 %v1840
    %v1842 = vperm.slane %v1836, %v1841
    %v1844 = vunpack.c.l.s4 1934713408
    %v1845 = vunpack.c.0.s8 %v1844
    %v1846 = vperm.slane %v1838, %v1845
    %v1847 = vrot.slane %v1834, 4
    %v1848 = vsel %vm513, %v1847, %v1828
    %v1849 = vrot.slane %v1828, 4
    %v1850 = vsel %vm513, %v1834, %v1849
    %v1852 = vunpack.c.l.s4 1934713408
    %v1853 = vunpack.c.0.s8 %v1852
    %v1854 = vperm.slane %v1848, %v1853
    %v1856 = vunpack.c.l.s4 1934713408
    %v1857 = vunpack.c.0.s8 %v1856
    %v1858 = vperm.slane %v1850, %v1857
    %v1859 = vrot.slane %v1854, 4
    %v1860 = vsel %vm513, %v1859, %v1842
    %v1861 = vrot.slane %v1842, 4
    %v1862 = vsel %vm513, %v1854, %v1861
    %v1863 = vrot.slane %v1858, 4
    %v1864 = vsel %vm513, %v1863, %v1846
    %v1865 = vrot.slane %v1846, 4
    %v1866 = vsel %vm513, %v1858, %v1865
    %v1867 = vpack.c.bf16 %v1860, %v1860
    %v1868 = vpack.c.bf16 %v1862, %v1862
    %v1869 = vpack.c.bf16 %v1864, %v1864
    %v1870 = vpack.c.bf16 %v1866, %v1866
    %v1871 = vsel %vm513, %v1619, %v1600
    %v1873 = vunpack.c.l.s4 1983009808
    %v1874 = vunpack.c.0.s8 %v1873
    %v1875 = vperm.slane %v1871, %v1874
    %v1876 = vrot.slane %v1620, 4
    %v1877 = vsel %vm513, %v1876, %v1618
    %v1879 = vunpack.c.l.s4 1983009808
    %v1880 = vunpack.c.0.s8 %v1879
    %v1881 = vperm.slane %v1877, %v1880
    %v1882 = vsel %vm513, %v1623, %v1612
    %v1884 = vunpack.c.l.s4 1983009808
    %v1885 = vunpack.c.0.s8 %v1884
    %v1886 = vperm.slane %v1882, %v1885
    %v1887 = vrot.slane %v1624, 4
    %v1888 = vsel %vm513, %v1887, %v1622
    %v1890 = vunpack.c.l.s4 1983009808
    %v1891 = vunpack.c.0.s8 %v1890
    %v1892 = vperm.slane %v1888, %v1891
    %v1893 = vrot.slane %v1881, 4
    %v1894 = vsel %vm513, %v1893, %v1875
    %v1895 = vrot.slane %v1875, 4
    %v1896 = vsel %vm513, %v1881, %v1895
    %v1898 = vunpack.c.l.s4 1934713408
    %v1899 = vunpack.c.0.s8 %v1898
    %v1900 = vperm.slane %v1894, %v1899
    %v1902 = vunpack.c.l.s4 1934713408
    %v1903 = vunpack.c.0.s8 %v1902
    %v1904 = vperm.slane %v1896, %v1903
    %v1905 = vrot.slane %v1892, 4
    %v1906 = vsel %vm513, %v1905, %v1886
    %v1907 = vrot.slane %v1886, 4
    %v1908 = vsel %vm513, %v1892, %v1907
    %v1910 = vunpack.c.l.s4 1934713408
    %v1911 = vunpack.c.0.s8 %v1910
    %v1912 = vperm.slane %v1906, %v1911
    %v1914 = vunpack.c.l.s4 1934713408
    %v1915 = vunpack.c.0.s8 %v1914
    %v1916 = vperm.slane %v1908, %v1915
    %v1917 = vrot.slane %v1912, 4
    %v1918 = vsel %vm513, %v1917, %v1900
    %v1919 = vrot.slane %v1900, 4
    %v1920 = vsel %vm513, %v1912, %v1919
    %v1921 = vrot.slane %v1916, 4
    %v1922 = vsel %vm513, %v1921, %v1904
    %v1923 = vrot.slane %v1904, 4
    %v1924 = vsel %vm513, %v1916, %v1923
    %v1925 = vsel %vm513, %v1675, %v1656
    %v1927 = vunpack.c.l.s4 1983009808
    %v1928 = vunpack.c.0.s8 %v1927
    %v1929 = vperm.slane %v1925, %v1928
    %v1930 = vrot.slane %v1676, 4
    %v1931 = vsel %vm513, %v1930, %v1674
    %v1933 = vunpack.c.l.s4 1983009808
    %v1934 = vunpack.c.0.s8 %v1933
    %v1935 = vperm.slane %v1931, %v1934
    %v1936 = vsel %vm513, %v1679, %v1668
    %v1938 = vunpack.c.l.s4 1983009808
    %v1939 = vunpack.c.0.s8 %v1938
    %v1940 = vperm.slane %v1936, %v1939
    %v1941 = vrot.slane %v1680, 4
    %v1942 = vsel %vm513, %v1941, %v1678
    %v1944 = vunpack.c.l.s4 1983009808
    %v1945 = vunpack.c.0.s8 %v1944
    %v1946 = vperm.slane %v1942, %v1945
    %v1947 = vrot.slane %v1935, 4
    %v1948 = vsel %vm513, %v1947, %v1929
    %v1949 = vrot.slane %v1929, 4
    %v1950 = vsel %vm513, %v1935, %v1949
    %v1952 = vunpack.c.l.s4 1934713408
    %v1953 = vunpack.c.0.s8 %v1952
    %v1954 = vperm.slane %v1948, %v1953
    %v1956 = vunpack.c.l.s4 1934713408
    %v1957 = vunpack.c.0.s8 %v1956
    %v1958 = vperm.slane %v1950, %v1957
    %v1959 = vrot.slane %v1946, 4
    %v1960 = vsel %vm513, %v1959, %v1940
    %v1961 = vrot.slane %v1940, 4
    %v1962 = vsel %vm513, %v1946, %v1961
    %v1964 = vunpack.c.l.s4 1934713408
    %v1965 = vunpack.c.0.s8 %v1964
    %v1966 = vperm.slane %v1960, %v1965
    %v1968 = vunpack.c.l.s4 1934713408
    %v1969 = vunpack.c.0.s8 %v1968
    %v1970 = vperm.slane %v1962, %v1969
    %v1971 = vrot.slane %v1966, 4
    %v1972 = vsel %vm513, %v1971, %v1954
    %v1973 = vrot.slane %v1954, 4
    %v1974 = vsel %vm513, %v1966, %v1973
    %v1975 = vrot.slane %v1970, 4
    %v1976 = vsel %vm513, %v1975, %v1958
    %v1977 = vrot.slane %v1958, 4
    %v1978 = vsel %vm513, %v1970, %v1977
    %v1979 = vpack.c.bf16 %v1918, %v1918
    %v1980 = vpack.c.bf16 %v1972, %v1972
    %v1981 = vpack.c.bf16 %v1920, %v1920
    %v1982 = vpack.c.bf16 %v1974, %v1974
    %v1983 = vpack.c.bf16 %v1922, %v1922
    %v1984 = vpack.c.bf16 %v1976, %v1976
    %v1985 = vpack.c.bf16 %v1924, %v1924
    %v1986 = vpack.c.bf16 %v1978, %v1978
    %v1987 = vsel %vm513, %v1751, %v1732
    %v1989 = vunpack.c.l.s4 1983009808
    %v1990 = vunpack.c.0.s8 %v1989
    %v1991 = vperm.slane %v1987, %v1990
    %v1992 = vrot.slane %v1752, 4
    %v1993 = vsel %vm513, %v1992, %v1750
    %v1995 = vunpack.c.l.s4 1983009808
    %v1996 = vunpack.c.0.s8 %v1995
    %v1997 = vperm.slane %v1993, %v1996
    %v1998 = vsel %vm513, %v1755, %v1744
    %v2000 = vunpack.c.l.s4 1983009808
    %v2001 = vunpack.c.0.s8 %v2000
    %v2002 = vperm.slane %v1998, %v2001
    %v2003 = vrot.slane %v1756, 4
    %v2004 = vsel %vm513, %v2003, %v1754
    %v2006 = vunpack.c.l.s4 1983009808
    %v2007 = vunpack.c.0.s8 %v2006
    %v2008 = vperm.slane %v2004, %v2007
    %v2009 = vrot.slane %v1997, 4
    %v2010 = vsel %vm513, %v2009, %v1991
    %v2011 = vrot.slane %v1991, 4
    %v2012 = vsel %vm513, %v1997, %v2011
    %v2014 = vunpack.c.l.s4 1934713408
    %v2015 = vunpack.c.0.s8 %v2014
    %v2016 = vperm.slane %v2010, %v2015
    %v2018 = vunpack.c.l.s4 1934713408
    %v2019 = vunpack.c.0.s8 %v2018
    %v2020 = vperm.slane %v2012, %v2019
    %v2021 = vrot.slane %v2008, 4
    %v2022 = vsel %vm513, %v2021, %v2002
    %v2023 = vrot.slane %v2002, 4
    %v2024 = vsel %vm513, %v2008, %v2023
    %v2026 = vunpack.c.l.s4 1934713408
    %v2027 = vunpack.c.0.s8 %v2026
    %v2028 = vperm.slane %v2022, %v2027
    %v2030 = vunpack.c.l.s4 1934713408
    %v2031 = vunpack.c.0.s8 %v2030
    %v2032 = vperm.slane %v2024, %v2031
    %v2033 = vrot.slane %v2028, 4
    %v2034 = vsel %vm513, %v2033, %v2016
    %v2035 = vrot.slane %v2016, 4
    %v2036 = vsel %vm513, %v2028, %v2035
    %v2037 = vrot.slane %v2032, 4
    %v2038 = vsel %vm513, %v2037, %v2020
    %v2039 = vrot.slane %v2020, 4
    %v2040 = vsel %vm513, %v2032, %v2039
    %v2041 = vsel %vm513, %v1807, %v1788
    %v2043 = vunpack.c.l.s4 1983009808
    %v2044 = vunpack.c.0.s8 %v2043
    %v2045 = vperm.slane %v2041, %v2044
    %v2046 = vrot.slane %v1808, 4
    %v2047 = vsel %vm513, %v2046, %v1806
    %v2049 = vunpack.c.l.s4 1983009808
    %v2050 = vunpack.c.0.s8 %v2049
    %v2051 = vperm.slane %v2047, %v2050
    %v2052 = vsel %vm513, %v1811, %v1800
    %v2054 = vunpack.c.l.s4 1983009808
    %v2055 = vunpack.c.0.s8 %v2054
    %v2056 = vperm.slane %v2052, %v2055
    %v2057 = vrot.slane %v1812, 4
    %v2058 = vsel %vm513, %v2057, %v1810
    %v2060 = vunpack.c.l.s4 1983009808
    %v2061 = vunpack.c.0.s8 %v2060
    %v2062 = vperm.slane %v2058, %v2061
    %v2063 = vrot.slane %v2051, 4
    %v2064 = vsel %vm513, %v2063, %v2045
    %v2065 = vrot.slane %v2045, 4
    %v2066 = vsel %vm513, %v2051, %v2065
    %v2068 = vunpack.c.l.s4 1934713408
    %v2069 = vunpack.c.0.s8 %v2068
    %v2070 = vperm.slane %v2064, %v2069
    %v2072 = vunpack.c.l.s4 1934713408
    %v2073 = vunpack.c.0.s8 %v2072
    %v2074 = vperm.slane %v2066, %v2073
    %v2075 = vrot.slane %v2062, 4
    %v2076 = vsel %vm513, %v2075, %v2056
    %v2077 = vrot.slane %v2056, 4
    %v2078 = vsel %vm513, %v2062, %v2077
    %v2080 = vunpack.c.l.s4 1934713408
    %v2081 = vunpack.c.0.s8 %v2080
    %v2082 = vperm.slane %v2076, %v2081
    %v2084 = vunpack.c.l.s4 1934713408
    %v2085 = vunpack.c.0.s8 %v2084
    %v2086 = vperm.slane %v2078, %v2085
    %v2087 = vrot.slane %v2082, 4
    %v2088 = vsel %vm513, %v2087, %v2070
    %v2089 = vrot.slane %v2070, 4
    %v2090 = vsel %vm513, %v2082, %v2089
    %v2091 = vrot.slane %v2086, 4
    %v2092 = vsel %vm513, %v2091, %v2074
    %v2093 = vrot.slane %v2074, 4
    %v2094 = vsel %vm513, %v2086, %v2093
    %v2095 = vpack.c.bf16 %v2034, %v2034
    %v2096 = vpack.c.bf16 %v2088, %v2088
    %v2097 = vpack.c.bf16 %v2036, %v2036
    %v2098 = vpack.c.bf16 %v2090, %v2090
    %v2099 = vpack.c.bf16 %v2038, %v2038
    %v2100 = vpack.c.bf16 %v2092, %v2092
    %v2101 = vpack.c.bf16 %v2040, %v2040
    %v2102 = vpack.c.bf16 %v2094, %v2094
    %v2105 = vunpack.c.l.b16 %v1979
    %v2106 = vunpack.c.l.b16 %v1980
    %v2107 = vpack.c.b16 %v2106, %v2105
    %v2109 = vsel %vm1128, %v1867, 0
    %v2112 = vsel %vm1128, %v2107, 0
    %2114 = vmatpush.bf16.xpose.msra.mxu0 0
    %2115 = vmatpush.bf16.xpose.msra.mxu0 0
    %2116 = vmatpush.bf16.xpose.msra.mxu0 0
    %2117 = vmatpush.bf16.xpose.msra.mxu0 0
    %2118 = vmatpush.bf16.xpose.msra.mxu0 0
    %2119 = vmatpush.bf16.xpose.msra.mxu0 0
    %2120 = vmatpush.bf16.xpose.msra.mxu0 0
    %2121 = vmatpush.bf16.xpose.msra.mxu0 %v2112
    %2122 = vmatmul.bf16.gmra.mxu0 %v2109
    %v2123 = vpop.f32.mrf.mxu0
    %v2124 = vadd.f32 0.0, %v2123
    %v2125 = vpop.f32.mrf.mxu0
    %2126 = vdwg.mxu0
    %v2129 = vunpack.c.l.b16 %v1981
    %v2130 = vunpack.c.l.b16 %v1982
    %v2131 = vpack.c.b16 %v2130, %v2129
    %v2133 = vsel %vm1128, %v1868, 0
    %v2136 = vsel %vm1128, %v2131, 0
    %2138 = vmatpush.bf16.xpose.msra.mxu0 0
    %2139 = vmatpush.bf16.xpose.msra.mxu0 0
    %2140 = vmatpush.bf16.xpose.msra.mxu0 0
    %2141 = vmatpush.bf16.xpose.msra.mxu0 0
    %2142 = vmatpush.bf16.xpose.msra.mxu0 0
    %2143 = vmatpush.bf16.xpose.msra.mxu0 0
    %2144 = vmatpush.bf16.xpose.msra.mxu0 0
    %2145 = vmatpush.bf16.xpose.msra.mxu0 %v2136
    %2146 = vmatmul.bf16.gmra.mxu0 %v2133
    %v2147 = vpop.f32.mrf.mxu0
    %v2148 = vadd.f32 0.0, %v2147
    %v2149 = vpop.f32.mrf.mxu0
    %2150 = vdwg.mxu0
    %v2153 = vunpack.c.l.b16 %v1983
    %v2154 = vunpack.c.l.b16 %v1984
    %v2155 = vpack.c.b16 %v2154, %v2153
    %v2157 = vsel %vm1128, %v1869, 0
    %v2160 = vsel %vm1128, %v2155, 0
    %2162 = vmatpush.bf16.xpose.msra.mxu0 0
    %2163 = vmatpush.bf16.xpose.msra.mxu0 0
    %2164 = vmatpush.bf16.xpose.msra.mxu0 0
    %2165 = vmatpush.bf16.xpose.msra.mxu0 0
    %2166 = vmatpush.bf16.xpose.msra.mxu0 0
    %2167 = vmatpush.bf16.xpose.msra.mxu0 0
    %2168 = vmatpush.bf16.xpose.msra.mxu0 0
    %2169 = vmatpush.bf16.xpose.msra.mxu0 %v2160
    %2170 = vmatmul.bf16.gmra.mxu0 %v2157
    %v2171 = vpop.f32.mrf.mxu0
    %v2172 = vadd.f32 0.0, %v2171
    %v2173 = vpop.f32.mrf.mxu0
    %2174 = vdwg.mxu0
    %v2177 = vunpack.c.l.b16 %v1985
    %v2178 = vunpack.c.l.b16 %v1986
    %v2179 = vpack.c.b16 %v2178, %v2177
    %v2181 = vsel %vm1128, %v1870, 0
    %v2184 = vsel %vm1128, %v2179, 0
    %2186 = vmatpush.bf16.xpose.msra.mxu0 0
    %2187 = vmatpush.bf16.xpose.msra.mxu0 0
    %2188 = vmatpush.bf16.xpose.msra.mxu0 0
    %2189 = vmatpush.bf16.xpose.msra.mxu0 0
    %2190 = vmatpush.bf16.xpose.msra.mxu0 0
    %2191 = vmatpush.bf16.xpose.msra.mxu0 0
    %2192 = vmatpush.bf16.xpose.msra.mxu0 0
    %2193 = vmatpush.bf16.xpose.msra.mxu0 %v2184
    %2194 = vmatmul.bf16.gmra.mxu0 %v2181
    %v2195 = vpop.f32.mrf.mxu0
    %v2196 = vadd.f32 0.0, %v2195
    %v2197 = vpop.f32.mrf.mxu0
    %2198 = vdwg.mxu0
    %v2199 = vsel %vm1220, %v2124, -inf
    %2200 = vmax.xlane.f32.xlu0 %v2199
    %v2201 = vpop.xlane.xlu0 %2200
    %v2202 = vsel %vm1220, %v2148, -inf
    %2203 = vmax.xlane.f32.xlu0 %v2202
    %v2204 = vpop.xlane.xlu0 %2203
    %v2205 = vsel %vm1220, %v2172, -inf
    %2206 = vmax.xlane.f32.xlu0 %v2205
    %v2207 = vpop.xlane.xlu0 %2206
    %v2208 = vsel %vm1220, %v2196, -inf
    %2209 = vmax.xlane.f32.xlu0 %v2208
    %v2210 = vpop.xlane.xlu0 %2209
    %v2211 = vsub.f32 %v2124, %v2201
    %v2212 = vsub.f32 %v2148, %v2204
    %v2213 = vsub.f32 %v2172, %v2207
    %v2214 = vsub.f32 %v2196, %v2210
    %v2215 = vmul.f32 %v2211, 1.442695
    %v2216 = vpow.pop %v2215
    %v2217 = vmul.f32 %v2212, 1.442695
    %v2218 = vpow.pop %v2217
    %v2219 = vmul.f32 %v2213, 1.442695
    %v2220 = vpow.pop %v2219
    %v2221 = vmul.f32 %v2214, 1.442695
    %v2222 = vpow.pop %v2221
    %v2223 = vsel %vm1220, %v2216, 0.0
    %2224 = vadd.xlane.f32.xlu0 %v2223
    %v2225 = vpop.xlane.xlu0 %2224
    %v2226 = vsel %vm1220, %v2218, 0.0
    %2227 = vadd.xlane.f32.xlu0 %v2226
    %v2228 = vpop.xlane.xlu0 %2227
    %v2229 = vsel %vm1220, %v2220, 0.0
    %2230 = vadd.xlane.f32.xlu0 %v2229
    %v2231 = vpop.xlane.xlu0 %2230
    %v2232 = vsel %vm1220, %v2222, 0.0
    %2233 = vadd.xlane.f32.xlu0 %v2232
    %v2234 = vpop.xlane.xlu0 %2233
    %v2235 = vrcp.pop %v2225
    %v2236 = vrcp.pop %v2228
    %v2237 = vrcp.pop %v2231
    %v2238 = vrcp.pop %v2234
    %v2239 = vmul.f32 %v2216, %v2235
    %v2240 = vmul.f32 %v2218, %v2236
    %v2241 = vmul.f32 %v2220, %v2237
    %v2242 = vmul.f32 %v2222, %v2238
    %v2243 = vpack.c.bf16 %v2239, %v2239
    %v2244 = vpack.c.bf16 %v2240, %v2240
    %v2245 = vpack.c.bf16 %v2241, %v2241
    %v2246 = vpack.c.bf16 %v2242, %v2242
    %v2249 = vunpack.c.l.b16 %v2095
    %v2250 = vunpack.c.l.b16 %v2096
    %v2251 = vpack.c.b16 %v2250, %v2249
    %v2254 = vsel %vm1220, %v2243, 0
    %2256 = vmatpush.bf16.msra.mxu0 0
    %2257 = vmatpush.bf16.msra.mxu0 0
    %2258 = vmatpush.bf16.msra.mxu0 0
    %2259 = vmatpush.bf16.msra.mxu0 0
    %2260 = vmatpush.bf16.msra.mxu0 0
    %2261 = vmatpush.bf16.msra.mxu0 0
    %2262 = vmatpush.bf16.msra.mxu0 0
    %2263 = vmatpush.bf16.msra.mxu0 %v2251
    %2264 = vmatmul.bf16.gmra.mxu0 %v2254
    %v2265 = vpop.f32.mrf.mxu0
    %v2266 = vadd.f32 0.0, %v2265
    %v2267 = vpop.f32.mrf.mxu0
    %2268 = vdwg.mxu0
    %v2271 = vunpack.c.l.b16 %v2097
    %v2272 = vunpack.c.l.b16 %v2098
    %v2273 = vpack.c.b16 %v2272, %v2271
    %v2276 = vsel %vm1220, %v2244, 0
    %2278 = vmatpush.bf16.msra.mxu0 0
    %2279 = vmatpush.bf16.msra.mxu0 0
    %2280 = vmatpush.bf16.msra.mxu0 0
    %2281 = vmatpush.bf16.msra.mxu0 0
    %2282 = vmatpush.bf16.msra.mxu0 0
    %2283 = vmatpush.bf16.msra.mxu0 0
    %2284 = vmatpush.bf16.msra.mxu0 0
    %2285 = vmatpush.bf16.msra.mxu0 %v2273
    %2286 = vmatmul.bf16.gmra.mxu0 %v2276
    %v2287 = vpop.f32.mrf.mxu0
    %v2288 = vadd.f32 0.0, %v2287
    %v2289 = vpop.f32.mrf.mxu0
    %2290 = vdwg.mxu0
    %v2293 = vunpack.c.l.b16 %v2099
    %v2294 = vunpack.c.l.b16 %v2100
    %v2295 = vpack.c.b16 %v2294, %v2293
    %v2298 = vsel %vm1220, %v2245, 0
    %2300 = vmatpush.bf16.msra.mxu0 0
    %2301 = vmatpush.bf16.msra.mxu0 0
    %2302 = vmatpush.bf16.msra.mxu0 0
    %2303 = vmatpush.bf16.msra.mxu0 0
    %2304 = vmatpush.bf16.msra.mxu0 0
    %2305 = vmatpush.bf16.msra.mxu0 0
    %2306 = vmatpush.bf16.msra.mxu0 0
    %2307 = vmatpush.bf16.msra.mxu0 %v2295
    %2308 = vmatmul.bf16.gmra.mxu0 %v2298
    %v2309 = vpop.f32.mrf.mxu0
    %v2310 = vadd.f32 0.0, %v2309
    %v2311 = vpop.f32.mrf.mxu0
    %2312 = vdwg.mxu0
    %v2315 = vunpack.c.l.b16 %v2101
    %v2316 = vunpack.c.l.b16 %v2102
    %v2317 = vpack.c.b16 %v2316, %v2315
    %v2320 = vsel %vm1220, %v2246, 0
    %2322 = vmatpush.bf16.msra.mxu0 0
    %2323 = vmatpush.bf16.msra.mxu0 0
    %2324 = vmatpush.bf16.msra.mxu0 0
    %2325 = vmatpush.bf16.msra.mxu0 0
    %2326 = vmatpush.bf16.msra.mxu0 0
    %2327 = vmatpush.bf16.msra.mxu0 0
    %2328 = vmatpush.bf16.msra.mxu0 0
    %2329 = vmatpush.bf16.msra.mxu0 %v2317
    %2330 = vmatmul.bf16.gmra.mxu0 %v2320
    %v2331 = vpop.f32.mrf.mxu0
    %v2332 = vadd.f32 0.0, %v2331
    %v2333 = vpop.f32.mrf.mxu0
    %2334 = vdwg.mxu0
    %v2335 = vrot.slane %v2310, 4
    %v2336 = vsel %vm513, %v2335, %v2266
    %v2337 = vrot.slane %v2266, 4
    %v2338 = vsel %vm513, %v2310, %v2337
    %v2340 = vunpack.c.l.s4 1983009808
    %v2341 = vunpack.c.0.s8 %v2340
    %v2342 = vperm.slane %v2336, %v2341
    %v2344 = vunpack.c.l.s4 1983009808
    %v2345 = vunpack.c.0.s8 %v2344
    %v2346 = vperm.slane %v2338, %v2345
    %v2347 = vrot.slane %v2332, 4
    %v2348 = vsel %vm513, %v2347, %v2288
    %v2349 = vrot.slane %v2288, 4
    %v2350 = vsel %vm513, %v2332, %v2349
    %v2352 = vunpack.c.l.s4 1983009808
    %v2353 = vunpack.c.0.s8 %v2352
    %v2354 = vperm.slane %v2348, %v2353
    %v2356 = vunpack.c.l.s4 1983009808
    %v2357 = vunpack.c.0.s8 %v2356
    %v2358 = vperm.slane %v2350, %v2357
    %v2359 = vrot.slane %v2354, 4
    %v2360 = vsel %vm513, %v2359, %v2342
    %v2361 = vrot.slane %v2342, 4
    %v2362 = vsel %vm513, %v2354, %v2361
    %v2364 = vunpack.c.l.s4 1934713408
    %v2365 = vunpack.c.0.s8 %v2364
    %v2366 = vperm.slane %v2360, %v2365
    %v2368 = vunpack.c.l.s4 1934713408
    %v2369 = vunpack.c.0.s8 %v2368
    %v2370 = vperm.slane %v2362, %v2369
    %v2371 = vrot.slane %v2358, 4
    %v2372 = vsel %vm513, %v2371, %v2346
    %v2373 = vrot.slane %v2346, 4
    %v2374 = vsel %vm513, %v2358, %v2373
    %v2376 = vunpack.c.l.s4 1934713408
    %v2377 = vunpack.c.0.s8 %v2376
    %v2378 = vperm.slane %v2372, %v2377
    %v2380 = vunpack.c.l.s4 1934713408
    %v2381 = vunpack.c.0.s8 %v2380
    %v2382 = vperm.slane %v2374, %v2381
    %v2383 = vrot.slane %v2366, 4
    %v2384 = vsel %vm513, 0.0, %v2383
    %v2385 = vrot.slane %v2370, 4
    %v2386 = vsel %vm513, 0.0, %v2385
    %v2387 = vrot.slane %v2378, 4
    %v2388 = vsel %vm513, 0.0, %v2387
    %v2389 = vrot.slane %v2382, 4
    %v2390 = vsel %vm513, 0.0, %v2389
    %v2391 = vsel %vm513, %v2385, %v2366
    %v2393 = vunpack.c.l.s4 1983009808
    %v2394 = vunpack.c.0.s8 %v2393
    %v2395 = vperm.slane %v2391, %v2394
    %v2396 = vrot.slane %v2386, 4
    %v2397 = vsel %vm513, %v2396, %v2384
    %v2399 = vunpack.c.l.s4 1983009808
    %v2400 = vunpack.c.0.s8 %v2399
    %v2401 = vperm.slane %v2397, %v2400
    %v2402 = vsel %vm513, %v2389, %v2378
    %v2404 = vunpack.c.l.s4 1983009808
    %v2405 = vunpack.c.0.s8 %v2404
    %v2406 = vperm.slane %v2402, %v2405
    %v2407 = vrot.slane %v2390, 4
    %v2408 = vsel %vm513, %v2407, %v2388
    %v2410 = vunpack.c.l.s4 1983009808
    %v2411 = vunpack.c.0.s8 %v2410
    %v2412 = vperm.slane %v2408, %v2411
    %v2413 = vrot.slane %v2401, 4
    %v2414 = vsel %vm513, %v2413, %v2395
    %v2415 = vrot.slane %v2395, 4
    %v2416 = vsel %vm513, %v2401, %v2415
    %v2418 = vunpack.c.l.s4 1934713408
    %v2419 = vunpack.c.0.s8 %v2418
    %v2420 = vperm.slane %v2414, %v2419
    %v2422 = vunpack.c.l.s4 1934713408
    %v2423 = vunpack.c.0.s8 %v2422
    %v2424 = vperm.slane %v2416, %v2423
    %v2425 = vrot.slane %v2412, 4
    %v2426 = vsel %vm513, %v2425, %v2406
    %v2427 = vrot.slane %v2406, 4
    %v2428 = vsel %vm513, %v2412, %v2427
    %v2430 = vunpack.c.l.s4 1934713408
    %v2431 = vunpack.c.0.s8 %v2430
    %v2432 = vperm.slane %v2426, %v2431
    %v2434 = vunpack.c.l.s4 1934713408
    %v2435 = vunpack.c.0.s8 %v2434
    %v2436 = vperm.slane %v2428, %v2435
    %v2437 = vrot.slane %v2432, 4
    %v2438 = vsel %vm513, %v2437, %v2420
    %v2439 = vrot.slane %v2420, 4
    %v2440 = vsel %vm513, %v2432, %v2439
    %v2441 = vrot.slane %v2436, 4
    %v2442 = vsel %vm513, %v2441, %v2424
    %v2443 = vrot.slane %v2424, 4
    %v2444 = vsel %vm513, %v2436, %v2443
    %2446 = vrot.lane.b32.xlu0 %v2440, 8
    %v2447 = vpop.permute.xlu0 %2446
    %2450 = vrot.lane.b32.xlu0 %v2442, 16
    %v2451 = vpop.permute.xlu0 %2450
    %2454 = vrot.lane.b32.xlu0 %v2444, 24
    %v2455 = vpop.permute.xlu0 %2454
    %v2457 = vsel %vm1128, %v2438, %v2447
    %v2458 = vsel %vm1220, %v2457, %v2451
    %v2459 = vsel %vm1481, %v2458, %v2455
    %v2460 = vpack.c.bf16 %v2459, %v1482
    %v2461 = vld [vmem:[#allocation17] sm:$0xf]
    %v2462 = vld [vmem:[#allocation17 + $0x4] sm:$0xf]
    %v2463 = vld [vmem:[#allocation17 + $0x8] sm:$0xf]
    %v2464 = vld [vmem:[#allocation17 + $0xc] sm:$0xf]
    %v2465 = vld [vmem:[#allocation19] sm:$0x1]
    %v2467 = vperm.slane %v2465, 0
    %v2473 = vunpack.c.l.b16 %v2461
    %v2474 = vunpack.c.l.b16 %v2462
    %v2475 = vunpack.c.l.b16 %v2463
    %v2476 = vunpack.c.l.b16 %v2464
    %v2477 = vpack.c.b16 %v2474, %v2473
    %v2478 = vpack.c.b16 %v2476, %v2475
    %v2482 = vsel %vm328, %v2460, 0
    %2484 = vmatpush.bf16.msra.mxu0 0
    %2485 = vmatpush.bf16.msra.mxu0 0
    %2486 = vmatpush.bf16.msra.mxu0 0
    %2487 = vmatpush.bf16.msra.mxu0 0
    %2488 = vmatpush.bf16.msra.mxu0 0
    %2489 = vmatpush.bf16.msra.mxu0 0
    %2490 = vmatpush.bf16.msra.mxu0 %v2478
    %2491 = vmatpush.bf16.msra.mxu0 %v2477
    %2492 = vmatmul.bf16.gmra.mxu0 %v2482
    %v2493 = vpop.f32.mrf.mxu0
    %v2494 = vadd.f32 %v2467, %v2493
    %v2495 = vpop.f32.mrf.mxu0
    %v2496 = vadd.f32 %v2467, %v2495
    %2497 = vdwg.mxu0
    %2500 = vrot.lane.b32.xlu0 %v466, 120
    %v2501 = vpop.permute.xlu0 %2500
    %2502 = vrot.lane.b32.xlu0 %v468, 120
    %v2503 = vpop.permute.xlu0 %2502
    %2506 = vrot.lane.b32.xlu0 %v466, 112
    %v2507 = vpop.permute.xlu0 %2506
    %2508 = vrot.lane.b32.xlu0 %v468, 112
    %v2509 = vpop.permute.xlu0 %2508
    %2512 = vrot.lane.b32.xlu0 %v466, 104
    %v2513 = vpop.permute.xlu0 %2512
    %2514 = vrot.lane.b32.xlu0 %v468, 104
    %v2515 = vpop.permute.xlu0 %2514
    %v2518 = vrot.slane %v2507, 4
    %v2519 = vsel %vm513, %v2518, %v466
    %v2520 = vrot.slane %v466, 4
    %v2521 = vsel %vm513, %v2507, %v2520
    %v2523 = vunpack.c.l.s4 1983009808
    %v2524 = vunpack.c.0.s8 %v2523
    %v2525 = vperm.slane %v2519, %v2524
    %v2527 = vunpack.c.l.s4 1983009808
    %v2528 = vunpack.c.0.s8 %v2527
    %v2529 = vperm.slane %v2521, %v2528
    %v2530 = vrot.slane %v2513, 4
    %v2531 = vsel %vm513, %v2530, %v2501
    %v2532 = vrot.slane %v2501, 4
    %v2533 = vsel %vm513, %v2513, %v2532
    %v2535 = vunpack.c.l.s4 1983009808
    %v2536 = vunpack.c.0.s8 %v2535
    %v2537 = vperm.slane %v2531, %v2536
    %v2539 = vunpack.c.l.s4 1983009808
    %v2540 = vunpack.c.0.s8 %v2539
    %v2541 = vperm.slane %v2533, %v2540
    %v2542 = vrot.slane %v2537, 4
    %v2543 = vsel %vm513, %v2542, %v2525
    %v2544 = vrot.slane %v2525, 4
    %v2545 = vsel %vm513, %v2537, %v2544
    %v2547 = vunpack.c.l.s4 1934713408
    %v2548 = vunpack.c.0.s8 %v2547
    %v2549 = vperm.slane %v2543, %v2548
    %v2551 = vunpack.c.l.s4 1934713408
    %v2552 = vunpack.c.0.s8 %v2551
    %v2553 = vperm.slane %v2545, %v2552
    %v2554 = vrot.slane %v2541, 4
    %v2555 = vsel %vm513, %v2554, %v2529
    %v2556 = vrot.slane %v2529, 4
    %v2557 = vsel %vm513, %v2541, %v2556
    %v2559 = vunpack.c.l.s4 1934713408
    %v2560 = vunpack.c.0.s8 %v2559
    %v2561 = vperm.slane %v2555, %v2560
    %v2563 = vunpack.c.l.s4 1934713408
    %v2564 = vunpack.c.0.s8 %v2563
    %v2565 = vperm.slane %v2557, %v2564
    %v2566 = vrot.slane %v2549, 4
    %v2567 = vsel %vm513, 0.0, %v2566
    %v2568 = vrot.slane %v2553, 4
    %v2569 = vsel %vm513, 0.0, %v2568
    %v2570 = vrot.slane %v2561, 4
    %v2571 = vsel %vm513, 0.0, %v2570
    %v2572 = vrot.slane %v2565, 4
    %v2573 = vsel %vm513, 0.0, %v2572
    %v2574 = vrot.slane %v2509, 4
    %v2575 = vsel %vm513, %v2574, %v468
    %v2576 = vrot.slane %v468, 4
    %v2577 = vsel %vm513, %v2509, %v2576
    %v2579 = vunpack.c.l.s4 1983009808
    %v2580 = vunpack.c.0.s8 %v2579
    %v2581 = vperm.slane %v2575, %v2580
    %v2583 = vunpack.c.l.s4 1983009808
    %v2584 = vunpack.c.0.s8 %v2583
    %v2585 = vperm.slane %v2577, %v2584
    %v2586 = vrot.slane %v2515, 4
    %v2587 = vsel %vm513, %v2586, %v2503
    %v2588 = vrot.slane %v2503, 4
    %v2589 = vsel %vm513, %v2515, %v2588
    %v2591 = vunpack.c.l.s4 1983009808
    %v2592 = vunpack.c.0.s8 %v2591
    %v2593 = vperm.slane %v2587, %v2592
    %v2595 = vunpack.c.l.s4 1983009808
    %v2596 = vunpack.c.0.s8 %v2595
    %v2597 = vperm.slane %v2589, %v2596
    %v2598 = vrot.slane %v2593, 4
    %v2599 = vsel %vm513, %v2598, %v2581
    %v2600 = vrot.slane %v2581, 4
    %v2601 = vsel %vm513, %v2593, %v2600
    %v2603 = vunpack.c.l.s4 1934713408
    %v2604 = vunpack.c.0.s8 %v2603
    %v2605 = vperm.slane %v2599, %v2604
    %v2607 = vunpack.c.l.s4 1934713408
    %v2608 = vunpack.c.0.s8 %v2607
    %v2609 = vperm.slane %v2601, %v2608
    %v2610 = vrot.slane %v2597, 4
    %v2611 = vsel %vm513, %v2610, %v2585
    %v2612 = vrot.slane %v2585, 4
    %v2613 = vsel %vm513, %v2597, %v2612
    %v2615 = vunpack.c.l.s4 1934713408
    %v2616 = vunpack.c.0.s8 %v2615
    %v2617 = vperm.slane %v2611, %v2616
    %v2619 = vunpack.c.l.s4 1934713408
    %v2620 = vunpack.c.0.s8 %v2619
    %v2621 = vperm.slane %v2613, %v2620
    %v2622 = vrot.slane %v2605, 4
    %v2623 = vsel %vm513, 0.0, %v2622
    %v2624 = vrot.slane %v2609, 4
    %v2625 = vsel %vm513, 0.0, %v2624
    %v2626 = vrot.slane %v2617, 4
    %v2627 = vsel %vm513, 0.0, %v2626
    %v2628 = vrot.slane %v2621, 4
    %v2629 = vsel %vm513, 0.0, %v2628
    %2632 = vrot.lane.b32.xlu0 %v493, 120
    %v2633 = vpop.permute.xlu0 %2632
    %2634 = vrot.lane.b32.xlu0 %v495, 120
    %v2635 = vpop.permute.xlu0 %2634
    %2638 = vrot.lane.b32.xlu0 %v493, 112
    %v2639 = vpop.permute.xlu0 %2638
    %2640 = vrot.lane.b32.xlu0 %v495, 112
    %v2641 = vpop.permute.xlu0 %2640
    %2644 = vrot.lane.b32.xlu0 %v493, 104
    %v2645 = vpop.permute.xlu0 %2644
    %2646 = vrot.lane.b32.xlu0 %v495, 104
    %v2647 = vpop.permute.xlu0 %2646
    %v2650 = vrot.slane %v2639, 4
    %v2651 = vsel %vm513, %v2650, %v493
    %v2652 = vrot.slane %v493, 4
    %v2653 = vsel %vm513, %v2639, %v2652
    %v2655 = vunpack.c.l.s4 1983009808
    %v2656 = vunpack.c.0.s8 %v2655
    %v2657 = vperm.slane %v2651, %v2656
    %v2659 = vunpack.c.l.s4 1983009808
    %v2660 = vunpack.c.0.s8 %v2659
    %v2661 = vperm.slane %v2653, %v2660
    %v2662 = vrot.slane %v2645, 4
    %v2663 = vsel %vm513, %v2662, %v2633
    %v2664 = vrot.slane %v2633, 4
    %v2665 = vsel %vm513, %v2645, %v2664
    %v2667 = vunpack.c.l.s4 1983009808
    %v2668 = vunpack.c.0.s8 %v2667
    %v2669 = vperm.slane %v2663, %v2668
    %v2671 = vunpack.c.l.s4 1983009808
    %v2672 = vunpack.c.0.s8 %v2671
    %v2673 = vperm.slane %v2665, %v2672
    %v2674 = vrot.slane %v2669, 4
    %v2675 = vsel %vm513, %v2674, %v2657
    %v2676 = vrot.slane %v2657, 4
    %v2677 = vsel %vm513, %v2669, %v2676
    %v2679 = vunpack.c.l.s4 1934713408
    %v2680 = vunpack.c.0.s8 %v2679
    %v2681 = vperm.slane %v2675, %v2680
    %v2683 = vunpack.c.l.s4 1934713408
    %v2684 = vunpack.c.0.s8 %v2683
    %v2685 = vperm.slane %v2677, %v2684
    %v2686 = vrot.slane %v2673, 4
    %v2687 = vsel %vm513, %v2686, %v2661
    %v2688 = vrot.slane %v2661, 4
    %v2689 = vsel %vm513, %v2673, %v2688
    %v2691 = vunpack.c.l.s4 1934713408
    %v2692 = vunpack.c.0.s8 %v2691
    %v2693 = vperm.slane %v2687, %v2692
    %v2695 = vunpack.c.l.s4 1934713408
    %v2696 = vunpack.c.0.s8 %v2695
    %v2697 = vperm.slane %v2689, %v2696
    %v2698 = vrot.slane %v2681, 4
    %v2699 = vsel %vm513, 0.0, %v2698
    %v2700 = vrot.slane %v2685, 4
    %v2701 = vsel %vm513, 0.0, %v2700
    %v2702 = vrot.slane %v2693, 4
    %v2703 = vsel %vm513, 0.0, %v2702
    %v2704 = vrot.slane %v2697, 4
    %v2705 = vsel %vm513, 0.0, %v2704
    %v2706 = vrot.slane %v2641, 4
    %v2707 = vsel %vm513, %v2706, %v495
    %v2708 = vrot.slane %v495, 4
    %v2709 = vsel %vm513, %v2641, %v2708
    %v2711 = vunpack.c.l.s4 1983009808
    %v2712 = vunpack.c.0.s8 %v2711
    %v2713 = vperm.slane %v2707, %v2712
    %v2715 = vunpack.c.l.s4 1983009808
    %v2716 = vunpack.c.0.s8 %v2715
    %v2717 = vperm.slane %v2709, %v2716
    %v2718 = vrot.slane %v2647, 4
    %v2719 = vsel %vm513, %v2718, %v2635
    %v2720 = vrot.slane %v2635, 4
    %v2721 = vsel %vm513, %v2647, %v2720
    %v2723 = vunpack.c.l.s4 1983009808
    %v2724 = vunpack.c.0.s8 %v2723
    %v2725 = vperm.slane %v2719, %v2724
    %v2727 = vunpack.c.l.s4 1983009808
    %v2728 = vunpack.c.0.s8 %v2727
    %v2729 = vperm.slane %v2721, %v2728
    %v2730 = vrot.slane %v2725, 4
    %v2731 = vsel %vm513, %v2730, %v2713
    %v2732 = vrot.slane %v2713, 4
    %v2733 = vsel %vm513, %v2725, %v2732
    %v2735 = vunpack.c.l.s4 1934713408
    %v2736 = vunpack.c.0.s8 %v2735
    %v2737 = vperm.slane %v2731, %v2736
    %v2739 = vunpack.c.l.s4 1934713408
    %v2740 = vunpack.c.0.s8 %v2739
    %v2741 = vperm.slane %v2733, %v2740
    %v2742 = vrot.slane %v2729, 4
    %v2743 = vsel %vm513, %v2742, %v2717
    %v2744 = vrot.slane %v2717, 4
    %v2745 = vsel %vm513, %v2729, %v2744
    %v2747 = vunpack.c.l.s4 1934713408
    %v2748 = vunpack.c.0.s8 %v2747
    %v2749 = vperm.slane %v2743, %v2748
    %v2751 = vunpack.c.l.s4 1934713408
    %v2752 = vunpack.c.0.s8 %v2751
    %v2753 = vperm.slane %v2745, %v2752
    %v2754 = vrot.slane %v2737, 4
    %v2755 = vsel %vm513, 0.0, %v2754
    %v2756 = vrot.slane %v2741, 4
    %v2757 = vsel %vm513, 0.0, %v2756
    %v2758 = vrot.slane %v2749, 4
    %v2759 = vsel %vm513, 0.0, %v2758
    %v2760 = vrot.slane %v2753, 4
    %v2761 = vsel %vm513, 0.0, %v2760
    %v2762 = vsel %vm513, %v2568, %v2549
    %v2764 = vunpack.c.l.s4 1983009808
    %v2765 = vunpack.c.0.s8 %v2764
    %v2766 = vperm.slane %v2762, %v2765
    %v2767 = vrot.slane %v2569, 4
    %v2768 = vsel %vm513, %v2767, %v2567
    %v2770 = vunpack.c.l.s4 1983009808
    %v2771 = vunpack.c.0.s8 %v2770
    %v2772 = vperm.slane %v2768, %v2771
    %v2773 = vsel %vm513, %v2572, %v2561
    %v2775 = vunpack.c.l.s4 1983009808
    %v2776 = vunpack.c.0.s8 %v2775
    %v2777 = vperm.slane %v2773, %v2776
    %v2778 = vrot.slane %v2573, 4
    %v2779 = vsel %vm513, %v2778, %v2571
    %v2781 = vunpack.c.l.s4 1983009808
    %v2782 = vunpack.c.0.s8 %v2781
    %v2783 = vperm.slane %v2779, %v2782
    %v2784 = vrot.slane %v2772, 4
    %v2785 = vsel %vm513, %v2784, %v2766
    %v2786 = vrot.slane %v2766, 4
    %v2787 = vsel %vm513, %v2772, %v2786
    %v2789 = vunpack.c.l.s4 1934713408
    %v2790 = vunpack.c.0.s8 %v2789
    %v2791 = vperm.slane %v2785, %v2790
    %v2793 = vunpack.c.l.s4 1934713408
    %v2794 = vunpack.c.0.s8 %v2793
    %v2795 = vperm.slane %v2787, %v2794
    %v2796 = vrot.slane %v2783, 4
    %v2797 = vsel %vm513, %v2796, %v2777
    %v2798 = vrot.slane %v2777, 4
    %v2799 = vsel %vm513, %v2783, %v2798
    %v2801 = vunpack.c.l.s4 1934713408
    %v2802 = vunpack.c.0.s8 %v2801
    %v2803 = vperm.slane %v2797, %v2802
    %v2805 = vunpack.c.l.s4 1934713408
    %v2806 = vunpack.c.0.s8 %v2805
    %v2807 = vperm.slane %v2799, %v2806
    %v2808 = vrot.slane %v2803, 4
    %v2809 = vsel %vm513, %v2808, %v2791
    %v2810 = vrot.slane %v2791, 4
    %v2811 = vsel %vm513, %v2803, %v2810
    %v2812 = vrot.slane %v2807, 4
    %v2813 = vsel %vm513, %v2812, %v2795
    %v2814 = vrot.slane %v2795, 4
    %v2815 = vsel %vm513, %v2807, %v2814
    %v2816 = vsel %vm513, %v2624, %v2605
    %v2818 = vunpack.c.l.s4 1983009808
    %v2819 = vunpack.c.0.s8 %v2818
    %v2820 = vperm.slane %v2816, %v2819
    %v2821 = vrot.slane %v2625, 4
    %v2822 = vsel %vm513, %v2821, %v2623
    %v2824 = vunpack.c.l.s4 1983009808
    %v2825 = vunpack.c.0.s8 %v2824
    %v2826 = vperm.slane %v2822, %v2825
    %v2827 = vsel %vm513, %v2628, %v2617
    %v2829 = vunpack.c.l.s4 1983009808
    %v2830 = vunpack.c.0.s8 %v2829
    %v2831 = vperm.slane %v2827, %v2830
    %v2832 = vrot.slane %v2629, 4
    %v2833 = vsel %vm513, %v2832, %v2627
    %v2835 = vunpack.c.l.s4 1983009808
    %v2836 = vunpack.c.0.s8 %v2835
    %v2837 = vperm.slane %v2833, %v2836
    %v2838 = vrot.slane %v2826, 4
    %v2839 = vsel %vm513, %v2838, %v2820
    %v2840 = vrot.slane %v2820, 4
    %v2841 = vsel %vm513, %v2826, %v2840
    %v2843 = vunpack.c.l.s4 1934713408
    %v2844 = vunpack.c.0.s8 %v2843
    %v2845 = vperm.slane %v2839, %v2844
    %v2847 = vunpack.c.l.s4 1934713408
    %v2848 = vunpack.c.0.s8 %v2847
    %v2849 = vperm.slane %v2841, %v2848
    %v2850 = vrot.slane %v2837, 4
    %v2851 = vsel %vm513, %v2850, %v2831
    %v2852 = vrot.slane %v2831, 4
    %v2853 = vsel %vm513, %v2837, %v2852
    %v2855 = vunpack.c.l.s4 1934713408
    %v2856 = vunpack.c.0.s8 %v2855
    %v2857 = vperm.slane %v2851, %v2856
    %v2859 = vunpack.c.l.s4 1934713408
    %v2860 = vunpack.c.0.s8 %v2859
    %v2861 = vperm.slane %v2853, %v2860
    %v2862 = vrot.slane %v2857, 4
    %v2863 = vsel %vm513, %v2862, %v2845
    %v2864 = vrot.slane %v2845, 4
    %v2865 = vsel %vm513, %v2857, %v2864
    %v2866 = vrot.slane %v2861, 4
    %v2867 = vsel %vm513, %v2866, %v2849
    %v2868 = vrot.slane %v2849, 4
    %v2869 = vsel %vm513, %v2861, %v2868
    %v2870 = vpack.c.bf16 %v2809, %v2809
    %v2871 = vpack.c.bf16 %v2863, %v2863
    %v2872 = vpack.c.bf16 %v2811, %v2811
    %v2873 = vpack.c.bf16 %v2865, %v2865
    %v2874 = vpack.c.bf16 %v2813, %v2813
    %v2875 = vpack.c.bf16 %v2867, %v2867
    %v2876 = vpack.c.bf16 %v2815, %v2815
    %v2877 = vpack.c.bf16 %v2869, %v2869
    %v2878 = vsel %vm513, %v2700, %v2681
    %v2880 = vunpack.c.l.s4 1983009808
    %v2881 = vunpack.c.0.s8 %v2880
    %v2882 = vperm.slane %v2878, %v2881
    %v2883 = vrot.slane %v2701, 4
    %v2884 = vsel %vm513, %v2883, %v2699
    %v2886 = vunpack.c.l.s4 1983009808
    %v2887 = vunpack.c.0.s8 %v2886
    %v2888 = vperm.slane %v2884, %v2887
    %v2889 = vsel %vm513, %v2704, %v2693
    %v2891 = vunpack.c.l.s4 1983009808
    %v2892 = vunpack.c.0.s8 %v2891
    %v2893 = vperm.slane %v2889, %v2892
    %v2894 = vrot.slane %v2705, 4
    %v2895 = vsel %vm513, %v2894, %v2703
    %v2897 = vunpack.c.l.s4 1983009808
    %v2898 = vunpack.c.0.s8 %v2897
    %v2899 = vperm.slane %v2895, %v2898
    %v2900 = vrot.slane %v2888, 4
    %v2901 = vsel %vm513, %v2900, %v2882
    %v2902 = vrot.slane %v2882, 4
    %v2903 = vsel %vm513, %v2888, %v2902
    %v2905 = vunpack.c.l.s4 1934713408
    %v2906 = vunpack.c.0.s8 %v2905
    %v2907 = vperm.slane %v2901, %v2906
    %v2909 = vunpack.c.l.s4 1934713408
    %v2910 = vunpack.c.0.s8 %v2909
    %v2911 = vperm.slane %v2903, %v2910
    %v2912 = vrot.slane %v2899, 4
    %v2913 = vsel %vm513, %v2912, %v2893
    %v2914 = vrot.slane %v2893, 4
    %v2915 = vsel %vm513, %v2899, %v2914
    %v2917 = vunpack.c.l.s4 1934713408
    %v2918 = vunpack.c.0.s8 %v2917
    %v2919 = vperm.slane %v2913, %v2918
    %v2921 = vunpack.c.l.s4 1934713408
    %v2922 = vunpack.c.0.s8 %v2921
    %v2923 = vperm.slane %v2915, %v2922
    %v2924 = vrot.slane %v2919, 4
    %v2925 = vsel %vm513, %v2924, %v2907
    %v2926 = vrot.slane %v2907, 4
    %v2927 = vsel %vm513, %v2919, %v2926
    %v2928 = vrot.slane %v2923, 4
    %v2929 = vsel %vm513, %v2928, %v2911
    %v2930 = vrot.slane %v2911, 4
    %v2931 = vsel %vm513, %v2923, %v2930
    %v2932 = vsel %vm513, %v2756, %v2737
    %v2934 = vunpack.c.l.s4 1983009808
    %v2935 = vunpack.c.0.s8 %v2934
    %v2936 = vperm.slane %v2932, %v2935
    %v2937 = vrot.slane %v2757, 4
    %v2938 = vsel %vm513, %v2937, %v2755
    %v2940 = vunpack.c.l.s4 1983009808
    %v2941 = vunpack.c.0.s8 %v2940
    %v2942 = vperm.slane %v2938, %v2941
    %v2943 = vsel %vm513, %v2760, %v2749
    %v2945 = vunpack.c.l.s4 1983009808
    %v2946 = vunpack.c.0.s8 %v2945
    %v2947 = vperm.slane %v2943, %v2946
    %v2948 = vrot.slane %v2761, 4
    %v2949 = vsel %vm513, %v2948, %v2759
    %v2951 = vunpack.c.l.s4 1983009808
    %v2952 = vunpack.c.0.s8 %v2951
    %v2953 = vperm.slane %v2949, %v2952
    %v2954 = vrot.slane %v2942, 4
    %v2955 = vsel %vm513, %v2954, %v2936
    %v2956 = vrot.slane %v2936, 4
    %v2957 = vsel %vm513, %v2942, %v2956
    %v2959 = vunpack.c.l.s4 1934713408
    %v2960 = vunpack.c.0.s8 %v2959
    %v2961 = vperm.slane %v2955, %v2960
    %v2963 = vunpack.c.l.s4 1934713408
    %v2964 = vunpack.c.0.s8 %v2963
    %v2965 = vperm.slane %v2957, %v2964
    %v2966 = vrot.slane %v2953, 4
    %v2967 = vsel %vm513, %v2966, %v2947
    %v2968 = vrot.slane %v2947, 4
    %v2969 = vsel %vm513, %v2953, %v2968
    %v2971 = vunpack.c.l.s4 1934713408
    %v2972 = vunpack.c.0.s8 %v2971
    %v2973 = vperm.slane %v2967, %v2972
    %v2975 = vunpack.c.l.s4 1934713408
    %v2976 = vunpack.c.0.s8 %v2975
    %v2977 = vperm.slane %v2969, %v2976
    %v2978 = vrot.slane %v2973, 4
    %v2979 = vsel %vm513, %v2978, %v2961
    %v2980 = vrot.slane %v2961, 4
    %v2981 = vsel %vm513, %v2973, %v2980
    %v2982 = vrot.slane %v2977, 4
    %v2983 = vsel %vm513, %v2982, %v2965
    %v2984 = vrot.slane %v2965, 4
    %v2985 = vsel %vm513, %v2977, %v2984
    %v2986 = vpack.c.bf16 %v2925, %v2925
    %v2987 = vpack.c.bf16 %v2979, %v2979
    %v2988 = vpack.c.bf16 %v2927, %v2927
    %v2989 = vpack.c.bf16 %v2981, %v2981
    %v2990 = vpack.c.bf16 %v2929, %v2929
    %v2991 = vpack.c.bf16 %v2983, %v2983
    %v2992 = vpack.c.bf16 %v2931, %v2931
    %v2993 = vpack.c.bf16 %v2985, %v2985
    %v2996 = vunpack.c.l.b16 %v2870
    %v2997 = vunpack.c.l.b16 %v2871
    %v2998 = vpack.c.b16 %v2997, %v2996
    %v3000 = vsel %vm1128, %v2998, 0
    %3002 = vmatpush.bf16.xpose.msra.mxu0 0
    %3003 = vmatpush.bf16.xpose.msra.mxu0 0
    %3004 = vmatpush.bf16.xpose.msra.mxu0 0
    %3005 = vmatpush.bf16.xpose.msra.mxu0 0
    %3006 = vmatpush.bf16.xpose.msra.mxu0 0
    %3007 = vmatpush.bf16.xpose.msra.mxu0 0
    %3008 = vmatpush.bf16.xpose.msra.mxu0 0
    %3009 = vmatpush.bf16.xpose.msra.mxu0 %v3000
    %3010 = vmatmul.bf16.gmra.mxu0 %v1130
    %v3011 = vpop.f32.mrf.mxu0
    %v3012 = vadd.f32 0.0, %v3011
    %v3013 = vpop.f32.mrf.mxu0
    %3014 = vdwg.mxu0
    %v3017 = vunpack.c.l.b16 %v2872
    %v3018 = vunpack.c.l.b16 %v2873
    %v3019 = vpack.c.b16 %v3018, %v3017
    %v3021 = vsel %vm1128, %v3019, 0
    %3023 = vmatpush.bf16.xpose.msra.mxu0 0
    %3024 = vmatpush.bf16.xpose.msra.mxu0 0
    %3025 = vmatpush.bf16.xpose.msra.mxu0 0
    %3026 = vmatpush.bf16.xpose.msra.mxu0 0
    %3027 = vmatpush.bf16.xpose.msra.mxu0 0
    %3028 = vmatpush.bf16.xpose.msra.mxu0 0
    %3029 = vmatpush.bf16.xpose.msra.mxu0 0
    %3030 = vmatpush.bf16.xpose.msra.mxu0 %v3021
    %3031 = vmatmul.bf16.gmra.mxu0 %v1154
    %v3032 = vpop.f32.mrf.mxu0
    %v3033 = vadd.f32 0.0, %v3032
    %v3034 = vpop.f32.mrf.mxu0
    %3035 = vdwg.mxu0
    %v3038 = vunpack.c.l.b16 %v2874
    %v3039 = vunpack.c.l.b16 %v2875
    %v3040 = vpack.c.b16 %v3039, %v3038
    %v3042 = vsel %vm1128, %v3040, 0
    %3044 = vmatpush.bf16.xpose.msra.mxu0 0
    %3045 = vmatpush.bf16.xpose.msra.mxu0 0
    %3046 = vmatpush.bf16.xpose.msra.mxu0 0
    %3047 = vmatpush.bf16.xpose.msra.mxu0 0
    %3048 = vmatpush.bf16.xpose.msra.mxu0 0
    %3049 = vmatpush.bf16.xpose.msra.mxu0 0
    %3050 = vmatpush.bf16.xpose.msra.mxu0 0
    %3051 = vmatpush.bf16.xpose.msra.mxu0 %v3042
    %3052 = vmatmul.bf16.gmra.mxu0 %v1178
    %v3053 = vpop.f32.mrf.mxu0
    %v3054 = vadd.f32 0.0, %v3053
    %v3055 = vpop.f32.mrf.mxu0
    %3056 = vdwg.mxu0
    %v3059 = vunpack.c.l.b16 %v2876
    %v3060 = vunpack.c.l.b16 %v2877
    %v3061 = vpack.c.b16 %v3060, %v3059
    %v3063 = vsel %vm1128, %v3061, 0
    %3065 = vmatpush.bf16.xpose.msra.mxu0 0
    %3066 = vmatpush.bf16.xpose.msra.mxu0 0
    %3067 = vmatpush.bf16.xpose.msra.mxu0 0
    %3068 = vmatpush.bf16.xpose.msra.mxu0 0
    %3069 = vmatpush.bf16.xpose.msra.mxu0 0
    %3070 = vmatpush.bf16.xpose.msra.mxu0 0
    %3071 = vmatpush.bf16.xpose.msra.mxu0 0
    %3072 = vmatpush.bf16.xpose.msra.mxu0 %v3063
    %3073 = vmatmul.bf16.gmra.mxu0 %v1202
    %v3074 = vpop.f32.mrf.mxu0
    %v3075 = vadd.f32 0.0, %v3074
    %v3076 = vpop.f32.mrf.mxu0
    %3077 = vdwg.mxu0
    %v3078 = vsel %vm1220, %v3012, -inf
    %3079 = vmax.xlane.f32.xlu0 %v3078
    %v3080 = vpop.xlane.xlu0 %3079
    %v3081 = vsel %vm1220, %v3033, -inf
    %3082 = vmax.xlane.f32.xlu0 %v3081
    %v3083 = vpop.xlane.xlu0 %3082
    %v3084 = vsel %vm1220, %v3054, -inf
    %3085 = vmax.xlane.f32.xlu0 %v3084
    %v3086 = vpop.xlane.xlu0 %3085
    %v3087 = vsel %vm1220, %v3075, -inf
    %3088 = vmax.xlane.f32.xlu0 %v3087
    %v3089 = vpop.xlane.xlu0 %3088
    %v3090 = vsub.f32 %v3012, %v3080
    %v3091 = vsub.f32 %v3033, %v3083
    %v3092 = vsub.f32 %v3054, %v3086
    %v3093 = vsub.f32 %v3075, %v3089
    %v3094 = vmul.f32 %v3090, 1.442695
    %v3095 = vpow.pop %v3094
    %v3096 = vmul.f32 %v3091, 1.442695
    %v3097 = vpow.pop %v3096
    %v3098 = vmul.f32 %v3092, 1.442695
    %v3099 = vpow.pop %v3098
    %v3100 = vmul.f32 %v3093, 1.442695
    %v3101 = vpow.pop %v3100
    %v3102 = vsel %vm1220, %v3095, 0.0
    %3103 = vadd.xlane.f32.xlu0 %v3102
    %v3104 = vpop.xlane.xlu0 %3103
    %v3105 = vsel %vm1220, %v3097, 0.0
    %3106 = vadd.xlane.f32.xlu0 %v3105
    %v3107 = vpop.xlane.xlu0 %3106
    %v3108 = vsel %vm1220, %v3099, 0.0
    %3109 = vadd.xlane.f32.xlu0 %v3108
    %v3110 = vpop.xlane.xlu0 %3109
    %v3111 = vsel %vm1220, %v3101, 0.0
    %3112 = vadd.xlane.f32.xlu0 %v3111
    %v3113 = vpop.xlane.xlu0 %3112
    %v3114 = vrcp.pop %v3104
    %v3115 = vrcp.pop %v3107
    %v3116 = vrcp.pop %v3110
    %v3117 = vrcp.pop %v3113
    %v3118 = vmul.f32 %v3095, %v3114
    %v3119 = vmul.f32 %v3097, %v3115
    %v3120 = vmul.f32 %v3099, %v3116
    %v3121 = vmul.f32 %v3101, %v3117
    %v3122 = vpack.c.bf16 %v3118, %v3118
    %v3123 = vpack.c.bf16 %v3119, %v3119
    %v3124 = vpack.c.bf16 %v3120, %v3120
    %v3125 = vpack.c.bf16 %v3121, %v3121
    %v3128 = vunpack.c.l.b16 %v2986
    %v3129 = vunpack.c.l.b16 %v2987
    %v3130 = vpack.c.b16 %v3129, %v3128
    %v3133 = vsel %vm1220, %v3122, 0
    %3135 = vmatpush.bf16.msra.mxu0 0
    %3136 = vmatpush.bf16.msra.mxu0 0
    %3137 = vmatpush.bf16.msra.mxu0 0
    %3138 = vmatpush.bf16.msra.mxu0 0
    %3139 = vmatpush.bf16.msra.mxu0 0
    %3140 = vmatpush.bf16.msra.mxu0 0
    %3141 = vmatpush.bf16.msra.mxu0 0
    %3142 = vmatpush.bf16.msra.mxu0 %v3130
    %3143 = vmatmul.bf16.gmra.mxu0 %v3133
    %v3144 = vpop.f32.mrf.mxu0
    %v3145 = vadd.f32 0.0, %v3144
    %v3146 = vpop.f32.mrf.mxu0
    %3147 = vdwg.mxu0
    %v3150 = vunpack.c.l.b16 %v2988
    %v3151 = vunpack.c.l.b16 %v2989
    %v3152 = vpack.c.b16 %v3151, %v3150
    %v3155 = vsel %vm1220, %v3123, 0
    %3157 = vmatpush.bf16.msra.mxu0 0
    %3158 = vmatpush.bf16.msra.mxu0 0
    %3159 = vmatpush.bf16.msra.mxu0 0
    %3160 = vmatpush.bf16.msra.mxu0 0
    %3161 = vmatpush.bf16.msra.mxu0 0
    %3162 = vmatpush.bf16.msra.mxu0 0
    %3163 = vmatpush.bf16.msra.mxu0 0
    %3164 = vmatpush.bf16.msra.mxu0 %v3152
    %3165 = vmatmul.bf16.gmra.mxu0 %v3155
    %v3166 = vpop.f32.mrf.mxu0
    %v3167 = vadd.f32 0.0, %v3166
    %v3168 = vpop.f32.mrf.mxu0
    %3169 = vdwg.mxu0
    %v3172 = vunpack.c.l.b16 %v2990
    %v3173 = vunpack.c.l.b16 %v2991
    %v3174 = vpack.c.b16 %v3173, %v3172
    %v3177 = vsel %vm1220, %v3124, 0
    %3179 = vmatpush.bf16.msra.mxu0 0
    %3180 = vmatpush.bf16.msra.mxu0 0
    %3181 = vmatpush.bf16.msra.mxu0 0
    %3182 = vmatpush.bf16.msra.mxu0 0
    %3183 = vmatpush.bf16.msra.mxu0 0
    %3184 = vmatpush.bf16.msra.mxu0 0
    %3185 = vmatpush.bf16.msra.mxu0 0
    %3186 = vmatpush.bf16.msra.mxu0 %v3174
    %3187 = vmatmul.bf16.gmra.mxu0 %v3177
    %v3188 = vpop.f32.mrf.mxu0
    %v3189 = vadd.f32 0.0, %v3188
    %v3190 = vpop.f32.mrf.mxu0
    %3191 = vdwg.mxu0
    %v3194 = vunpack.c.l.b16 %v2992
    %v3195 = vunpack.c.l.b16 %v2993
    %v3196 = vpack.c.b16 %v3195, %v3194
    %v3199 = vsel %vm1220, %v3125, 0
    %3201 = vmatpush.bf16.msra.mxu0 0
    %3202 = vmatpush.bf16.msra.mxu0 0
    %3203 = vmatpush.bf16.msra.mxu0 0
    %3204 = vmatpush.bf16.msra.mxu0 0
    %3205 = vmatpush.bf16.msra.mxu0 0
    %3206 = vmatpush.bf16.msra.mxu0 0
    %3207 = vmatpush.bf16.msra.mxu0 0
    %3208 = vmatpush.bf16.msra.mxu0 %v3196
    %3209 = vmatmul.bf16.gmra.mxu0 %v3199
    %v3210 = vpop.f32.mrf.mxu0
    %v3211 = vadd.f32 0.0, %v3210
    %v3212 = vpop.f32.mrf.mxu0
    %3213 = vdwg.mxu0
    %v3214 = vrot.slane %v3189, 4
    %v3215 = vsel %vm513, %v3214, %v3145
    %v3216 = vrot.slane %v3145, 4
    %v3217 = vsel %vm513, %v3189, %v3216
    %v3219 = vunpack.c.l.s4 1983009808
    %v3220 = vunpack.c.0.s8 %v3219
    %v3221 = vperm.slane %v3215, %v3220
    %v3223 = vunpack.c.l.s4 1983009808
    %v3224 = vunpack.c.0.s8 %v3223
    %v3225 = vperm.slane %v3217, %v3224
    %v3226 = vrot.slane %v3211, 4
    %v3227 = vsel %vm513, %v3226, %v3167
    %v3228 = vrot.slane %v3167, 4
    %v3229 = vsel %vm513, %v3211, %v3228
    %v3231 = vunpack.c.l.s4 1983009808
    %v3232 = vunpack.c.0.s8 %v3231
    %v3233 = vperm.slane %v3227, %v3232
    %v3235 = vunpack.c.l.s4 1983009808
    %v3236 = vunpack.c.0.s8 %v3235
    %v3237 = vperm.slane %v3229, %v3236
    %v3238 = vrot.slane %v3233, 4
    %v3239 = vsel %vm513, %v3238, %v3221
    %v3240 = vrot.slane %v3221, 4
    %v3241 = vsel %vm513, %v3233, %v3240
    %v3243 = vunpack.c.l.s4 1934713408
    %v3244 = vunpack.c.0.s8 %v3243
    %v3245 = vperm.slane %v3239, %v3244
    %v3247 = vunpack.c.l.s4 1934713408
    %v3248 = vunpack.c.0.s8 %v3247
    %v3249 = vperm.slane %v3241, %v3248
    %v3250 = vrot.slane %v3237, 4
    %v3251 = vsel %vm513, %v3250, %v3225
    %v3252 = vrot.slane %v3225, 4
    %v3253 = vsel %vm513, %v3237, %v3252
    %v3255 = vunpack.c.l.s4 1934713408
    %v3256 = vunpack.c.0.s8 %v3255
    %v3257 = vperm.slane %v3251, %v3256
    %v3259 = vunpack.c.l.s4 1934713408
    %v3260 = vunpack.c.0.s8 %v3259
    %v3261 = vperm.slane %v3253, %v3260
    %v3262 = vrot.slane %v3245, 4
    %v3263 = vsel %vm513, 0.0, %v3262
    %v3264 = vrot.slane %v3249, 4
    %v3265 = vsel %vm513, 0.0, %v3264
    %v3266 = vrot.slane %v3257, 4
    %v3267 = vsel %vm513, 0.0, %v3266
    %v3268 = vrot.slane %v3261, 4
    %v3269 = vsel %vm513, 0.0, %v3268
    %v3270 = vsel %vm513, %v3264, %v3245
    %v3272 = vunpack.c.l.s4 1983009808
    %v3273 = vunpack.c.0.s8 %v3272
    %v3274 = vperm.slane %v3270, %v3273
    %v3275 = vrot.slane %v3265, 4
    %v3276 = vsel %vm513, %v3275, %v3263
    %v3278 = vunpack.c.l.s4 1983009808
    %v3279 = vunpack.c.0.s8 %v3278
    %v3280 = vperm.slane %v3276, %v3279
    %v3281 = vsel %vm513, %v3268, %v3257
    %v3283 = vunpack.c.l.s4 1983009808
    %v3284 = vunpack.c.0.s8 %v3283
    %v3285 = vperm.slane %v3281, %v3284
    %v3286 = vrot.slane %v3269, 4
    %v3287 = vsel %vm513, %v3286, %v3267
    %v3289 = vunpack.c.l.s4 1983009808
    %v3290 = vunpack.c.0.s8 %v3289
    %v3291 = vperm.slane %v3287, %v3290
    %v3292 = vrot.slane %v3280, 4
    %v3293 = vsel %vm513, %v3292, %v3274
    %v3294 = vrot.slane %v3274, 4
    %v3295 = vsel %vm513, %v3280, %v3294
    %v3297 = vunpack.c.l.s4 1934713408
    %v3298 = vunpack.c.0.s8 %v3297
    %v3299 = vperm.slane %v3293, %v3298
    %v3301 = vunpack.c.l.s4 1934713408
    %v3302 = vunpack.c.0.s8 %v3301
    %v3303 = vperm.slane %v3295, %v3302
    %v3304 = vrot.slane %v3291, 4
    %v3305 = vsel %vm513, %v3304, %v3285
    %v3306 = vrot.slane %v3285, 4
    %v3307 = vsel %vm513, %v3291, %v3306
    %v3309 = vunpack.c.l.s4 1934713408
    %v3310 = vunpack.c.0.s8 %v3309
    %v3311 = vperm.slane %v3305, %v3310
    %v3313 = vunpack.c.l.s4 1934713408
    %v3314 = vunpack.c.0.s8 %v3313
    %v3315 = vperm.slane %v3307, %v3314
    %v3316 = vrot.slane %v3311, 4
    %v3317 = vsel %vm513, %v3316, %v3299
    %v3318 = vrot.slane %v3299, 4
    %v3319 = vsel %vm513, %v3311, %v3318
    %v3320 = vrot.slane %v3315, 4
    %v3321 = vsel %vm513, %v3320, %v3303
    %v3322 = vrot.slane %v3303, 4
    %v3323 = vsel %vm513, %v3315, %v3322
    %3325 = vrot.lane.b32.xlu0 %v3319, 8
    %v3326 = vpop.permute.xlu0 %3325
    %3329 = vrot.lane.b32.xlu0 %v3321, 16
    %v3330 = vpop.permute.xlu0 %3329
    %3333 = vrot.lane.b32.xlu0 %v3323, 24
    %v3334 = vpop.permute.xlu0 %3333
    %v3336 = vsel %vm1128, %v3317, %v3326
    %v3337 = vsel %vm1220, %v3336, %v3330
    %v3338 = vsel %vm1481, %v3337, %v3334
    %3341 = vrot.lane.b32.xlu0 %v471, 120
    %v3342 = vpop.permute.xlu0 %3341
    %3343 = vrot.lane.b32.xlu0 %v473, 120
    %v3344 = vpop.permute.xlu0 %3343
    %3347 = vrot.lane.b32.xlu0 %v471, 112
    %v3348 = vpop.permute.xlu0 %3347
    %3349 = vrot.lane.b32.xlu0 %v473, 112
    %v3350 = vpop.permute.xlu0 %3349
    %3353 = vrot.lane.b32.xlu0 %v471, 104
    %v3354 = vpop.permute.xlu0 %3353
    %3355 = vrot.lane.b32.xlu0 %v473, 104
    %v3356 = vpop.permute.xlu0 %3355
    %v3359 = vrot.slane %v3348, 4
    %v3360 = vsel %vm513, %v3359, %v471
    %v3361 = vrot.slane %v471, 4
    %v3362 = vsel %vm513, %v3348, %v3361
    %v3364 = vunpack.c.l.s4 1983009808
    %v3365 = vunpack.c.0.s8 %v3364
    %v3366 = vperm.slane %v3360, %v3365
    %v3368 = vunpack.c.l.s4 1983009808
    %v3369 = vunpack.c.0.s8 %v3368
    %v3370 = vperm.slane %v3362, %v3369
    %v3371 = vrot.slane %v3354, 4
    %v3372 = vsel %vm513, %v3371, %v3342
    %v3373 = vrot.slane %v3342, 4
    %v3374 = vsel %vm513, %v3354, %v3373
    %v3376 = vunpack.c.l.s4 1983009808
    %v3377 = vunpack.c.0.s8 %v3376
    %v3378 = vperm.slane %v3372, %v3377
    %v3380 = vunpack.c.l.s4 1983009808
    %v3381 = vunpack.c.0.s8 %v3380
    %v3382 = vperm.slane %v3374, %v3381
    %v3383 = vrot.slane %v3378, 4
    %v3384 = vsel %vm513, %v3383, %v3366
    %v3385 = vrot.slane %v3366, 4
    %v3386 = vsel %vm513, %v3378, %v3385
    %v3388 = vunpack.c.l.s4 1934713408
    %v3389 = vunpack.c.0.s8 %v3388
    %v3390 = vperm.slane %v3384, %v3389
    %v3392 = vunpack.c.l.s4 1934713408
    %v3393 = vunpack.c.0.s8 %v3392
    %v3394 = vperm.slane %v3386, %v3393
    %v3395 = vrot.slane %v3382, 4
    %v3396 = vsel %vm513, %v3395, %v3370
    %v3397 = vrot.slane %v3370, 4
    %v3398 = vsel %vm513, %v3382, %v3397
    %v3400 = vunpack.c.l.s4 1934713408
    %v3401 = vunpack.c.0.s8 %v3400
    %v3402 = vperm.slane %v3396, %v3401
    %v3404 = vunpack.c.l.s4 1934713408
    %v3405 = vunpack.c.0.s8 %v3404
    %v3406 = vperm.slane %v3398, %v3405
    %v3407 = vrot.slane %v3390, 4
    %v3408 = vsel %vm513, 0.0, %v3407
    %v3409 = vrot.slane %v3394, 4
    %v3410 = vsel %vm513, 0.0, %v3409
    %v3411 = vrot.slane %v3402, 4
    %v3412 = vsel %vm513, 0.0, %v3411
    %v3413 = vrot.slane %v3406, 4
    %v3414 = vsel %vm513, 0.0, %v3413
    %v3415 = vrot.slane %v3350, 4
    %v3416 = vsel %vm513, %v3415, %v473
    %v3417 = vrot.slane %v473, 4
    %v3418 = vsel %vm513, %v3350, %v3417
    %v3420 = vunpack.c.l.s4 1983009808
    %v3421 = vunpack.c.0.s8 %v3420
    %v3422 = vperm.slane %v3416, %v3421
    %v3424 = vunpack.c.l.s4 1983009808
    %v3425 = vunpack.c.0.s8 %v3424
    %v3426 = vperm.slane %v3418, %v3425
    %v3427 = vrot.slane %v3356, 4
    %v3428 = vsel %vm513, %v3427, %v3344
    %v3429 = vrot.slane %v3344, 4
    %v3430 = vsel %vm513, %v3356, %v3429
    %v3432 = vunpack.c.l.s4 1983009808
    %v3433 = vunpack.c.0.s8 %v3432
    %v3434 = vperm.slane %v3428, %v3433
    %v3436 = vunpack.c.l.s4 1983009808
    %v3437 = vunpack.c.0.s8 %v3436
    %v3438 = vperm.slane %v3430, %v3437
    %v3439 = vrot.slane %v3434, 4
    %v3440 = vsel %vm513, %v3439, %v3422
    %v3441 = vrot.slane %v3422, 4
    %v3442 = vsel %vm513, %v3434, %v3441
    %v3444 = vunpack.c.l.s4 1934713408
    %v3445 = vunpack.c.0.s8 %v3444
    %v3446 = vperm.slane %v3440, %v3445
    %v3448 = vunpack.c.l.s4 1934713408
    %v3449 = vunpack.c.0.s8 %v3448
    %v3450 = vperm.slane %v3442, %v3449
    %v3451 = vrot.slane %v3438, 4
    %v3452 = vsel %vm513, %v3451, %v3426
    %v3453 = vrot.slane %v3426, 4
    %v3454 = vsel %vm513, %v3438, %v3453
    %v3456 = vunpack.c.l.s4 1934713408
    %v3457 = vunpack.c.0.s8 %v3456
    %v3458 = vperm.slane %v3452, %v3457
    %v3460 = vunpack.c.l.s4 1934713408
    %v3461 = vunpack.c.0.s8 %v3460
    %v3462 = vperm.slane %v3454, %v3461
    %v3463 = vrot.slane %v3446, 4
    %v3464 = vsel %vm513, 0.0, %v3463
    %v3465 = vrot.slane %v3450, 4
    %v3466 = vsel %vm513, 0.0, %v3465
    %v3467 = vrot.slane %v3458, 4
    %v3468 = vsel %vm513, 0.0, %v3467
    %v3469 = vrot.slane %v3462, 4
    %v3470 = vsel %vm513, 0.0, %v3469
    %3473 = vrot.lane.b32.xlu0 %v498, 120
    %v3474 = vpop.permute.xlu0 %3473
    %3475 = vrot.lane.b32.xlu0 %v500, 120
    %v3476 = vpop.permute.xlu0 %3475
    %3479 = vrot.lane.b32.xlu0 %v498, 112
    %v3480 = vpop.permute.xlu0 %3479
    %3481 = vrot.lane.b32.xlu0 %v500, 112
    %v3482 = vpop.permute.xlu0 %3481
    %3485 = vrot.lane.b32.xlu0 %v498, 104
    %v3486 = vpop.permute.xlu0 %3485
    %3487 = vrot.lane.b32.xlu0 %v500, 104
    %v3488 = vpop.permute.xlu0 %3487
    %v3491 = vrot.slane %v3480, 4
    %v3492 = vsel %vm513, %v3491, %v498
    %v3493 = vrot.slane %v498, 4
    %v3494 = vsel %vm513, %v3480, %v3493
    %v3496 = vunpack.c.l.s4 1983009808
    %v3497 = vunpack.c.0.s8 %v3496
    %v3498 = vperm.slane %v3492, %v3497
    %v3500 = vunpack.c.l.s4 1983009808
    %v3501 = vunpack.c.0.s8 %v3500
    %v3502 = vperm.slane %v3494, %v3501
    %v3503 = vrot.slane %v3486, 4
    %v3504 = vsel %vm513, %v3503, %v3474
    %v3505 = vrot.slane %v3474, 4
    %v3506 = vsel %vm513, %v3486, %v3505
    %v3508 = vunpack.c.l.s4 1983009808
    %v3509 = vunpack.c.0.s8 %v3508
    %v3510 = vperm.slane %v3504, %v3509
    %v3512 = vunpack.c.l.s4 1983009808
    %v3513 = vunpack.c.0.s8 %v3512
    %v3514 = vperm.slane %v3506, %v3513
    %v3515 = vrot.slane %v3510, 4
    %v3516 = vsel %vm513, %v3515, %v3498
    %v3517 = vrot.slane %v3498, 4
    %v3518 = vsel %vm513, %v3510, %v3517
    %v3520 = vunpack.c.l.s4 1934713408
    %v3521 = vunpack.c.0.s8 %v3520
    %v3522 = vperm.slane %v3516, %v3521
    %v3524 = vunpack.c.l.s4 1934713408
    %v3525 = vunpack.c.0.s8 %v3524
    %v3526 = vperm.slane %v3518, %v3525
    %v3527 = vrot.slane %v3514, 4
    %v3528 = vsel %vm513, %v3527, %v3502
    %v3529 = vrot.slane %v3502, 4
    %v3530 = vsel %vm513, %v3514, %v3529
    %v3532 = vunpack.c.l.s4 1934713408
    %v3533 = vunpack.c.0.s8 %v3532
    %v3534 = vperm.slane %v3528, %v3533
    %v3536 = vunpack.c.l.s4 1934713408
    %v3537 = vunpack.c.0.s8 %v3536
    %v3538 = vperm.slane %v3530, %v3537
    %v3539 = vrot.slane %v3522, 4
    %v3540 = vsel %vm513, 0.0, %v3539
    %v3541 = vrot.slane %v3526, 4
    %v3542 = vsel %vm513, 0.0, %v3541
    %v3543 = vrot.slane %v3534, 4
    %v3544 = vsel %vm513, 0.0, %v3543
    %v3545 = vrot.slane %v3538, 4
    %v3546 = vsel %vm513, 0.0, %v3545
    %v3547 = vrot.slane %v3482, 4
    %v3548 = vsel %vm513, %v3547, %v500
    %v3549 = vrot.slane %v500, 4
    %v3550 = vsel %vm513, %v3482, %v3549
    %v3552 = vunpack.c.l.s4 1983009808
    %v3553 = vunpack.c.0.s8 %v3552
    %v3554 = vperm.slane %v3548, %v3553
    %v3556 = vunpack.c.l.s4 1983009808
    %v3557 = vunpack.c.0.s8 %v3556
    %v3558 = vperm.slane %v3550, %v3557
    %v3559 = vrot.slane %v3488, 4
    %v3560 = vsel %vm513, %v3559, %v3476
    %v3561 = vrot.slane %v3476, 4
    %v3562 = vsel %vm513, %v3488, %v3561
    %v3564 = vunpack.c.l.s4 1983009808
    %v3565 = vunpack.c.0.s8 %v3564
    %v3566 = vperm.slane %v3560, %v3565
    %v3568 = vunpack.c.l.s4 1983009808
    %v3569 = vunpack.c.0.s8 %v3568
    %v3570 = vperm.slane %v3562, %v3569
    %v3571 = vrot.slane %v3566, 4
    %v3572 = vsel %vm513, %v3571, %v3554
    %v3573 = vrot.slane %v3554, 4
    %v3574 = vsel %vm513, %v3566, %v3573
    %v3576 = vunpack.c.l.s4 1934713408
    %v3577 = vunpack.c.0.s8 %v3576
    %v3578 = vperm.slane %v3572, %v3577
    %v3580 = vunpack.c.l.s4 1934713408
    %v3581 = vunpack.c.0.s8 %v3580
    %v3582 = vperm.slane %v3574, %v3581
    %v3583 = vrot.slane %v3570, 4
    %v3584 = vsel %vm513, %v3583, %v3558
    %v3585 = vrot.slane %v3558, 4
    %v3586 = vsel %vm513, %v3570, %v3585
    %v3588 = vunpack.c.l.s4 1934713408
    %v3589 = vunpack.c.0.s8 %v3588
    %v3590 = vperm.slane %v3584, %v3589
    %v3592 = vunpack.c.l.s4 1934713408
    %v3593 = vunpack.c.0.s8 %v3592
    %v3594 = vperm.slane %v3586, %v3593
    %v3595 = vrot.slane %v3578, 4
    %v3596 = vsel %vm513, 0.0, %v3595
    %v3597 = vrot.slane %v3582, 4
    %v3598 = vsel %vm513, 0.0, %v3597
    %v3599 = vrot.slane %v3590, 4
    %v3600 = vsel %vm513, 0.0, %v3599
    %v3601 = vrot.slane %v3594, 4
    %v3602 = vsel %vm513, 0.0, %v3601
    %v3603 = vsel %vm513, %v3409, %v3390
    %v3605 = vunpack.c.l.s4 1983009808
    %v3606 = vunpack.c.0.s8 %v3605
    %v3607 = vperm.slane %v3603, %v3606
    %v3608 = vrot.slane %v3410, 4
    %v3609 = vsel %vm513, %v3608, %v3408
    %v3611 = vunpack.c.l.s4 1983009808
    %v3612 = vunpack.c.0.s8 %v3611
    %v3613 = vperm.slane %v3609, %v3612
    %v3614 = vsel %vm513, %v3413, %v3402
    %v3616 = vunpack.c.l.s4 1983009808
    %v3617 = vunpack.c.0.s8 %v3616
    %v3618 = vperm.slane %v3614, %v3617
    %v3619 = vrot.slane %v3414, 4
    %v3620 = vsel %vm513, %v3619, %v3412
    %v3622 = vunpack.c.l.s4 1983009808
    %v3623 = vunpack.c.0.s8 %v3622
    %v3624 = vperm.slane %v3620, %v3623
    %v3625 = vrot.slane %v3613, 4
    %v3626 = vsel %vm513, %v3625, %v3607
    %v3627 = vrot.slane %v3607, 4
    %v3628 = vsel %vm513, %v3613, %v3627
    %v3630 = vunpack.c.l.s4 1934713408
    %v3631 = vunpack.c.0.s8 %v3630
    %v3632 = vperm.slane %v3626, %v3631
    %v3634 = vunpack.c.l.s4 1934713408
    %v3635 = vunpack.c.0.s8 %v3634
    %v3636 = vperm.slane %v3628, %v3635
    %v3637 = vrot.slane %v3624, 4
    %v3638 = vsel %vm513, %v3637, %v3618
    %v3639 = vrot.slane %v3618, 4
    %v3640 = vsel %vm513, %v3624, %v3639
    %v3642 = vunpack.c.l.s4 1934713408
    %v3643 = vunpack.c.0.s8 %v3642
    %v3644 = vperm.slane %v3638, %v3643
    %v3646 = vunpack.c.l.s4 1934713408
    %v3647 = vunpack.c.0.s8 %v3646
    %v3648 = vperm.slane %v3640, %v3647
    %v3649 = vrot.slane %v3644, 4
    %v3650 = vsel %vm513, %v3649, %v3632
    %v3651 = vrot.slane %v3632, 4
    %v3652 = vsel %vm513, %v3644, %v3651
    %v3653 = vrot.slane %v3648, 4
    %v3654 = vsel %vm513, %v3653, %v3636
    %v3655 = vrot.slane %v3636, 4
    %v3656 = vsel %vm513, %v3648, %v3655
    %v3657 = vsel %vm513, %v3465, %v3446
    %v3659 = vunpack.c.l.s4 1983009808
    %v3660 = vunpack.c.0.s8 %v3659
    %v3661 = vperm.slane %v3657, %v3660
    %v3662 = vrot.slane %v3466, 4
    %v3663 = vsel %vm513, %v3662, %v3464
    %v3665 = vunpack.c.l.s4 1983009808
    %v3666 = vunpack.c.0.s8 %v3665
    %v3667 = vperm.slane %v3663, %v3666
    %v3668 = vsel %vm513, %v3469, %v3458
    %v3670 = vunpack.c.l.s4 1983009808
    %v3671 = vunpack.c.0.s8 %v3670
    %v3672 = vperm.slane %v3668, %v3671
    %v3673 = vrot.slane %v3470, 4
    %v3674 = vsel %vm513, %v3673, %v3468
    %v3676 = vunpack.c.l.s4 1983009808
    %v3677 = vunpack.c.0.s8 %v3676
    %v3678 = vperm.slane %v3674, %v3677
    %v3679 = vrot.slane %v3667, 4
    %v3680 = vsel %vm513, %v3679, %v3661
    %v3681 = vrot.slane %v3661, 4
    %v3682 = vsel %vm513, %v3667, %v3681
    %v3684 = vunpack.c.l.s4 1934713408
    %v3685 = vunpack.c.0.s8 %v3684
    %v3686 = vperm.slane %v3680, %v3685
    %v3688 = vunpack.c.l.s4 1934713408
    %v3689 = vunpack.c.0.s8 %v3688
    %v3690 = vperm.slane %v3682, %v3689
    %v3691 = vrot.slane %v3678, 4
    %v3692 = vsel %vm513, %v3691, %v3672
    %v3693 = vrot.slane %v3672, 4
    %v3694 = vsel %vm513, %v3678, %v3693
    %v3696 = vunpack.c.l.s4 1934713408
    %v3697 = vunpack.c.0.s8 %v3696
    %v3698 = vperm.slane %v3692, %v3697
    %v3700 = vunpack.c.l.s4 1934713408
    %v3701 = vunpack.c.0.s8 %v3700
    %v3702 = vperm.slane %v3694, %v3701
    %v3703 = vrot.slane %v3698, 4
    %v3704 = vsel %vm513, %v3703, %v3686
    %v3705 = vrot.slane %v3686, 4
    %v3706 = vsel %vm513, %v3698, %v3705
    %v3707 = vrot.slane %v3702, 4
    %v3708 = vsel %vm513, %v3707, %v3690
    %v3709 = vrot.slane %v3690, 4
    %v3710 = vsel %vm513, %v3702, %v3709
    %v3711 = vpack.c.bf16 %v3650, %v3650
    %v3712 = vpack.c.bf16 %v3704, %v3704
    %v3713 = vpack.c.bf16 %v3652, %v3652
    %v3714 = vpack.c.bf16 %v3706, %v3706
    %v3715 = vpack.c.bf16 %v3654, %v3654
    %v3716 = vpack.c.bf16 %v3708, %v3708
    %v3717 = vpack.c.bf16 %v3656, %v3656
    %v3718 = vpack.c.bf16 %v3710, %v3710
    %v3719 = vsel %vm513, %v3541, %v3522
    %v3721 = vunpack.c.l.s4 1983009808
    %v3722 = vunpack.c.0.s8 %v3721
    %v3723 = vperm.slane %v3719, %v3722
    %v3724 = vrot.slane %v3542, 4
    %v3725 = vsel %vm513, %v3724, %v3540
    %v3727 = vunpack.c.l.s4 1983009808
    %v3728 = vunpack.c.0.s8 %v3727
    %v3729 = vperm.slane %v3725, %v3728
    %v3730 = vsel %vm513, %v3545, %v3534
    %v3732 = vunpack.c.l.s4 1983009808
    %v3733 = vunpack.c.0.s8 %v3732
    %v3734 = vperm.slane %v3730, %v3733
    %v3735 = vrot.slane %v3546, 4
    %v3736 = vsel %vm513, %v3735, %v3544
    %v3738 = vunpack.c.l.s4 1983009808
    %v3739 = vunpack.c.0.s8 %v3738
    %v3740 = vperm.slane %v3736, %v3739
    %v3741 = vrot.slane %v3729, 4
    %v3742 = vsel %vm513, %v3741, %v3723
    %v3743 = vrot.slane %v3723, 4
    %v3744 = vsel %vm513, %v3729, %v3743
    %v3746 = vunpack.c.l.s4 1934713408
    %v3747 = vunpack.c.0.s8 %v3746
    %v3748 = vperm.slane %v3742, %v3747
    %v3750 = vunpack.c.l.s4 1934713408
    %v3751 = vunpack.c.0.s8 %v3750
    %v3752 = vperm.slane %v3744, %v3751
    %v3753 = vrot.slane %v3740, 4
    %v3754 = vsel %vm513, %v3753, %v3734
    %v3755 = vrot.slane %v3734, 4
    %v3756 = vsel %vm513, %v3740, %v3755
    %v3758 = vunpack.c.l.s4 1934713408
    %v3759 = vunpack.c.0.s8 %v3758
    %v3760 = vperm.slane %v3754, %v3759
    %v3762 = vunpack.c.l.s4 1934713408
    %v3763 = vunpack.c.0.s8 %v3762
    %v3764 = vperm.slane %v3756, %v3763
    %v3765 = vrot.slane %v3760, 4
    %v3766 = vsel %vm513, %v3765, %v3748
    %v3767 = vrot.slane %v3748, 4
    %v3768 = vsel %vm513, %v3760, %v3767
    %v3769 = vrot.slane %v3764, 4
    %v3770 = vsel %vm513, %v3769, %v3752
    %v3771 = vrot.slane %v3752, 4
    %v3772 = vsel %vm513, %v3764, %v3771
    %v3773 = vsel %vm513, %v3597, %v3578
    %v3775 = vunpack.c.l.s4 1983009808
    %v3776 = vunpack.c.0.s8 %v3775
    %v3777 = vperm.slane %v3773, %v3776
    %v3778 = vrot.slane %v3598, 4
    %v3779 = vsel %vm513, %v3778, %v3596
    %v3781 = vunpack.c.l.s4 1983009808
    %v3782 = vunpack.c.0.s8 %v3781
    %v3783 = vperm.slane %v3779, %v3782
    %v3784 = vsel %vm513, %v3601, %v3590
    %v3786 = vunpack.c.l.s4 1983009808
    %v3787 = vunpack.c.0.s8 %v3786
    %v3788 = vperm.slane %v3784, %v3787
    %v3789 = vrot.slane %v3602, 4
    %v3790 = vsel %vm513, %v3789, %v3600
    %v3792 = vunpack.c.l.s4 1983009808
    %v3793 = vunpack.c.0.s8 %v3792
    %v3794 = vperm.slane %v3790, %v3793
    %v3795 = vrot.slane %v3783, 4
    %v3796 = vsel %vm513, %v3795, %v3777
    %v3797 = vrot.slane %v3777, 4
    %v3798 = vsel %vm513, %v3783, %v3797
    %v3800 = vunpack.c.l.s4 1934713408
    %v3801 = vunpack.c.0.s8 %v3800
    %v3802 = vperm.slane %v3796, %v3801
    %v3804 = vunpack.c.l.s4 1934713408
    %v3805 = vunpack.c.0.s8 %v3804
    %v3806 = vperm.slane %v3798, %v3805
    %v3807 = vrot.slane %v3794, 4
    %v3808 = vsel %vm513, %v3807, %v3788
    %v3809 = vrot.slane %v3788, 4
    %v3810 = vsel %vm513, %v3794, %v3809
    %v3812 = vunpack.c.l.s4 1934713408
    %v3813 = vunpack.c.0.s8 %v3812
    %v3814 = vperm.slane %v3808, %v3813
    %v3816 = vunpack.c.l.s4 1934713408
    %v3817 = vunpack.c.0.s8 %v3816
    %v3818 = vperm.slane %v3810, %v3817
    %v3819 = vrot.slane %v3814, 4
    %v3820 = vsel %vm513, %v3819, %v3802
    %v3821 = vrot.slane %v3802, 4
    %v3822 = vsel %vm513, %v3814, %v3821
    %v3823 = vrot.slane %v3818, 4
    %v3824 = vsel %vm513, %v3823, %v3806
    %v3825 = vrot.slane %v3806, 4
    %v3826 = vsel %vm513, %v3818, %v3825
    %v3827 = vpack.c.bf16 %v3766, %v3766
    %v3828 = vpack.c.bf16 %v3820, %v3820
    %v3829 = vpack.c.bf16 %v3768, %v3768
    %v3830 = vpack.c.bf16 %v3822, %v3822
    %v3831 = vpack.c.bf16 %v3770, %v3770
    %v3832 = vpack.c.bf16 %v3824, %v3824
    %v3833 = vpack.c.bf16 %v3772, %v3772
    %v3834 = vpack.c.bf16 %v3826, %v3826
    %v3837 = vunpack.c.l.b16 %v3711
    %v3838 = vunpack.c.l.b16 %v3712
    %v3839 = vpack.c.b16 %v3838, %v3837
    %v3841 = vsel %vm1128, %v3839, 0
    %3843 = vmatpush.bf16.xpose.msra.mxu0 0
    %3844 = vmatpush.bf16.xpose.msra.mxu0 0
    %3845 = vmatpush.bf16.xpose.msra.mxu0 0
    %3846 = vmatpush.bf16.xpose.msra.mxu0 0
    %3847 = vmatpush.bf16.xpose.msra.mxu0 0
    %3848 = vmatpush.bf16.xpose.msra.mxu0 0
    %3849 = vmatpush.bf16.xpose.msra.mxu0 0
    %3850 = vmatpush.bf16.xpose.msra.mxu0 %v3841
    %3851 = vmatmul.bf16.gmra.mxu0 %v2109
    %v3852 = vpop.f32.mrf.mxu0
    %v3853 = vadd.f32 0.0, %v3852
    %v3854 = vpop.f32.mrf.mxu0
    %3855 = vdwg.mxu0
    %v3858 = vunpack.c.l.b16 %v3713
    %v3859 = vunpack.c.l.b16 %v3714
    %v3860 = vpack.c.b16 %v3859, %v3858
    %v3862 = vsel %vm1128, %v3860, 0
    %3864 = vmatpush.bf16.xpose.msra.mxu0 0
    %3865 = vmatpush.bf16.xpose.msra.mxu0 0
    %3866 = vmatpush.bf16.xpose.msra.mxu0 0
    %3867 = vmatpush.bf16.xpose.msra.mxu0 0
    %3868 = vmatpush.bf16.xpose.msra.mxu0 0
    %3869 = vmatpush.bf16.xpose.msra.mxu0 0
    %3870 = vmatpush.bf16.xpose.msra.mxu0 0
    %3871 = vmatpush.bf16.xpose.msra.mxu0 %v3862
    %3872 = vmatmul.bf16.gmra.mxu0 %v2133
    %v3873 = vpop.f32.mrf.mxu0
    %v3874 = vadd.f32 0.0, %v3873
    %v3875 = vpop.f32.mrf.mxu0
    %3876 = vdwg.mxu0
    %v3879 = vunpack.c.l.b16 %v3715
    %v3880 = vunpack.c.l.b16 %v3716
    %v3881 = vpack.c.b16 %v3880, %v3879
    %v3883 = vsel %vm1128, %v3881, 0
    %3885 = vmatpush.bf16.xpose.msra.mxu0 0
    %3886 = vmatpush.bf16.xpose.msra.mxu0 0
    %3887 = vmatpush.bf16.xpose.msra.mxu0 0
    %3888 = vmatpush.bf16.xpose.msra.mxu0 0
    %3889 = vmatpush.bf16.xpose.msra.mxu0 0
    %3890 = vmatpush.bf16.xpose.msra.mxu0 0
    %3891 = vmatpush.bf16.xpose.msra.mxu0 0
    %3892 = vmatpush.bf16.xpose.msra.mxu0 %v3883
    %3893 = vmatmul.bf16.gmra.mxu0 %v2157
    %v3894 = vpop.f32.mrf.mxu0
    %v3895 = vadd.f32 0.0, %v3894
    %v3896 = vpop.f32.mrf.mxu0
    %3897 = vdwg.mxu0
    %v3900 = vunpack.c.l.b16 %v3717
    %v3901 = vunpack.c.l.b16 %v3718
    %v3902 = vpack.c.b16 %v3901, %v3900
    %v3904 = vsel %vm1128, %v3902, 0
    %3906 = vmatpush.bf16.xpose.msra.mxu0 0
    %3907 = vmatpush.bf16.xpose.msra.mxu0 0
    %3908 = vmatpush.bf16.xpose.msra.mxu0 0
    %3909 = vmatpush.bf16.xpose.msra.mxu0 0
    %3910 = vmatpush.bf16.xpose.msra.mxu0 0
    %3911 = vmatpush.bf16.xpose.msra.mxu0 0
    %3912 = vmatpush.bf16.xpose.msra.mxu0 0
    %3913 = vmatpush.bf16.xpose.msra.mxu0 %v3904
    %3914 = vmatmul.bf16.gmra.mxu0 %v2181
    %v3915 = vpop.f32.mrf.mxu0
    %v3916 = vadd.f32 0.0, %v3915
    %v3917 = vpop.f32.mrf.mxu0
    %3918 = vdwg.mxu0
    %v3919 = vsel %vm1220, %v3853, -inf
    %3920 = vmax.xlane.f32.xlu0 %v3919
    %v3921 = vpop.xlane.xlu0 %3920
    %v3922 = vsel %vm1220, %v3874, -inf
    %3923 = vmax.xlane.f32.xlu0 %v3922
    %v3924 = vpop.xlane.xlu0 %3923
    %v3925 = vsel %vm1220, %v3895, -inf
    %3926 = vmax.xlane.f32.xlu0 %v3925
    %v3927 = vpop.xlane.xlu0 %3926
    %v3928 = vsel %vm1220, %v3916, -inf
    %3929 = vmax.xlane.f32.xlu0 %v3928
    %v3930 = vpop.xlane.xlu0 %3929
    %v3931 = vsub.f32 %v3853, %v3921
    %v3932 = vsub.f32 %v3874, %v3924
    %v3933 = vsub.f32 %v3895, %v3927
    %v3934 = vsub.f32 %v3916, %v3930
    %v3935 = vmul.f32 %v3931, 1.442695
    %v3936 = vpow.pop %v3935
    %v3937 = vmul.f32 %v3932, 1.442695
    %v3938 = vpow.pop %v3937
    %v3939 = vmul.f32 %v3933, 1.442695
    %v3940 = vpow.pop %v3939
    %v3941 = vmul.f32 %v3934, 1.442695
    %v3942 = vpow.pop %v3941
    %v3943 = vsel %vm1220, %v3936, 0.0
    %3944 = vadd.xlane.f32.xlu0 %v3943
    %v3945 = vpop.xlane.xlu0 %3944
    %v3946 = vsel %vm1220, %v3938, 0.0
    %3947 = vadd.xlane.f32.xlu0 %v3946
    %v3948 = vpop.xlane.xlu0 %3947
    %v3949 = vsel %vm1220, %v3940, 0.0
    %3950 = vadd.xlane.f32.xlu0 %v3949
    %v3951 = vpop.xlane.xlu0 %3950
    %v3952 = vsel %vm1220, %v3942, 0.0
    %3953 = vadd.xlane.f32.xlu0 %v3952
    %v3954 = vpop.xlane.xlu0 %3953
    %v3955 = vrcp.pop %v3945
    %v3956 = vrcp.pop %v3948
    %v3957 = vrcp.pop %v3951
    %v3958 = vrcp.pop %v3954
    %v3959 = vmul.f32 %v3936, %v3955
    %v3960 = vmul.f32 %v3938, %v3956
    %v3961 = vmul.f32 %v3940, %v3957
    %v3962 = vmul.f32 %v3942, %v3958
    %v3963 = vpack.c.bf16 %v3959, %v3959
    %v3964 = vpack.c.bf16 %v3960, %v3960
    %v3965 = vpack.c.bf16 %v3961, %v3961
    %v3966 = vpack.c.bf16 %v3962, %v3962
    %v3969 = vunpack.c.l.b16 %v3827
    %v3970 = vunpack.c.l.b16 %v3828
    %v3971 = vpack.c.b16 %v3970, %v3969
    %v3974 = vsel %vm1220, %v3963, 0
    %3976 = vmatpush.bf16.msra.mxu0 0
    %3977 = vmatpush.bf16.msra.mxu0 0
    %3978 = vmatpush.bf16.msra.mxu0 0
    %3979 = vmatpush.bf16.msra.mxu0 0
    %3980 = vmatpush.bf16.msra.mxu0 0
    %3981 = vmatpush.bf16.msra.mxu0 0
    %3982 = vmatpush.bf16.msra.mxu0 0
    %3983 = vmatpush.bf16.msra.mxu0 %v3971
    %3984 = vmatmul.bf16.gmra.mxu0 %v3974
    %v3985 = vpop.f32.mrf.mxu0
    %v3986 = vadd.f32 0.0, %v3985
    %v3987 = vpop.f32.mrf.mxu0
    %3988 = vdwg.mxu0
    %v3991 = vunpack.c.l.b16 %v3829
    %v3992 = vunpack.c.l.b16 %v3830
    %v3993 = vpack.c.b16 %v3992, %v3991
    %v3996 = vsel %vm1220, %v3964, 0
    %3998 = vmatpush.bf16.msra.mxu0 0
    %3999 = vmatpush.bf16.msra.mxu0 0
    %4000 = vmatpush.bf16.msra.mxu0 0
    %4001 = vmatpush.bf16.msra.mxu0 0
    %4002 = vmatpush.bf16.msra.mxu0 0
    %4003 = vmatpush.bf16.msra.mxu0 0
    %4004 = vmatpush.bf16.msra.mxu0 0
    %4005 = vmatpush.bf16.msra.mxu0 %v3993
    %4006 = vmatmul.bf16.gmra.mxu0 %v3996
    %v4007 = vpop.f32.mrf.mxu0
    %v4008 = vadd.f32 0.0, %v4007
    %v4009 = vpop.f32.mrf.mxu0
    %4010 = vdwg.mxu0
    %v4013 = vunpack.c.l.b16 %v3831
    %v4014 = vunpack.c.l.b16 %v3832
    %v4015 = vpack.c.b16 %v4014, %v4013
    %v4018 = vsel %vm1220, %v3965, 0
    %4020 = vmatpush.bf16.msra.mxu0 0
    %4021 = vmatpush.bf16.msra.mxu0 0
    %4022 = vmatpush.bf16.msra.mxu0 0
    %4023 = vmatpush.bf16.msra.mxu0 0
    %4024 = vmatpush.bf16.msra.mxu0 0
    %4025 = vmatpush.bf16.msra.mxu0 0
    %4026 = vmatpush.bf16.msra.mxu0 0
    %4027 = vmatpush.bf16.msra.mxu0 %v4015
    %4028 = vmatmul.bf16.gmra.mxu0 %v4018
    %v4029 = vpop.f32.mrf.mxu0
    %v4030 = vadd.f32 0.0, %v4029
    %v4031 = vpop.f32.mrf.mxu0
    %4032 = vdwg.mxu0
    %v4035 = vunpack.c.l.b16 %v3833
    %v4036 = vunpack.c.l.b16 %v3834
    %v4037 = vpack.c.b16 %v4036, %v4035
    %v4040 = vsel %vm1220, %v3966, 0
    %4042 = vmatpush.bf16.msra.mxu0 0
    %4043 = vmatpush.bf16.msra.mxu0 0
    %4044 = vmatpush.bf16.msra.mxu0 0
    %4045 = vmatpush.bf16.msra.mxu0 0
    %4046 = vmatpush.bf16.msra.mxu0 0
    %4047 = vmatpush.bf16.msra.mxu0 0
    %4048 = vmatpush.bf16.msra.mxu0 0
    %4049 = vmatpush.bf16.msra.mxu0 %v4037
    %4050 = vmatmul.bf16.gmra.mxu0 %v4040
    %v4051 = vpop.f32.mrf.mxu0
    %v4052 = vadd.f32 0.0, %v4051
    %v4053 = vpop.f32.mrf.mxu0
    %4054 = vdwg.mxu0
    %v4055 = vrot.slane %v4030, 4
    %v4056 = vsel %vm513, %v4055, %v3986
    %v4057 = vrot.slane %v3986, 4
    %v4058 = vsel %vm513, %v4030, %v4057
    %v4060 = vunpack.c.l.s4 1983009808
    %v4061 = vunpack.c.0.s8 %v4060
    %v4062 = vperm.slane %v4056, %v4061
    %v4064 = vunpack.c.l.s4 1983009808
    %v4065 = vunpack.c.0.s8 %v4064
    %v4066 = vperm.slane %v4058, %v4065
    %v4067 = vrot.slane %v4052, 4
    %v4068 = vsel %vm513, %v4067, %v4008
    %v4069 = vrot.slane %v4008, 4
    %v4070 = vsel %vm513, %v4052, %v4069
    %v4072 = vunpack.c.l.s4 1983009808
    %v4073 = vunpack.c.0.s8 %v4072
    %v4074 = vperm.slane %v4068, %v4073
    %v4076 = vunpack.c.l.s4 1983009808
    %v4077 = vunpack.c.0.s8 %v4076
    %v4078 = vperm.slane %v4070, %v4077
    %v4079 = vrot.slane %v4074, 4
    %v4080 = vsel %vm513, %v4079, %v4062
    %v4081 = vrot.slane %v4062, 4
    %v4082 = vsel %vm513, %v4074, %v4081
    %v4084 = vunpack.c.l.s4 1934713408
    %v4085 = vunpack.c.0.s8 %v4084
    %v4086 = vperm.slane %v4080, %v4085
    %v4088 = vunpack.c.l.s4 1934713408
    %v4089 = vunpack.c.0.s8 %v4088
    %v4090 = vperm.slane %v4082, %v4089
    %v4091 = vrot.slane %v4078, 4
    %v4092 = vsel %vm513, %v4091, %v4066
    %v4093 = vrot.slane %v4066, 4
    %v4094 = vsel %vm513, %v4078, %v4093
    %v4096 = vunpack.c.l.s4 1934713408
    %v4097 = vunpack.c.0.s8 %v4096
    %v4098 = vperm.slane %v4092, %v4097
    %v4100 = vunpack.c.l.s4 1934713408
    %v4101 = vunpack.c.0.s8 %v4100
    %v4102 = vperm.slane %v4094, %v4101
    %v4103 = vrot.slane %v4086, 4
    %v4104 = vsel %vm513, 0.0, %v4103
    %v4105 = vrot.slane %v4090, 4
    %v4106 = vsel %vm513, 0.0, %v4105
    %v4107 = vrot.slane %v4098, 4
    %v4108 = vsel %vm513, 0.0, %v4107
    %v4109 = vrot.slane %v4102, 4
    %v4110 = vsel %vm513, 0.0, %v4109
    %v4111 = vsel %vm513, %v4105, %v4086
    %v4113 = vunpack.c.l.s4 1983009808
    %v4114 = vunpack.c.0.s8 %v4113
    %v4115 = vperm.slane %v4111, %v4114
    %v4116 = vrot.slane %v4106, 4
    %v4117 = vsel %vm513, %v4116, %v4104
    %v4119 = vunpack.c.l.s4 1983009808
    %v4120 = vunpack.c.0.s8 %v4119
    %v4121 = vperm.slane %v4117, %v4120
    %v4122 = vsel %vm513, %v4109, %v4098
    %v4124 = vunpack.c.l.s4 1983009808
    %v4125 = vunpack.c.0.s8 %v4124
    %v4126 = vperm.slane %v4122, %v4125
    %v4127 = vrot.slane %v4110, 4
    %v4128 = vsel %vm513, %v4127, %v4108
    %v4130 = vunpack.c.l.s4 1983009808
    %v4131 = vunpack.c.0.s8 %v4130
    %v4132 = vperm.slane %v4128, %v4131
    %v4133 = vrot.slane %v4121, 4
    %v4134 = vsel %vm513, %v4133, %v4115
    %v4135 = vrot.slane %v4115, 4
    %v4136 = vsel %vm513, %v4121, %v4135
    %v4138 = vunpack.c.l.s4 1934713408
    %v4139 = vunpack.c.0.s8 %v4138
    %v4140 = vperm.slane %v4134, %v4139
    %v4142 = vunpack.c.l.s4 1934713408
    %v4143 = vunpack.c.0.s8 %v4142
    %v4144 = vperm.slane %v4136, %v4143
    %v4145 = vrot.slane %v4132, 4
    %v4146 = vsel %vm513, %v4145, %v4126
    %v4147 = vrot.slane %v4126, 4
    %v4148 = vsel %vm513, %v4132, %v4147
    %v4150 = vunpack.c.l.s4 1934713408
    %v4151 = vunpack.c.0.s8 %v4150
    %v4152 = vperm.slane %v4146, %v4151
    %v4154 = vunpack.c.l.s4 1934713408
    %v4155 = vunpack.c.0.s8 %v4154
    %v4156 = vperm.slane %v4148, %v4155
    %v4157 = vrot.slane %v4152, 4
    %v4158 = vsel %vm513, %v4157, %v4140
    %v4159 = vrot.slane %v4140, 4
    %v4160 = vsel %vm513, %v4152, %v4159
    %v4161 = vrot.slane %v4156, 4
    %v4162 = vsel %vm513, %v4161, %v4144
    %v4163 = vrot.slane %v4144, 4
    %v4164 = vsel %vm513, %v4156, %v4163
    %4166 = vrot.lane.b32.xlu0 %v4160, 8
    %v4167 = vpop.permute.xlu0 %4166
    %4170 = vrot.lane.b32.xlu0 %v4162, 16
    %v4171 = vpop.permute.xlu0 %4170
    %4174 = vrot.lane.b32.xlu0 %v4164, 24
    %v4175 = vpop.permute.xlu0 %4174
    %v4177 = vsel %vm1128, %v4158, %v4167
    %v4178 = vsel %vm1220, %v4177, %v4171
    %v4179 = vsel %vm1481, %v4178, %v4175
    %v4180 = vpack.c.bf16 %v4179, %v3338
    %v4181 = vld [vmem:[#allocation17] sm:$0xf]
    %v4182 = vld [vmem:[#allocation17 + $0x4] sm:$0xf]
    %v4183 = vld [vmem:[#allocation17 + $0x8] sm:$0xf]
    %v4184 = vld [vmem:[#allocation17 + $0xc] sm:$0xf]
    %v4185 = vld [vmem:[#allocation19] sm:$0x1]
    %v4187 = vperm.slane %v4185, 0
    %v4193 = vunpack.c.l.b16 %v4181
    %v4194 = vunpack.c.l.b16 %v4182
    %v4195 = vunpack.c.l.b16 %v4183
    %v4196 = vunpack.c.l.b16 %v4184
    %v4197 = vpack.c.b16 %v4194, %v4193
    %v4198 = vpack.c.b16 %v4196, %v4195
    %v4202 = vsel %vm328, %v4180, 0
    %4204 = vmatpush.bf16.msra.mxu0 0
    %4205 = vmatpush.bf16.msra.mxu0 0
    %4206 = vmatpush.bf16.msra.mxu0 0
    %4207 = vmatpush.bf16.msra.mxu0 0
    %4208 = vmatpush.bf16.msra.mxu0 0
    %4209 = vmatpush.bf16.msra.mxu0 0
    %4210 = vmatpush.bf16.msra.mxu0 %v4198
    %4211 = vmatpush.bf16.msra.mxu0 %v4197
    %4212 = vmatmul.bf16.gmra.mxu0 %v4202
    %v4213 = vpop.f32.mrf.mxu0
    %v4214 = vadd.f32 %v4187, %v4213
    %v4215 = vpop.f32.mrf.mxu0
    %v4216 = vadd.f32 %v4187, %v4215
    %4217 = vdwg.mxu0
    %v4218 = vadd.f32 %v289, %v2494
    %v4219 = vadd.f32 %v290, %v2496
    %v4220 = vsel %vm328, %v4218, 0.0
    %4221 = vadd.xlane.f32.xlu0 %v4220
    %v4222 = vpop.xlane.xlu0 %4221
    %v4223 = vsel %vm328, %v4219, 0.0
    %4224 = vadd.xlane.f32.xlu0 %v4223
    %v4225 = vpop.xlane.xlu0 %4224
    %v4226 = vrcp.pop 32.0
    %v4227 = vmul.f32 32.0, %v4226
    %v4228 = vsub.f32 1.0, %v4227
    %v4229 = vmul.f32 %v4226, %v4228
    %v4230 = vadd.f32 %v4226, %v4229
    %vm4231 = vweird.f32 %v4226
    %v4232 = vsel %vm4231, %v4226, %v4230
    %v4233 = vmul.f32 %v4222, %v4232
    %v4234 = vmul.f32 %v4225, %v4232
    %v4235 = vsub.f32 %v4218, %v4233
    %v4236 = vsub.f32 %v4219, %v4234
    %v4237 = vmul.f32 %v4235, %v4235
    %v4238 = vmul.f32 %v4236, %v4236
    %v4239 = vsel %vm328, %v4237, 0.0
    %4240 = vadd.xlane.f32.xlu0 %v4239
    %v4241 = vpop.xlane.xlu0 %4240
    %v4242 = vsel %vm328, %v4238, 0.0
    %4243 = vadd.xlane.f32.xlu0 %v4242
    %v4244 = vpop.xlane.xlu0 %4243
    %v4245 = vmul.f32 %v4241, %v4232
    %v4246 = vmul.f32 %v4244, %v4232
    %v4247 = vadd.f32 %v4245, 1e-05
    %v4248 = vadd.f32 %v4246, 1e-05
    %v4249 = vrsqrt.pop %v4247
    %v4250 = vmul.f32 %v4249, %v4247
    %v4251 = vmul.f32 %v4250, %v4249
    %v4252 = vmul.f32 0.5, %v4251
    %v4253 = vsub.f32 1.5, %v4252
    %v4254 = vmul.f32 %v4249, %v4253
    %vm4255 = vweird.f32 %v4247
    %vm4256 = vweird.f32 %v4249
    %vm4257 = vmor %vm4255, %vm4256
    %v4258 = vsel %vm4257, %v4249, %v4254
    %v4259 = vrsqrt.pop %v4248
    %v4260 = vmul.f32 %v4259, %v4248
    %v4261 = vmul.f32 %v4260, %v4259
    %v4262 = vmul.f32 0.5, %v4261
    %v4263 = vsub.f32 1.5, %v4262
    %v4264 = vmul.f32 %v4259, %v4263
    %vm4265 = vweird.f32 %v4248
    %vm4266 = vweird.f32 %v4259
    %vm4267 = vmor %vm4265, %vm4266
    %v4268 = vsel %vm4267, %v4259, %v4264
    %v4269 = vmul.f32 %v4235, %v4258
    %v4270 = vmul.f32 %v4236, %v4268
    %v4271 = vld [vmem:[#allocation20] sm:$0x1]
    %v4273 = vperm.slane %v4271, 0
    %v4275 = vmul.f32 %v4269, %v4273
    %v4276 = vmul.f32 %v4270, %v4273
    %v4277 = vld [vmem:[#allocation22] sm:$0x1]
    %v4279 = vperm.slane %v4277, 0
    %v4281 = vadd.f32 %v4275, %v4279
    %v4282 = vadd.f32 %v4276, %v4279
    %v4283 = vadd.f32 %v289, %v4214
    %v4284 = vadd.f32 %v290, %v4216
    %v4285 = vsel %vm328, %v4283, 0.0
    %4286 = vadd.xlane.f32.xlu0 %v4285
    %v4287 = vpop.xlane.xlu0 %4286
    %v4288 = vsel %vm328, %v4284, 0.0
    %4289 = vadd.xlane.f32.xlu0 %v4288
    %v4290 = vpop.xlane.xlu0 %4289
    %v4291 = vmul.f32 %v4287, %v4232
    %v4292 = vmul.f32 %v4290, %v4232
    %v4293 = vsub.f32 %v4283, %v4291
    %v4294 = vsub.f32 %v4284, %v4292
    %v4295 = vmul.f32 %v4293, %v4293
    %v4296 = vmul.f32 %v4294, %v4294
    %v4297 = vsel %vm328, %v4295, 0.0
    %4298 = vadd.xlane.f32.xlu0 %v4297
    %v4299 = vpop.xlane.xlu0 %4298
    %v4300 = vsel %vm328, %v4296, 0.0
    %4301 = vadd.xlane.f32.xlu0 %v4300
    %v4302 = vpop.xlane.xlu0 %4301
    %v4303 = vmul.f32 %v4299, %v4232
    %v4304 = vmul.f32 %v4302, %v4232
    %v4305 = vadd.f32 %v4303, 1e-05
    %v4306 = vadd.f32 %v4304, 1e-05
    %v4307 = vrsqrt.pop %v4305
    %v4308 = vmul.f32 %v4307, %v4305
    %v4309 = vmul.f32 %v4308, %v4307
    %v4310 = vmul.f32 0.5, %v4309
    %v4311 = vsub.f32 1.5, %v4310
    %v4312 = vmul.f32 %v4307, %v4311
    %vm4313 = vweird.f32 %v4305
    %vm4314 = vweird.f32 %v4307
    %vm4315 = vmor %vm4313, %vm4314
    %v4316 = vsel %vm4315, %v4307, %v4312
    %v4317 = vrsqrt.pop %v4306
    %v4318 = vmul.f32 %v4317, %v4306
    %v4319 = vmul.f32 %v4318, %v4317
    %v4320 = vmul.f32 0.5, %v4319
    %v4321 = vsub.f32 1.5, %v4320
    %v4322 = vmul.f32 %v4317, %v4321
    %vm4323 = vweird.f32 %v4306
    %vm4324 = vweird.f32 %v4317
    %vm4325 = vmor %vm4323, %vm4324
    %v4326 = vsel %vm4325, %v4317, %v4322
    %v4327 = vmul.f32 %v4293, %v4316
    %v4328 = vmul.f32 %v4294, %v4326
    %v4329 = vmul.f32 %v4327, %v4273
    %v4330 = vmul.f32 %v4328, %v4273
    %v4331 = vadd.f32 %v4329, %v4279
    %v4332 = vadd.f32 %v4330, %v4279
    %v4333 = vadd.f32 %v4281, %v4331
    %v4334 = vadd.f32 %v4282, %v4332
    %v4335 = vpack.c.bf16 %v4334, %v4333
    %v4336 = vld [vmem:[#allocation23] sm:$0xf]
    %v4337 = vld [vmem:[#allocation23 + $0x4] sm:$0xf]
    %v4338 = vld [vmem:[#allocation23 + $0x8] sm:$0xf]
    %v4339 = vld [vmem:[#allocation23 + $0xc] sm:$0xf]
    %v4340 = vld [vmem:[#allocation25] sm:$0x1]
    %v4342 = vperm.slane %v4340, 0
    %v4348 = vunpack.c.l.b16 %v4336
    %v4349 = vunpack.c.l.b16 %v4337
    %v4350 = vunpack.c.l.b16 %v4338
    %v4351 = vunpack.c.l.b16 %v4339
    %v4352 = vpack.c.b16 %v4349, %v4348
    %v4353 = vpack.c.b16 %v4351, %v4350
    %v4357 = vsel %vm328, %v4335, 0
    %4359 = vmatpush.bf16.msra.mxu0 0
    %4360 = vmatpush.bf16.msra.mxu0 0
    %4361 = vmatpush.bf16.msra.mxu0 0
    %4362 = vmatpush.bf16.msra.mxu0 0
    %4363 = vmatpush.bf16.msra.mxu0 0
    %4364 = vmatpush.bf16.msra.mxu0 0
    %4365 = vmatpush.bf16.msra.mxu0 %v4353
    %4366 = vmatpush.bf16.msra.mxu0 %v4352
    %4367 = vmatmul.bf16.gmra.mxu0 %v4357
    %v4368 = vpop.f32.mrf.mxu0
    %v4369 = vadd.f32 %v4342, %v4368
    %v4370 = vpop.f32.mrf.mxu0
    %v4371 = vadd.f32 %v4342, %v4370
    %4372 = vdwg.mxu0
    %v4373 = vmax.f32 %v4369, 0.0
    %v4374 = vmax.f32 %v4371, 0.0
    %v4375 = vpack.c.bf16 %v4374, %v4373
    %v4376 = vld [vmem:[%s17] sm:$0xf]
    %v4377 = vld [vmem:[%s17 + $0x4] sm:$0xf]
    %v4378 = vld [vmem:[%s17 + $0x8] sm:$0xf]
    %v4379 = vld [vmem:[%s17 + $0xc] sm:$0xf]
    %v4380 = vld [vmem:[%s17 + $0x10] sm:$0xf]
    %v4381 = vld [vmem:[%s17 + $0x14] sm:$0xf]
    %v4382 = vld [vmem:[%s17 + $0x18] sm:$0xf]
    %v4383 = vld [vmem:[%s17 + $0x1c] sm:$0xf]
    %v4384 = vld [vmem:[%s18] sm:$0x1]
    %v4386 = vperm.slane %v4384, 0
    %v4396 = vunpack.c.l.b16 %v4376
    %v4397 = vunpack.c.l.b16 %v4377
    %v4398 = vunpack.c.l.b16 %v4378
    %v4399 = vunpack.c.l.b16 %v4379
    %v4400 = vunpack.c.l.b16 %v4380
    %v4401 = vunpack.c.l.b16 %v4381
    %v4402 = vunpack.c.l.b16 %v4382
    %v4403 = vunpack.c.l.b16 %v4383
    %v4404 = vpack.c.b16 %v4397, %v4396
    %v4405 = vpack.c.b16 %v4399, %v4398
    %v4406 = vpack.c.b16 %v4401, %v4400
    %v4407 = vpack.c.b16 %v4403, %v4402
    %vm4412 = vcmask 523264
    %v4414 = vsel %vm4412, %v4375, 0
    %4416 = vmatpush.bf16.msra.mxu0 0
    %4417 = vmatpush.bf16.msra.mxu0 0
    %4418 = vmatpush.bf16.msra.mxu0 0
    %4419 = vmatpush.bf16.msra.mxu0 0
    %4420 = vmatpush.bf16.msra.mxu0 %v4407
    %4421 = vmatpush.bf16.msra.mxu0 %v4406
    %4422 = vmatpush.bf16.msra.mxu0 %v4405
    %4423 = vmatpush.bf16.msra.mxu0 %v4404
    %4424 = vmatmul.bf16.gmra.mxu0 %v4414
    %v4425 = vpop.f32.mrf.mxu0
    %v4426 = vadd.f32 %v4386, %v4425
    %v4427 = vpop.f32.mrf.mxu0
    %v4428 = vadd.f32 %v4386, %v4427
    %4429 = vdwg.mxu0
    %v4430 = vadd.f32 %v4333, %v4426
    %v4431 = vadd.f32 %v4334, %v4428
    %v4432 = vsel %vm328, %v4430, 0.0
    %4433 = vadd.xlane.f32.xlu0 %v4432
    %v4434 = vpop.xlane.xlu0 %4433
    %v4435 = vsel %vm328, %v4431, 0.0
    %4436 = vadd.xlane.f32.xlu0 %v4435
    %v4437 = vpop.xlane.xlu0 %4436
    %v4438 = vmul.f32 %v4434, %v4232
    %v4439 = vmul.f32 %v4437, %v4232
    %v4440 = vsub.f32 %v4430, %v4438
    %v4441 = vsub.f32 %v4431, %v4439
    %v4442 = vmul.f32 %v4440, %v4440
    %v4443 = vmul.f32 %v4441, %v4441
    %v4444 = vsel %vm328, %v4442, 0.0
    %4445 = vadd.xlane.f32.xlu0 %v4444
    %v4446 = vpop.xlane.xlu0 %4445
    %v4447 = vsel %vm328, %v4443, 0.0
    %4448 = vadd.xlane.f32.xlu0 %v4447
    %v4449 = vpop.xlane.xlu0 %4448
    %v4450 = vmul.f32 %v4446, %v4232
    %v4451 = vmul.f32 %v4449, %v4232
    %v4452 = vadd.f32 %v4450, 1e-05
    %v4453 = vadd.f32 %v4451, 1e-05
    %v4454 = vrsqrt.pop %v4452
    %v4455 = vmul.f32 %v4454, %v4452
    %v4456 = vmul.f32 %v4455, %v4454
    %v4457 = vmul.f32 0.5, %v4456
    %v4458 = vsub.f32 1.5, %v4457
    %v4459 = vmul.f32 %v4454, %v4458
    %vm4460 = vweird.f32 %v4452
    %vm4461 = vweird.f32 %v4454
    %vm4462 = vmor %vm4460, %vm4461
    %v4463 = vsel %vm4462, %v4454, %v4459
    %v4464 = vrsqrt.pop %v4453
    %v4465 = vmul.f32 %v4464, %v4453
    %v4466 = vmul.f32 %v4465, %v4464
    %v4467 = vmul.f32 0.5, %v4466
    %v4468 = vsub.f32 1.5, %v4467
    %v4469 = vmul.f32 %v4464, %v4468
    %vm4470 = vweird.f32 %v4453
    %vm4471 = vweird.f32 %v4464
    %vm4472 = vmor %vm4470, %vm4471
    %v4473 = vsel %vm4472, %v4464, %v4469
    %v4474 = vmul.f32 %v4440, %v4463
    %v4475 = vmul.f32 %v4441, %v4473
    %v4476 = vld [vmem:[%s19] sm:$0x1]
    %v4478 = vperm.slane %v4476, 0
    %v4480 = vmul.f32 %v4474, %v4478
    %v4481 = vmul.f32 %v4475, %v4478
    %v4482 = vld [vmem:[%s20] sm:$0x1]
    %v4484 = vperm.slane %v4482, 0
    %v4486 = vadd.f32 %v4480, %v4484
    %v4487 = vadd.f32 %v4481, %v4484
    %4488 = vst.msk [vmem:[#allocation26] sm:$0xff] %vm328, %v4486
    %4489 = vst.msk [vmem:[#allocation26 + $0x8] sm:$0xff] %vm328, %v4487
    // Predicated region
    $region146: #{tpu_custom_call.1} parent=1 // pred_check
      _
    $region147: #{tpu_custom_call.1} parent=1 // pred_check_branch
      %4491 = sbr.rel (0) target = $region149
    $region148: #{tpu_custom_call.1} parent=1 // pred_region
      %4493 = vsyncadd [#allocation4], 0
      %s4494 = sshll.u32 [#allocation26], 4
      %s4495 = int_to_ptr.vmem [resolvable:$true] %s4494
      %s4496 = sshll.u32 %s21, 4
      %s4497 = int_to_ptr.hbm [resolvable:$true] %s4496
      %4502 = dma.vmem_to_hbm [thread:$0]  %s4495, 256, %s4497, [#allocation4], 128, 128, 8
    $region149: #{tpu_custom_call.1} parent=1 // pred_fallthru
      _
    // Predicated region
    $region150: #{tpu_custom_call.1} parent=1 // pred_check
      _
    $region151: #{tpu_custom_call.1} parent=1 // pred_check_branch
      %4504 = sbr.rel (0) target = $region153
    $region152: #{tpu_custom_call.1} parent=1 // pred_region
      %4506 = dma.done [#allocation4], 256
    $region153: #{tpu_custom_call.1} parent=1 // pred_fallthru
      _
    %4507 = vsyncpa [#allocation3], 1
    %4508 = vsyncpa [#allocation6], 1
    %4509 = vsyncpa [#allocation9], 1
    %4510 = vsyncpa [#allocation12], 1
    %4511 = vsyncpa [#allocation15], 1
    %4512 = vsyncpa [#allocation18], 1
    %4513 = vsyncpa [#allocation21], 1
    %4514 = vsyncpa [#allocation24], 1
    %4515 = vsyncpa [#allocation4], 1

</llo_original>
